<compile_context>
chip_gen: v7x
topology: tpu7x:2x2x1
jax: 0.10.0
libtpu: 0.0.40
codegen_flags: <defaults>
</compile_context>

<pallas_src>
import functools
import math

import jax
import jax.numpy as jnp
from jax.experimental import pallas as pl
from jax.experimental.pallas import tpu as pltpu


# ---------------------------------------------------------------------------
# In-kernel helpers
# ---------------------------------------------------------------------------
def _layer_norm(x, g, b, eps=1e-5):
    mu = jnp.mean(x, axis=-1, keepdims=True)
    var = jnp.mean((x - mu) ** 2, axis=-1, keepdims=True)
    return (x - mu) * jax.lax.rsqrt(var + eps) * g + b


# ---------------------------------------------------------------------------
# Fused decoder-stack kernel: grid = (batch_blocks, num_layers)
# ---------------------------------------------------------------------------
def _decoder_stack_kernel(
    x_ref, enc_ref, tpad_ref, spad_ref,
    wqkv_ref, bqkv_ref, wo1_ref, wq2_ref, wkv2_ref, bkv2_ref, wo2_ref,
    wf1_ref, bf1_ref, wf2_ref, vec_ref,
    out_ref, *, heads, block_b, seq_t, seq_s, ff_chunk,
):
    l = pl.program_id(1)

    # Layer 0 of each batch block: load the embedded input into the VMEM-resident output tile,
    # which doubles as the running activation across the layer axis (block index constant in l).
    @pl.when(l == 0)
    def _():
        out_ref[...] = x_ref[...]

    x = out_ref[...]                      # (Bt*T, D) fp32, carried across the layer axis
    d_model = x.shape[-1]
    dh = d_model // heads

    # Packed (1, D) per-layer vectors: 0 bo1 1 g1 2 be1 3 bq2 4 bo2 5 g2 6 be2 7 bf2 8 g3 9 be3
    vec = vec_ref[...]                    # (10, D) fp32
    bo1, g1, be1 = vec[0:1], vec[1:2], vec[2:3]
    bq2, bo2, g2, be2 = vec[3:4], vec[4:5], vec[5:6], vec[6:7]
    bf2, g3, be3 = vec[7:8], vec[8:9], vec[9:10]

    enc = enc_ref[...]                    # (Bt*S, D) bf16

    # Masks: causal part generated in-kernel (no (B,T,T) DMA); only key-padding masks are shipped.
    row = jax.lax.broadcasted_iota(jnp.int32, (seq_t, seq_t), 0)
    col = jax.lax.broadcasted_iota(jnp.int32, (seq_t, seq_t), 1)
    causal = col <= row                                   # (T, T) bool
    tpad = tpad_ref[...] > 0                              # (Bt, 1, T) bool (key padding)
    self_mask = causal[None, :, :] & tpad                 # (Bt, T, T)  bool
    cross_mask = spad_ref[...] > 0                        # (Bt, 1, S)  bool (broadcast over queries)

    def attend(q2d, k2d, v2d, mask, kv_len, wo_ref):
        """Multi-head attention.  Per-head S / PV matmuls, then ONE full-D output projection.

        q2d: (Bt*T, D) fp32 (scale pre-folded into weights); k2d/v2d: (Bt*kv, D) fp32;
        mask broadcastable to (Bt, T, kv) bool; wo_ref: (D, D) bf16.
        """
        outs = []
        for h in range(heads):
            sl = slice(h * dh, (h + 1) * dh)
            qh = q2d[:, sl].astype(jnp.bfloat16).reshape(block_b, seq_t, dh)
            kh = k2d[:, sl].astype(jnp.bfloat16).reshape(block_b, kv_len, dh)
            vh = v2d[:, sl].astype(jnp.bfloat16).reshape(block_b, kv_len, dh)
            s = jnp.einsum("bqd,bkd->bqk", qh, kh,
                           preferred_element_type=jnp.float32)       # (Bt, T, kv) fp32
            s = jnp.where(mask, s, jnp.float32(-1e9))
            s = s - jnp.max(s, axis=-1, keepdims=True)
            p = jnp.exp(s)
            p = p * pl.reciprocal(jnp.sum(p, axis=-1, keepdims=True), approx=True)
            oh = jnp.einsum("bqk,bkd->bqd", p.astype(jnp.bfloat16), vh,
                            preferred_element_type=jnp.float32)      # (Bt, T, dh)
            outs.append(oh.astype(jnp.bfloat16))
        # concat(heads) once, then a single MXU-saturating (Bt*T, D) @ (D, D) projection.
        o2d = jnp.concatenate(outs, axis=-1).reshape(block_b * seq_t, d_model)
        return jnp.dot(o2d, wo_ref[...], preferred_element_type=jnp.float32)

    # --- masked self-attention + residual + LayerNorm -----------------------
    x_bf = x.astype(jnp.bfloat16)
    qkv = jnp.dot(x_bf, wqkv_ref[...], preferred_element_type=jnp.float32) + bqkv_ref[...]
    q = qkv[:, :d_model]                  # 1/sqrt(dh) already folded into Wq / bq
    k = qkv[:, d_model:2 * d_model]
    v = qkv[:, 2 * d_model:]
    a1 = attend(q, k, v, self_mask, seq_t, wo1_ref)
    x1 = _layer_norm(x + a1 + bo1, g1, be1)

    # --- encoder-decoder cross-attention + residual + LayerNorm -------------
    x1_bf = x1.astype(jnp.bfloat16)
    q2 = jnp.dot(x1_bf, wq2_ref[...], preferred_element_type=jnp.float32) + bq2
    kv2 = jnp.dot(enc, wkv2_ref[...], preferred_element_type=jnp.float32) + bkv2_ref[...]
    k2 = kv2[:, :d_model]
    v2 = kv2[:, d_model:]
    a2 = attend(q2, k2, v2, cross_mask, seq_s, wo2_ref)
    x2 = _layer_norm(x1 + a2 + bo2, g2, be2)

    # --- position-wise FFN (ff-chunked hidden) + residual + LayerNorm --------
    x2_bf = x2.astype(jnp.bfloat16)
    nff = wf1_ref.shape[-1]
    f = jnp.zeros_like(x2)
    for c in range(0, nff, ff_chunk):
        ce = min(c + ff_chunk, nff)
        hmid = jnp.dot(x2_bf, wf1_ref[:, c:ce],
                       preferred_element_type=jnp.float32) + bf1_ref[:, c:ce]
        hmid = jnp.maximum(hmid, 0.0).astype(jnp.bfloat16)
        f = f + jnp.dot(hmid, wf2_ref[c:ce, :], preferred_element_type=jnp.float32)
    x3 = _layer_norm(x2 + f + bf2, g3, be3)

    # Carry to next layer; HBM writeback happens automatically when the batch block changes.
    out_ref[...] = x3


# ---------------------------------------------------------------------------
# pallas_call wrapper
# ---------------------------------------------------------------------------
def decoder_stack_pallas(x2d, enc2d, tpad, spad, p, heads, B, T, S, D, block_b=None):
    L = p["wqkv"].shape[0]
    ff = p["wf1"].shape[-1]

    if block_b is None:
        # Prefer >= 2 batch blocks (v7x dual-TC) when sublane alignment allows; else one block.
        half = B // 2
        if B % 2 == 0 and half > 0 and (half * T) % 8 == 0 and (half * S) % 8 == 0:
            block_b = half
        else:
            block_b = B
    Bt = block_b
    assert B % Bt == 0
    nb = B // Bt
    # When the batch is split into several blocks, row blocks must stay sublane-aligned.
    assert nb == 1 or ((Bt * T) % 8 == 0 and (Bt * S) % 8 == 0)

    # Bounded fp32 FFN hidden temp; (weight streaming over ff would need an extra grid axis).
    ff_chunk = ff if (ff <= 2048 or ff % 2048 != 0) else 2048

    # Explicit scoped-VMEM budget: 2x (double-buffered) per-layer weight slice + activations + temps.
    wbytes = (D * 3 * D + 3 * D * D + D * 2 * D + 2 * D * ff) * 2 \
        + (3 * D + 2 * D + ff + 10 * D) * 4
    act_bytes = 2 * Bt * T * D * 4 + 2 * Bt * S * D * 2 + 2 * Bt * (T + S) * 2 + Bt * T * D * 4
    tmp_bytes = Bt * T * max(T, S) * 4 * 3 + Bt * T * (3 * D + 2 * D + ff_chunk) * 4
    vmem_limit = int(min(64 << 20, max(32 << 20, 2 * wbytes + act_bytes + tmp_bytes + (4 << 20))))

    def wspec(*tail):
        nd = len(tail)
        # One layer's slice of a stacked parameter; the layer dim is squeezed out.
        return pl.BlockSpec((None,) + tuple(tail), lambda b, l: (l,) + (0,) * nd)

    in_specs = [
        pl.BlockSpec((Bt * T, D), lambda b, l: (b, 0)),      # x (fp32, flattened (B*T, D))
        pl.BlockSpec((Bt * S, D), lambda b, l: (b, 0)),      # enc_out (bf16, flattened (B*S, D))
        pl.BlockSpec((Bt, 1, T), lambda b, l: (b, 0, 0)),    # self-attn key-padding mask (bf16)
        pl.BlockSpec((Bt, 1, S), lambda b, l: (b, 0, 0)),    # cross-attn key-padding mask (bf16)
        wspec(D, 3 * D),   # wqkv (Q columns pre-scaled by 1/sqrt(dh))
        wspec(1, 3 * D),   # bqkv
        wspec(D, D),       # wo1
        wspec(D, D),       # wq2 (pre-scaled)
        wspec(D, 2 * D),   # wkv2
        wspec(1, 2 * D),   # bkv2
        wspec(D, D),       # wo2
        wspec(D, ff),      # wf1
        wspec(1, ff),      # bf1
        wspec(ff, D),      # wf2
        wspec(10, D),      # packed LN/bias vectors
    ]

    kernel = functools.partial(_decoder_stack_kernel, heads=heads,
                               block_b=Bt, seq_t=T, seq_s=S, ff_chunk=ff_chunk)
    return pl.pallas_call(
        kernel,
        out_shape=jax.ShapeDtypeStruct((B * T, D), jnp.float32),
        grid=(nb, L),                                  # batch blocks outer, layers inner
        in_specs=in_specs,
        out_specs=pl.BlockSpec((Bt * T, D), lambda b, l: (b, 0)),   # VMEM-resident across l
        compiler_params=pltpu.CompilerParams(
            dimension_semantics=("parallel", "arbitrary"),
            vmem_limit_bytes=vmem_limit),
    )(x2d, enc2d, tpad, spad,
      p["wqkv"], p["bqkv"], p["wo1"], p["wq2"], p["wkv2"], p["bkv2"],
      p["wo2"], p["wf1"], p["bf1"], p["wf2"], p["vecs"])


# ---------------------------------------------------------------------------
# Plain-JAX glue: embedding lookup, sinusoidal PE, mask squeeze, param init
# ---------------------------------------------------------------------------
def sinusoidal_pe(max_len, d_model):
    pos = jnp.arange(max_len, dtype=jnp.float32)[:, None]
    i = jnp.arange(0, d_model, 2, dtype=jnp.float32)
    div = jnp.exp(-jnp.log(10000.0) * i / d_model)
    pe = jnp.zeros((max_len, d_model), jnp.float32)
    pe = pe.at[:, 0::2].set(jnp.sin(pos * div))
    pe = pe.at[:, 1::2].set(jnp.cos(pos * div))
    return pe


def init_params(key, vocab_size, d_model, num_layers, heads, forward_expansion, max_len):
    D, L = d_model, num_layers
    ff = forward_expansion * D
    dh = D // heads
    scale = 1.0 / math.sqrt(dh)
    keys = jax.random.split(key, 8)
    std = 0.02

    def w(k, shape):
        return std * jax.random.normal(k, (L,) + shape, jnp.float32)

    # Fold 1/sqrt(dh) into the Q projections (and their biases, here zero) at init time.
    wqkv = w(keys[1], (D, 3 * D))
    wqkv = wqkv.at[:, :, :D].multiply(scale)
    wq2 = w(keys[3], (D, D)) * scale

    zeros = jnp.zeros((L, 1, D), jnp.float32)
    ones = jnp.ones((L, 1, D), jnp.float32)
    # Packed (1, D) per-layer vectors: bo1, g1, be1, bq2 (pre-scaled if nonzero), bo2, g2, be2, bf2, g3, be3
    vecs = jnp.concatenate(
        [zeros, ones, zeros, zeros, zeros, ones, zeros, zeros, ones, zeros], axis=1)

    return {
        "embedding": std * jax.random.normal(keys[0], (vocab_size, D), jnp.float32),
        "pe": sinusoidal_pe(max_len, D),
        "wqkv": wqkv.astype(jnp.bfloat16),
        "bqkv": jnp.zeros((L, 1, 3 * D), jnp.float32),   # Q-part must be pre-scaled if nonzero
        "wo1": w(keys[2], (D, D)).astype(jnp.bfloat16),
        "wq2": wq2.astype(jnp.bfloat16),
        "wkv2": w(keys[4], (D, 2 * D)).astype(jnp.bfloat16),
        "bkv2": jnp.zeros((L, 1, 2 * D), jnp.float32),
        "wo2": w(keys[5], (D, D)).astype(jnp.bfloat16),
        "wf1": w(keys[6], (D, ff)).astype(jnp.bfloat16),
        "bf1": jnp.zeros((L, 1, ff), jnp.float32),
        "wf2": w(keys[7], (ff, D)).astype(jnp.bfloat16),
        "vecs": vecs,
    }


def decoder_forward(trg, enc_out, src_mask, trg_mask, params, heads):
    """trg: (B,T) int32; enc_out: (B,S,D); src_mask ~ (B,1,1,S); trg_mask ~ (B,1,T,T)."""
    B, T = trg.shape
    S = enc_out.shape[1]
    D = params["embedding"].shape[1]

    # Embedding gather + positional encoding (plain-JAX glue); dropout is identity in eval mode.
    x = params["embedding"][trg] + params["pe"][:T][None, :, :]

    x2d = x.reshape(B * T, D).astype(jnp.float32)
    enc2d = enc_out.reshape(B * S, D).astype(jnp.bfloat16)

    # Causal structure is regenerated in-kernel; only key-padding components are shipped.
    # (The last query row of a causal(+padding) mask equals the key-padding mask.)
    # TODO(synk): per-query mask structure beyond causal x key-padding is not representable here.
    tm = jnp.broadcast_to(trg_mask, (B, 1, T, T))
    tpad = tm[:, :, T - 1, :].astype(jnp.bfloat16)           # (B, 1, T)
    sm = jnp.broadcast_to(src_mask, (B, 1, 1, S))
    spad = sm[:, :, 0, :].astype(jnp.bfloat16)               # (B, 1, S)

    y2d = decoder_stack_pallas(x2d, enc2d, tpad, spad, params, heads, B, T, S, D)
    return y2d.reshape(B, T, D)


if __name__ == "__main__":
    B, T, S = 2, 8, 8
    vocab_size, d_model, num_layers, heads = 50, 32, 2, 4
    forward_expansion, max_len = 4, 16

    key = jax.random.PRNGKey(0)
    k_trg, k_enc, k_params = jax.random.split(key, 3)

    trg = jax.random.randint(k_trg, (B, T), 0, vocab_size, dtype=jnp.int32)
    enc_out = jax.random.normal(k_enc, (B, S, d_model), jnp.float32)
    src_mask = jnp.ones((B, 1, 1, S), jnp.float32)
    trg_mask = jnp.broadcast_to(
        jnp.tril(jnp.ones((T, T), jnp.float32))[None, None], (B, 1, T, T))

    params = init_params(k_params, vocab_size, d_model, num_layers, heads,
                         forward_expansion, max_len)

    out = decoder_forward(trg, enc_out, src_mask, trg_mask, params, heads)
    out = jax.block_until_ready(out)
    assert out.shape == (B, T, d_model), out.shape
    assert bool(jnp.all(jnp.isfinite(out)))
    print("KERNEL_OK")
</pallas_src>

<mosaic_0001>
module attributes {stable_mosaic.version = 11 : i64} {
  func.func @_decoder_stack_kernel(%arg0: i32, %arg1: i32, %arg2: memref<8x32xf32, #tpu.memory_space<vmem>>, %arg3: memref<8x32xbf16, #tpu.memory_space<vmem>>, %arg4: memref<1x1x8xbf16, #tpu.memory_space<vmem>>, %arg5: memref<1x1x8xbf16, #tpu.memory_space<vmem>>, %arg6: memref<1x32x96xbf16, #tpu.memory_space<vmem>>, %arg7: memref<1x1x96xf32, #tpu.memory_space<vmem>>, %arg8: memref<1x32x32xbf16, #tpu.memory_space<vmem>>, %arg9: memref<1x32x32xbf16, #tpu.memory_space<vmem>>, %arg10: memref<1x32x64xbf16, #tpu.memory_space<vmem>>, %arg11: memref<1x1x64xf32, #tpu.memory_space<vmem>>, %arg12: memref<1x32x32xbf16, #tpu.memory_space<vmem>>, %arg13: memref<1x32x128xbf16, #tpu.memory_space<vmem>>, %arg14: memref<1x1x128xf32, #tpu.memory_space<vmem>>, %arg15: memref<1x128x32xbf16, #tpu.memory_space<vmem>>, %arg16: memref<1x10x32xf32, #tpu.memory_space<vmem>>, %arg17: memref<8x32xf32, #tpu.memory_space<vmem>>) attributes {dimension_semantics = [#tpu.dimension_semantics<parallel>, #tpu.dimension_semantics<arbitrary>], iteration_bounds = array<i64: 2, 2>, scalar_prefetch = 0 : i64, scratch_operands = 0 : i64, tpu.core_type = #tpu.core_type<tc>, window_params = [{transform_indices = @transform_0, window_bounds = array<i64: 8, 32>}, {transform_indices = @transform_1, window_bounds = array<i64: 8, 32>}, {transform_indices = @transform_2, window_bounds = array<i64: 1, 1, 8>}, {transform_indices = @transform_3, window_bounds = array<i64: 1, 1, 8>}, {transform_indices = @transform_4, window_bounds = array<i64: 1, 32, 96>}, {transform_indices = @transform_5, window_bounds = array<i64: 1, 1, 96>}, {transform_indices = @transform_6, window_bounds = array<i64: 1, 32, 32>}, {transform_indices = @transform_7, window_bounds = array<i64: 1, 32, 32>}, {transform_indices = @transform_8, window_bounds = array<i64: 1, 32, 64>}, {transform_indices = @transform_9, window_bounds = array<i64: 1, 1, 64>}, {transform_indices = @transform_10, window_bounds = array<i64: 1, 32, 32>}, {transform_indices = @transform_11, window_bounds = array<i64: 1, 32, 128>}, {transform_indices = @transform_12, window_bounds = array<i64: 1, 1, 128>}, {transform_indices = @transform_13, window_bounds = array<i64: 1, 128, 32>}, {transform_indices = @transform_14, window_bounds = array<i64: 1, 10, 32>}, {transform_indices = @transform_15, window_bounds = array<i64: 8, 32>}]} {
    %c0_i32 = arith.constant 0 : i32
    %0 = arith.cmpi eq, %arg1, %c0_i32 : i32
    %1 = arith.extui %0 : i1 to i32
    %c0_i32_0 = arith.constant 0 : i32
    %2 = arith.cmpi ne, %1, %c0_i32_0 : i32
    scf.if %2 {
      %c0_110 = arith.constant 0 : index
      %c0_111 = arith.constant 0 : index
      %365 = vector.load %arg2[%c0_110, %c0_111] : memref<8x32xf32, #tpu.memory_space<vmem>>, vector<8x32xf32>
      %c0_112 = arith.constant 0 : index
      %c0_113 = arith.constant 0 : index
      %366 = vector.load %arg17[%c0_112, %c0_113] : memref<8x32xf32, #tpu.memory_space<vmem>>, vector<8x32xf32>
      tpu.vector_store %arg17[%c0_112, %c0_113], %365 {strides = array<i32>} : memref<8x32xf32, #tpu.memory_space<vmem>>, vector<8x32xf32>,
    } else {
    }
    %c0 = arith.constant 0 : index
    %c0_1 = arith.constant 0 : index
    %3 = vector.load %arg17[%c0, %c0_1] : memref<8x32xf32, #tpu.memory_space<vmem>>, vector<8x32xf32>
    %c0_2 = arith.constant 0 : index
    %c0_3 = arith.constant 0 : index
    %c0_4 = arith.constant 0 : index
    %4 = vector.load %arg16[%c0_2, %c0_3, %c0_4] : memref<1x10x32xf32, #tpu.memory_space<vmem>>, vector<1x10x32xf32>
    %5 = vector.shape_cast %4 : vector<1x10x32xf32> to vector<10x32xf32>
    %6 = vector.extract_strided_slice %5 {offsets = [0, 0], sizes = [1, 32], strides = [1, 1]} : vector<10x32xf32> to vector<1x32xf32>
    %7 = vector.extract_strided_slice %5 {offsets = [1, 0], sizes = [1, 32], strides = [1, 1]} : vector<10x32xf32> to vector<1x32xf32>
    %8 = vector.extract_strided_slice %5 {offsets = [2, 0], sizes = [1, 32], strides = [1, 1]} : vector<10x32xf32> to vector<1x32xf32>
    %9 = vector.extract_strided_slice %5 {offsets = [3, 0], sizes = [1, 32], strides = [1, 1]} : vector<10x32xf32> to vector<1x32xf32>
    %10 = vector.extract_strided_slice %5 {offsets = [4, 0], sizes = [1, 32], strides = [1, 1]} : vector<10x32xf32> to vector<1x32xf32>
    %11 = vector.extract_strided_slice %5 {offsets = [5, 0], sizes = [1, 32], strides = [1, 1]} : vector<10x32xf32> to vector<1x32xf32>
    %12 = vector.extract_strided_slice %5 {offsets = [6, 0], sizes = [1, 32], strides = [1, 1]} : vector<10x32xf32> to vector<1x32xf32>
    %13 = vector.extract_strided_slice %5 {offsets = [7, 0], sizes = [1, 32], strides = [1, 1]} : vector<10x32xf32> to vector<1x32xf32>
    %14 = vector.extract_strided_slice %5 {offsets = [8, 0], sizes = [1, 32], strides = [1, 1]} : vector<10x32xf32> to vector<1x32xf32>
    %15 = vector.extract_strided_slice %5 {offsets = [9, 0], sizes = [1, 32], strides = [1, 1]} : vector<10x32xf32> to vector<1x32xf32>
    %c0_5 = arith.constant 0 : index
    %c0_6 = arith.constant 0 : index
    %16 = vector.load %arg3[%c0_5, %c0_6] : memref<8x32xbf16, #tpu.memory_space<vmem>>, vector<8x32xbf16>
    %17 = tpu.iota {dimensions = array<i32: 0>} : vector<8x8xi32>
    %18 = tpu.iota {dimensions = array<i32: 1>} : vector<8x8xi32>
    %19 = arith.cmpi sle, %18, %17 : vector<8x8xi32>
    %c0_7 = arith.constant 0 : index
    %c0_8 = arith.constant 0 : index
    %c0_9 = arith.constant 0 : index
    %20 = vector.load %arg4[%c0_7, %c0_8, %c0_9] : memref<1x1x8xbf16, #tpu.memory_space<vmem>>, vector<1x1x8xbf16>
    %cst = arith.constant 0.000000e+00 : bf16
    %21 = vector.broadcast %cst : bf16 to vector<1x1x8xbf16>
    %22 = arith.cmpf ogt, %20, %21 : vector<1x1x8xbf16>
    %23 = vector.shape_cast %19 : vector<8x8xi1> to vector<1x8x8xi1>
    %24 = vector.broadcast %22 : vector<1x1x8xi1> to vector<1x8x8xi1>
    %25 = arith.andi %23, %24 : vector<1x8x8xi1>
    %c0_10 = arith.constant 0 : index
    %c0_11 = arith.constant 0 : index
    %c0_12 = arith.constant 0 : index
    %26 = vector.load %arg5[%c0_10, %c0_11, %c0_12] : memref<1x1x8xbf16, #tpu.memory_space<vmem>>, vector<1x1x8xbf16>
    %cst_13 = arith.constant 0.000000e+00 : bf16
    %27 = vector.broadcast %cst_13 : bf16 to vector<1x1x8xbf16>
    %28 = arith.cmpf ogt, %26, %27 : vector<1x1x8xbf16>
    %29 = arith.truncf %3 : vector<8x32xf32> to vector<8x32xbf16>
    %c0_14 = arith.constant 0 : index
    %c0_15 = arith.constant 0 : index
    %c0_16 = arith.constant 0 : index
    %30 = vector.load %arg6[%c0_14, %c0_15, %c0_16] : memref<1x32x96xbf16, #tpu.memory_space<vmem>>, vector<1x32x96xbf16>
    %31 = vector.shape_cast %30 : vector<1x32x96xbf16> to vector<32x96xbf16>
    %cst_17 = arith.constant dense<0.000000e+00> : vector<8x96xf32>
    %32 = tpu.matmul %29, %31, %cst_17 {dimension_numbers = #tpu.dot_dimension_numbers<[1], [0], [0], [1], [0, 0, 1, 1], [], []>} : vector<8x32xbf16>, vector<32x96xbf16>, vector<8x96xf32> -> vector<8x96xf32>
    %c0_18 = arith.constant 0 : index
    %c0_19 = arith.constant 0 : index
    %c0_20 = arith.constant 0 : index
    %33 = vector.load %arg7[%c0_18, %c0_19, %c0_20] : memref<1x1x96xf32, #tpu.memory_space<vmem>>, vector<1x1x96xf32>
    %34 = vector.shape_cast %33 : vector<1x1x96xf32> to vector<1x96xf32>
    %35 = vector.broadcast %34 : vector<1x96xf32> to vector<8x96xf32>
    %36 = arith.addf %32, %35 : vector<8x96xf32>
    %37 = vector.extract_strided_slice %36 {offsets = [0, 0], sizes = [8, 32], strides = [1, 1]} : vector<8x96xf32> to vector<8x32xf32>
    %38 = vector.extract_strided_slice %36 {offsets = [0, 32], sizes = [8, 32], strides = [1, 1]} : vector<8x96xf32> to vector<8x32xf32>
    %39 = vector.extract_strided_slice %36 {offsets = [0, 64], sizes = [8, 32], strides = [1, 1]} : vector<8x96xf32> to vector<8x32xf32>
    %40 = vector.extract_strided_slice %37 {offsets = [0, 0], sizes = [8, 8], strides = [1, 1]} : vector<8x32xf32> to vector<8x8xf32>
    %41 = arith.truncf %40 : vector<8x8xf32> to vector<8x8xbf16>
    %42 = vector.shape_cast %41 : vector<8x8xbf16> to vector<1x8x8xbf16>
    %43 = vector.extract_strided_slice %38 {offsets = [0, 0], sizes = [8, 8], strides = [1, 1]} : vector<8x32xf32> to vector<8x8xf32>
    %44 = arith.truncf %43 : vector<8x8xf32> to vector<8x8xbf16>
    %45 = vector.shape_cast %44 : vector<8x8xbf16> to vector<1x8x8xbf16>
    %46 = vector.extract_strided_slice %39 {offsets = [0, 0], sizes = [8, 8], strides = [1, 1]} : vector<8x32xf32> to vector<8x8xf32>
    %47 = arith.truncf %46 : vector<8x8xf32> to vector<8x8xbf16>
    %48 = vector.shape_cast %47 : vector<8x8xbf16> to vector<1x8x8xbf16>
    "tpu.trace_start"() <{level = 10 : i32, message = "bqd,bkd->bqk"}> : () -> ()
    %cst_21 = arith.constant dense<0.000000e+00> : vector<1x8x8xf32>
    %49 = tpu.matmul %42, %45, %cst_21 {dimension_numbers = #tpu.dot_dimension_numbers<[2], [2], [1], [1], [0, 0, 0, 1, 1, 1], [0], [0]>} : vector<1x8x8xbf16>, vector<1x8x8xbf16>, vector<1x8x8xf32> -> vector<1x8x8xf32>
    %cst_22 = arith.constant -1.000000e+09 : f32
    "tpu.trace_stop"() : () -> ()
    %50 = vector.broadcast %cst_22 : f32 to vector<1x8x8xf32>
    %51 = arith.select %25, %49, %50 : vector<1x8x8xi1>, vector<1x8x8xf32>
    %cst_23 = arith.constant dense<0xFF800000> : vector<1x8xf32>
    %52 = vector.multi_reduction <maximumf>, %51, %cst_23 [2] : vector<1x8x8xf32> to vector<1x8xf32>
    %53 = vector.shape_cast %52 : vector<1x8xf32> to vector<1x8x1xf32>
    %54 = vector.broadcast %53 : vector<1x8x1xf32> to vector<1x8x8xf32>
    %55 = arith.subf %51, %54 : vector<1x8x8xf32>
    %56 = math.exp %55 : vector<1x8x8xf32>
    %cst_24 = arith.constant dense<0.000000e+00> : vector<1x8xf32>
    %57 = vector.multi_reduction <add>, %56, %cst_24 [2] : vector<1x8x8xf32> to vector<1x8xf32>
    %58 = vector.shape_cast %57 : vector<1x8xf32> to vector<1x8x1xf32>
    %59 = tpu.reciprocal %58 {approx = true} : vector<1x8x1xf32> -> vector<1x8x1xf32>
    %60 = vector.broadcast %59 : vector<1x8x1xf32> to vector<1x8x8xf32>
    %61 = arith.mulf %56, %60 : vector<1x8x8xf32>
    %62 = arith.truncf %61 : vector<1x8x8xf32> to vector<1x8x8xbf16>
    "tpu.trace_start"() <{level = 10 : i32, message = "bqk,bkd->bqd"}> : () -> ()
    %cst_25 = arith.constant dense<0.000000e+00> : vector<1x8x8xf32>
    %63 = tpu.matmul %62, %48, %cst_25 {dimension_numbers = #tpu.dot_dimension_numbers<[2], [1], [1], [2], [0, 0, 0, 1, 1, 2], [0], [0]>} : vector<1x8x8xbf16>, vector<1x8x8xbf16>, vector<1x8x8xf32> -> vector<1x8x8xf32>
    "tpu.trace_stop"() : () -> ()
    %64 = arith.truncf %63 : vector<1x8x8xf32> to vector<1x8x8xbf16>
    %65 = vector.extract_strided_slice %37 {offsets = [0, 8], sizes = [8, 8], strides = [1, 1]} : vector<8x32xf32> to vector<8x8xf32>
    %66 = arith.truncf %65 : vector<8x8xf32> to vector<8x8xbf16>
    %67 = vector.shape_cast %66 : vector<8x8xbf16> to vector<1x8x8xbf16>
    %68 = vector.extract_strided_slice %38 {offsets = [0, 8], sizes = [8, 8], strides = [1, 1]} : vector<8x32xf32> to vector<8x8xf32>
    %69 = arith.truncf %68 : vector<8x8xf32> to vector<8x8xbf16>
    %70 = vector.shape_cast %69 : vector<8x8xbf16> to vector<1x8x8xbf16>
    %71 = vector.extract_strided_slice %39 {offsets = [0, 8], sizes = [8, 8], strides = [1, 1]} : vector<8x32xf32> to vector<8x8xf32>
    %72 = arith.truncf %71 : vector<8x8xf32> to vector<8x8xbf16>
    %73 = vector.shape_cast %72 : vector<8x8xbf16> to vector<1x8x8xbf16>
    "tpu.trace_start"() <{level = 10 : i32, message = "bqd,bkd->bqk"}> : () -> ()
    %cst_26 = arith.constant dense<0.000000e+00> : vector<1x8x8xf32>
    %74 = tpu.matmul %67, %70, %cst_26 {dimension_numbers = #tpu.dot_dimension_numbers<[2], [2], [1], [1], [0, 0, 0, 1, 1, 1], [0], [0]>} : vector<1x8x8xbf16>, vector<1x8x8xbf16>, vector<1x8x8xf32> -> vector<1x8x8xf32>
    %cst_27 = arith.constant -1.000000e+09 : f32
    "tpu.trace_stop"() : () -> ()
    %75 = vector.broadcast %cst_27 : f32 to vector<1x8x8xf32>
    %76 = arith.select %25, %74, %75 : vector<1x8x8xi1>, vector<1x8x8xf32>
    %cst_28 = arith.constant dense<0xFF800000> : vector<1x8xf32>
    %77 = vector.multi_reduction <maximumf>, %76, %cst_28 [2] : vector<1x8x8xf32> to vector<1x8xf32>
    %78 = vector.shape_cast %77 : vector<1x8xf32> to vector<1x8x1xf32>
    %79 = vector.broadcast %78 : vector<1x8x1xf32> to vector<1x8x8xf32>
    %80 = arith.subf %76, %79 : vector<1x8x8xf32>
    %81 = math.exp %80 : vector<1x8x8xf32>
    %cst_29 = arith.constant dense<0.000000e+00> : vector<1x8xf32>
    %82 = vector.multi_reduction <add>, %81, %cst_29 [2] : vector<1x8x8xf32> to vector<1x8xf32>
    %83 = vector.shape_cast %82 : vector<1x8xf32> to vector<1x8x1xf32>
    %84 = tpu.reciprocal %83 {approx = true} : vector<1x8x1xf32> -> vector<1x8x1xf32>
    %85 = vector.broadcast %84 : vector<1x8x1xf32> to vector<1x8x8xf32>
    %86 = arith.mulf %81, %85 : vector<1x8x8xf32>
    %87 = arith.truncf %86 : vector<1x8x8xf32> to vector<1x8x8xbf16>
    "tpu.trace_start"() <{level = 10 : i32, message = "bqk,bkd->bqd"}> : () -> ()
    %cst_30 = arith.constant dense<0.000000e+00> : vector<1x8x8xf32>
    %88 = tpu.matmul %87, %73, %cst_30 {dimension_numbers = #tpu.dot_dimension_numbers<[2], [1], [1], [2], [0, 0, 0, 1, 1, 2], [0], [0]>} : vector<1x8x8xbf16>, vector<1x8x8xbf16>, vector<1x8x8xf32> -> vector<1x8x8xf32>
    "tpu.trace_stop"() : () -> ()
    %89 = arith.truncf %88 : vector<1x8x8xf32> to vector<1x8x8xbf16>
    %90 = vector.extract_strided_slice %37 {offsets = [0, 16], sizes = [8, 8], strides = [1, 1]} : vector<8x32xf32> to vector<8x8xf32>
    %91 = arith.truncf %90 : vector<8x8xf32> to vector<8x8xbf16>
    %92 = vector.shape_cast %91 : vector<8x8xbf16> to vector<1x8x8xbf16>
    %93 = vector.extract_strided_slice %38 {offsets = [0, 16], sizes = [8, 8], strides = [1, 1]} : vector<8x32xf32> to vector<8x8xf32>
    %94 = arith.truncf %93 : vector<8x8xf32> to vector<8x8xbf16>
    %95 = vector.shape_cast %94 : vector<8x8xbf16> to vector<1x8x8xbf16>
    %96 = vector.extract_strided_slice %39 {offsets = [0, 16], sizes = [8, 8], strides = [1, 1]} : vector<8x32xf32> to vector<8x8xf32>
    %97 = arith.truncf %96 : vector<8x8xf32> to vector<8x8xbf16>
    %98 = vector.shape_cast %97 : vector<8x8xbf16> to vector<1x8x8xbf16>
    "tpu.trace_start"() <{level = 10 : i32, message = "bqd,bkd->bqk"}> : () -> ()
    %cst_31 = arith.constant dense<0.000000e+00> : vector<1x8x8xf32>
    %99 = tpu.matmul %92, %95, %cst_31 {dimension_numbers = #tpu.dot_dimension_numbers<[2], [2], [1], [1], [0, 0, 0, 1, 1, 1], [0], [0]>} : vector<1x8x8xbf16>, vector<1x8x8xbf16>, vector<1x8x8xf32> -> vector<1x8x8xf32>
    %cst_32 = arith.constant -1.000000e+09 : f32
    "tpu.trace_stop"() : () -> ()
    %100 = vector.broadcast %cst_32 : f32 to vector<1x8x8xf32>
    %101 = arith.select %25, %99, %100 : vector<1x8x8xi1>, vector<1x8x8xf32>
    %cst_33 = arith.constant dense<0xFF800000> : vector<1x8xf32>
    %102 = vector.multi_reduction <maximumf>, %101, %cst_33 [2] : vector<1x8x8xf32> to vector<1x8xf32>
    %103 = vector.shape_cast %102 : vector<1x8xf32> to vector<1x8x1xf32>
    %104 = vector.broadcast %103 : vector<1x8x1xf32> to vector<1x8x8xf32>
    %105 = arith.subf %101, %104 : vector<1x8x8xf32>
    %106 = math.exp %105 : vector<1x8x8xf32>
    %cst_34 = arith.constant dense<0.000000e+00> : vector<1x8xf32>
    %107 = vector.multi_reduction <add>, %106, %cst_34 [2] : vector<1x8x8xf32> to vector<1x8xf32>
    %108 = vector.shape_cast %107 : vector<1x8xf32> to vector<1x8x1xf32>
    %109 = tpu.reciprocal %108 {approx = true} : vector<1x8x1xf32> -> vector<1x8x1xf32>
    %110 = vector.broadcast %109 : vector<1x8x1xf32> to vector<1x8x8xf32>
    %111 = arith.mulf %106, %110 : vector<1x8x8xf32>
    %112 = arith.truncf %111 : vector<1x8x8xf32> to vector<1x8x8xbf16>
    "tpu.trace_start"() <{level = 10 : i32, message = "bqk,bkd->bqd"}> : () -> ()
    %cst_35 = arith.constant dense<0.000000e+00> : vector<1x8x8xf32>
    %113 = tpu.matmul %112, %98, %cst_35 {dimension_numbers = #tpu.dot_dimension_numbers<[2], [1], [1], [2], [0, 0, 0, 1, 1, 2], [0], [0]>} : vector<1x8x8xbf16>, vector<1x8x8xbf16>, vector<1x8x8xf32> -> vector<1x8x8xf32>
    "tpu.trace_stop"() : () -> ()
    %114 = arith.truncf %113 : vector<1x8x8xf32> to vector<1x8x8xbf16>
    %115 = vector.extract_strided_slice %37 {offsets = [0, 24], sizes = [8, 8], strides = [1, 1]} : vector<8x32xf32> to vector<8x8xf32>
    %116 = arith.truncf %115 : vector<8x8xf32> to vector<8x8xbf16>
    %117 = vector.shape_cast %116 : vector<8x8xbf16> to vector<1x8x8xbf16>
    %118 = vector.extract_strided_slice %38 {offsets = [0, 24], sizes = [8, 8], strides = [1, 1]} : vector<8x32xf32> to vector<8x8xf32>
    %119 = arith.truncf %118 : vector<8x8xf32> to vector<8x8xbf16>
    %120 = vector.shape_cast %119 : vector<8x8xbf16> to vector<1x8x8xbf16>
    %121 = vector.extract_strided_slice %39 {offsets = [0, 24], sizes = [8, 8], strides = [1, 1]} : vector<8x32xf32> to vector<8x8xf32>
    %122 = arith.truncf %121 : vector<8x8xf32> to vector<8x8xbf16>
    %123 = vector.shape_cast %122 : vector<8x8xbf16> to vector<1x8x8xbf16>
    "tpu.trace_start"() <{level = 10 : i32, message = "bqd,bkd->bqk"}> : () -> ()
    %cst_36 = arith.constant dense<0.000000e+00> : vector<1x8x8xf32>
    %124 = tpu.matmul %117, %120, %cst_36 {dimension_numbers = #tpu.dot_dimension_numbers<[2], [2], [1], [1], [0, 0, 0, 1, 1, 1], [0], [0]>} : vector<1x8x8xbf16>, vector<1x8x8xbf16>, vector<1x8x8xf32> -> vector<1x8x8xf32>
    %cst_37 = arith.constant -1.000000e+09 : f32
    "tpu.trace_stop"() : () -> ()
    %125 = vector.broadcast %cst_37 : f32 to vector<1x8x8xf32>
    %126 = arith.select %25, %124, %125 : vector<1x8x8xi1>, vector<1x8x8xf32>
    %cst_38 = arith.constant dense<0xFF800000> : vector<1x8xf32>
    %127 = vector.multi_reduction <maximumf>, %126, %cst_38 [2] : vector<1x8x8xf32> to vector<1x8xf32>
    %128 = vector.shape_cast %127 : vector<1x8xf32> to vector<1x8x1xf32>
    %129 = vector.broadcast %128 : vector<1x8x1xf32> to vector<1x8x8xf32>
    %130 = arith.subf %126, %129 : vector<1x8x8xf32>
    %131 = math.exp %130 : vector<1x8x8xf32>
    %cst_39 = arith.constant dense<0.000000e+00> : vector<1x8xf32>
    %132 = vector.multi_reduction <add>, %131, %cst_39 [2] : vector<1x8x8xf32> to vector<1x8xf32>
    %133 = vector.shape_cast %132 : vector<1x8xf32> to vector<1x8x1xf32>
    %134 = tpu.reciprocal %133 {approx = true} : vector<1x8x1xf32> -> vector<1x8x1xf32>
    %135 = vector.broadcast %134 : vector<1x8x1xf32> to vector<1x8x8xf32>
    %136 = arith.mulf %131, %135 : vector<1x8x8xf32>
    %137 = arith.truncf %136 : vector<1x8x8xf32> to vector<1x8x8xbf16>
    "tpu.trace_start"() <{level = 10 : i32, message = "bqk,bkd->bqd"}> : () -> ()
    %cst_40 = arith.constant dense<0.000000e+00> : vector<1x8x8xf32>
    %138 = tpu.matmul %137, %123, %cst_40 {dimension_numbers = #tpu.dot_dimension_numbers<[2], [1], [1], [2], [0, 0, 0, 1, 1, 2], [0], [0]>} : vector<1x8x8xbf16>, vector<1x8x8xbf16>, vector<1x8x8xf32> -> vector<1x8x8xf32>
    "tpu.trace_stop"() : () -> ()
    %139 = arith.truncf %138 : vector<1x8x8xf32> to vector<1x8x8xbf16>
    %140 = tpu.concatenate %64, %89, %114, %139 in 2 : vector<1x8x8xbf16>, vector<1x8x8xbf16>, vector<1x8x8xbf16>, vector<1x8x8xbf16> -> vector<1x8x32xbf16>
    %141 = vector.shape_cast %140 : vector<1x8x32xbf16> to vector<8x32xbf16>
    %c0_41 = arith.constant 0 : index
    %c0_42 = arith.constant 0 : index
    %c0_43 = arith.constant 0 : index
    %142 = vector.load %arg8[%c0_41, %c0_42, %c0_43] : memref<1x32x32xbf16, #tpu.memory_space<vmem>>, vector<1x32x32xbf16>
    %143 = vector.shape_cast %142 : vector<1x32x32xbf16> to vector<32x32xbf16>
    %cst_44 = arith.constant dense<0.000000e+00> : vector<8x32xf32>
    %144 = tpu.matmul %141, %143, %cst_44 {dimension_numbers = #tpu.dot_dimension_numbers<[1], [0], [0], [1], [0, 0, 1, 1], [], []>} : vector<8x32xbf16>, vector<32x32xbf16>, vector<8x32xf32> -> vector<8x32xf32>
    %145 = arith.addf %3, %144 : vector<8x32xf32>
    %146 = vector.broadcast %6 : vector<1x32xf32> to vector<8x32xf32>
    %147 = arith.addf %145, %146 : vector<8x32xf32>
    %cst_45 = arith.constant dense<0.000000e+00> : vector<8xf32>
    %148 = vector.multi_reduction <add>, %147, %cst_45 [1] : vector<8x32xf32> to vector<8xf32>
    %149 = vector.shape_cast %148 : vector<8xf32> to vector<8x1xf32>
    %cst_46 = arith.constant 3.200000e+01 : f32
    %150 = vector.broadcast %cst_46 : f32 to vector<8x1xf32>
    %151 = arith.divf %149, %150 : vector<8x1xf32>
    %152 = vector.broadcast %151 : vector<8x1xf32> to vector<8x32xf32>
    %153 = arith.subf %147, %152 : vector<8x32xf32>
    %154 = arith.mulf %153, %153 : vector<8x32xf32>
    %cst_47 = arith.constant dense<0.000000e+00> : vector<8xf32>
    %155 = vector.multi_reduction <add>, %154, %cst_47 [1] : vector<8x32xf32> to vector<8xf32>
    %156 = vector.shape_cast %155 : vector<8xf32> to vector<8x1xf32>
    %cst_48 = arith.constant 3.200000e+01 : f32
    %157 = vector.broadcast %cst_48 : f32 to vector<8x1xf32>
    %158 = arith.divf %156, %157 : vector<8x1xf32>
    %159 = vector.broadcast %151 : vector<8x1xf32> to vector<8x32xf32>
    %160 = arith.subf %147, %159 : vector<8x32xf32>
    %cst_49 = arith.constant 9.99999974E-6 : f32
    %161 = vector.broadcast %cst_49 : f32 to vector<8x1xf32>
    %162 = arith.addf %158, %161 : vector<8x1xf32>
    %163 = math.rsqrt %162 : vector<8x1xf32>
    %164 = vector.broadcast %163 : vector<8x1xf32> to vector<8x32xf32>
    %165 = arith.mulf %160, %164 : vector<8x32xf32>
    %166 = vector.broadcast %7 : vector<1x32xf32> to vector<8x32xf32>
    %167 = arith.mulf %165, %166 : vector<8x32xf32>
    %168 = vector.broadcast %8 : vector<1x32xf32> to vector<8x32xf32>
    %169 = arith.addf %167, %168 : vector<8x32xf32>
    %170 = arith.truncf %169 : vector<8x32xf32> to vector<8x32xbf16>
    %c0_50 = arith.constant 0 : index
    %c0_51 = arith.constant 0 : index
    %c0_52 = arith.constant 0 : index
    %171 = vector.load %arg9[%c0_50, %c0_51, %c0_52] : memref<1x32x32xbf16, #tpu.memory_space<vmem>>, vector<1x32x32xbf16>
    %172 = vector.shape_cast %171 : vector<1x32x32xbf16> to vector<32x32xbf16>
    %cst_53 = arith.constant dense<0.000000e+00> : vector<8x32xf32>
    %173 = tpu.matmul %170, %172, %cst_53 {dimension_numbers = #tpu.dot_dimension_numbers<[1], [0], [0], [1], [0, 0, 1, 1], [], []>} : vector<8x32xbf16>, vector<32x32xbf16>, vector<8x32xf32> -> vector<8x32xf32>
    %174 = vector.broadcast %9 : vector<1x32xf32> to vector<8x32xf32>
    %175 = arith.addf %173, %174 : vector<8x32xf32>
    %c0_54 = arith.constant 0 : index
    %c0_55 = arith.constant 0 : index
    %c0_56 = arith.constant 0 : index
    %176 = vector.load %arg10[%c0_54, %c0_55, %c0_56] : memref<1x32x64xbf16, #tpu.memory_space<vmem>>, vector<1x32x64xbf16>
    %177 = vector.shape_cast %176 : vector<1x32x64xbf16> to vector<32x64xbf16>
    %cst_57 = arith.constant dense<0.000000e+00> : vector<8x64xf32>
    %178 = tpu.matmul %16, %177, %cst_57 {dimension_numbers = #tpu.dot_dimension_numbers<[1], [0], [0], [1], [0, 0, 1, 1], [], []>} : vector<8x32xbf16>, vector<32x64xbf16>, vector<8x64xf32> -> vector<8x64xf32>
    %c0_58 = arith.constant 0 : index
    %c0_59 = arith.constant 0 : index
    %c0_60 = arith.constant 0 : index
    %179 = vector.load %arg11[%c0_58, %c0_59, %c0_60] : memref<1x1x64xf32, #tpu.memory_space<vmem>>, vector<1x1x64xf32>
    %180 = vector.shape_cast %179 : vector<1x1x64xf32> to vector<1x64xf32>
    %181 = vector.broadcast %180 : vector<1x64xf32> to vector<8x64xf32>
    %182 = arith.addf %178, %181 : vector<8x64xf32>
    %183 = vector.extract_strided_slice %182 {offsets = [0, 0], sizes = [8, 32], strides = [1, 1]} : vector<8x64xf32> to vector<8x32xf32>
    %184 = vector.extract_strided_slice %182 {offsets = [0, 32], sizes = [8, 32], strides = [1, 1]} : vector<8x64xf32> to vector<8x32xf32>
    %185 = vector.extract_strided_slice %175 {offsets = [0, 0], sizes = [8, 8], strides = [1, 1]} : vector<8x32xf32> to vector<8x8xf32>
    %186 = arith.truncf %185 : vector<8x8xf32> to vector<8x8xbf16>
    %187 = vector.shape_cast %186 : vector<8x8xbf16> to vector<1x8x8xbf16>
    %188 = vector.extract_strided_slice %183 {offsets = [0, 0], sizes = [8, 8], strides = [1, 1]} : vector<8x32xf32> to vector<8x8xf32>
    %189 = arith.truncf %188 : vector<8x8xf32> to vector<8x8xbf16>
    %190 = vector.shape_cast %189 : vector<8x8xbf16> to vector<1x8x8xbf16>
    %191 = vector.extract_strided_slice %184 {offsets = [0, 0], sizes = [8, 8], strides = [1, 1]} : vector<8x32xf32> to vector<8x8xf32>
    %192 = arith.truncf %191 : vector<8x8xf32> to vector<8x8xbf16>
    %193 = vector.shape_cast %192 : vector<8x8xbf16> to vector<1x8x8xbf16>
    "tpu.trace_start"() <{level = 10 : i32, message = "bqd,bkd->bqk"}> : () -> ()
    %cst_61 = arith.constant dense<0.000000e+00> : vector<1x8x8xf32>
    %194 = tpu.matmul %187, %190, %cst_61 {dimension_numbers = #tpu.dot_dimension_numbers<[2], [2], [1], [1], [0, 0, 0, 1, 1, 1], [0], [0]>} : vector<1x8x8xbf16>, vector<1x8x8xbf16>, vector<1x8x8xf32> -> vector<1x8x8xf32>
    %cst_62 = arith.constant -1.000000e+09 : f32
    "tpu.trace_stop"() : () -> ()
    %195 = vector.shape_cast %28 : vector<1x1x8xi1> to vector<1x1x8xi1>
    %196 = vector.broadcast %195 : vector<1x1x8xi1> to vector<1x8x8xi1>
    %197 = vector.broadcast %cst_62 : f32 to vector<1x8x8xf32>
    %198 = arith.select %196, %194, %197 : vector<1x8x8xi1>, vector<1x8x8xf32>
    %cst_63 = arith.constant dense<0xFF800000> : vector<1x8xf32>
    %199 = vector.multi_reduction <maximumf>, %198, %cst_63 [2] : vector<1x8x8xf32> to vector<1x8xf32>
    %200 = vector.shape_cast %199 : vector<1x8xf32> to vector<1x8x1xf32>
    %201 = vector.broadcast %200 : vector<1x8x1xf32> to vector<1x8x8xf32>
    %202 = arith.subf %198, %201 : vector<1x8x8xf32>
    %203 = math.exp %202 : vector<1x8x8xf32>
    %cst_64 = arith.constant dense<0.000000e+00> : vector<1x8xf32>
    %204 = vector.multi_reduction <add>, %203, %cst_64 [2] : vector<1x8x8xf32> to vector<1x8xf32>
    %205 = vector.shape_cast %204 : vector<1x8xf32> to vector<1x8x1xf32>
    %206 = tpu.reciprocal %205 {approx = true} : vector<1x8x1xf32> -> vector<1x8x1xf32>
    %207 = vector.broadcast %206 : vector<1x8x1xf32> to vector<1x8x8xf32>
    %208 = arith.mulf %203, %207 : vector<1x8x8xf32>
    %209 = arith.truncf %208 : vector<1x8x8xf32> to vector<1x8x8xbf16>
    "tpu.trace_start"() <{level = 10 : i32, message = "bqk,bkd->bqd"}> : () -> ()
    %cst_65 = arith.constant dense<0.000000e+00> : vector<1x8x8xf32>
    %210 = tpu.matmul %209, %193, %cst_65 {dimension_numbers = #tpu.dot_dimension_numbers<[2], [1], [1], [2], [0, 0, 0, 1, 1, 2], [0], [0]>} : vector<1x8x8xbf16>, vector<1x8x8xbf16>, vector<1x8x8xf32> -> vector<1x8x8xf32>
    "tpu.trace_stop"() : () -> ()
    %211 = arith.truncf %210 : vector<1x8x8xf32> to vector<1x8x8xbf16>
    %212 = vector.extract_strided_slice %175 {offsets = [0, 8], sizes = [8, 8], strides = [1, 1]} : vector<8x32xf32> to vector<8x8xf32>
    %213 = arith.truncf %212 : vector<8x8xf32> to vector<8x8xbf16>
    %214 = vector.shape_cast %213 : vector<8x8xbf16> to vector<1x8x8xbf16>
    %215 = vector.extract_strided_slice %183 {offsets = [0, 8], sizes = [8, 8], strides = [1, 1]} : vector<8x32xf32> to vector<8x8xf32>
    %216 = arith.truncf %215 : vector<8x8xf32> to vector<8x8xbf16>
    %217 = vector.shape_cast %216 : vector<8x8xbf16> to vector<1x8x8xbf16>
    %218 = vector.extract_strided_slice %184 {offsets = [0, 8], sizes = [8, 8], strides = [1, 1]} : vector<8x32xf32> to vector<8x8xf32>
    %219 = arith.truncf %218 : vector<8x8xf32> to vector<8x8xbf16>
    %220 = vector.shape_cast %219 : vector<8x8xbf16> to vector<1x8x8xbf16>
    "tpu.trace_start"() <{level = 10 : i32, message = "bqd,bkd->bqk"}> : () -> ()
    %cst_66 = arith.constant dense<0.000000e+00> : vector<1x8x8xf32>
    %221 = tpu.matmul %214, %217, %cst_66 {dimension_numbers = #tpu.dot_dimension_numbers<[2], [2], [1], [1], [0, 0, 0, 1, 1, 1], [0], [0]>} : vector<1x8x8xbf16>, vector<1x8x8xbf16>, vector<1x8x8xf32> -> vector<1x8x8xf32>
    %cst_67 = arith.constant -1.000000e+09 : f32
    "tpu.trace_stop"() : () -> ()
    %222 = vector.shape_cast %28 : vector<1x1x8xi1> to vector<1x1x8xi1>
    %223 = vector.broadcast %222 : vector<1x1x8xi1> to vector<1x8x8xi1>
    %224 = vector.broadcast %cst_67 : f32 to vector<1x8x8xf32>
    %225 = arith.select %223, %221, %224 : vector<1x8x8xi1>, vector<1x8x8xf32>
    %cst_68 = arith.constant dense<0xFF800000> : vector<1x8xf32>
    %226 = vector.multi_reduction <maximumf>, %225, %cst_68 [2] : vector<1x8x8xf32> to vector<1x8xf32>
    %227 = vector.shape_cast %226 : vector<1x8xf32> to vector<1x8x1xf32>
    %228 = vector.broadcast %227 : vector<1x8x1xf32> to vector<1x8x8xf32>
    %229 = arith.subf %225, %228 : vector<1x8x8xf32>
    %230 = math.exp %229 : vector<1x8x8xf32>
    %cst_69 = arith.constant dense<0.000000e+00> : vector<1x8xf32>
    %231 = vector.multi_reduction <add>, %230, %cst_69 [2] : vector<1x8x8xf32> to vector<1x8xf32>
    %232 = vector.shape_cast %231 : vector<1x8xf32> to vector<1x8x1xf32>
    %233 = tpu.reciprocal %232 {approx = true} : vector<1x8x1xf32> -> vector<1x8x1xf32>
    %234 = vector.broadcast %233 : vector<1x8x1xf32> to vector<1x8x8xf32>
    %235 = arith.mulf %230, %234 : vector<1x8x8xf32>
    %236 = arith.truncf %235 : vector<1x8x8xf32> to vector<1x8x8xbf16>
    "tpu.trace_start"() <{level = 10 : i32, message = "bqk,bkd->bqd"}> : () -> ()
    %cst_70 = arith.constant dense<0.000000e+00> : vector<1x8x8xf32>
    %237 = tpu.matmul %236, %220, %cst_70 {dimension_numbers = #tpu.dot_dimension_numbers<[2], [1], [1], [2], [0, 0, 0, 1, 1, 2], [0], [0]>} : vector<1x8x8xbf16>, vector<1x8x8xbf16>, vector<1x8x8xf32> -> vector<1x8x8xf32>
    "tpu.trace_stop"() : () -> ()
    %238 = arith.truncf %237 : vector<1x8x8xf32> to vector<1x8x8xbf16>
    %239 = vector.extract_strided_slice %175 {offsets = [0, 16], sizes = [8, 8], strides = [1, 1]} : vector<8x32xf32> to vector<8x8xf32>
    %240 = arith.truncf %239 : vector<8x8xf32> to vector<8x8xbf16>
    %241 = vector.shape_cast %240 : vector<8x8xbf16> to vector<1x8x8xbf16>
    %242 = vector.extract_strided_slice %183 {offsets = [0, 16], sizes = [8, 8], strides = [1, 1]} : vector<8x32xf32> to vector<8x8xf32>
    %243 = arith.truncf %242 : vector<8x8xf32> to vector<8x8xbf16>
    %244 = vector.shape_cast %243 : vector<8x8xbf16> to vector<1x8x8xbf16>
    %245 = vector.extract_strided_slice %184 {offsets = [0, 16], sizes = [8, 8], strides = [1, 1]} : vector<8x32xf32> to vector<8x8xf32>
    %246 = arith.truncf %245 : vector<8x8xf32> to vector<8x8xbf16>
    %247 = vector.shape_cast %246 : vector<8x8xbf16> to vector<1x8x8xbf16>
    "tpu.trace_start"() <{level = 10 : i32, message = "bqd,bkd->bqk"}> : () -> ()
    %cst_71 = arith.constant dense<0.000000e+00> : vector<1x8x8xf32>
    %248 = tpu.matmul %241, %244, %cst_71 {dimension_numbers = #tpu.dot_dimension_numbers<[2], [2], [1], [1], [0, 0, 0, 1, 1, 1], [0], [0]>} : vector<1x8x8xbf16>, vector<1x8x8xbf16>, vector<1x8x8xf32> -> vector<1x8x8xf32>
    %cst_72 = arith.constant -1.000000e+09 : f32
    "tpu.trace_stop"() : () -> ()
    %249 = vector.shape_cast %28 : vector<1x1x8xi1> to vector<1x1x8xi1>
    %250 = vector.broadcast %249 : vector<1x1x8xi1> to vector<1x8x8xi1>
    %251 = vector.broadcast %cst_72 : f32 to vector<1x8x8xf32>
    %252 = arith.select %250, %248, %251 : vector<1x8x8xi1>, vector<1x8x8xf32>
    %cst_73 = arith.constant dense<0xFF800000> : vector<1x8xf32>
    %253 = vector.multi_reduction <maximumf>, %252, %cst_73 [2] : vector<1x8x8xf32> to vector<1x8xf32>
    %254 = vector.shape_cast %253 : vector<1x8xf32> to vector<1x8x1xf32>
    %255 = vector.broadcast %254 : vector<1x8x1xf32> to vector<1x8x8xf32>
    %256 = arith.subf %252, %255 : vector<1x8x8xf32>
    %257 = math.exp %256 : vector<1x8x8xf32>
    %cst_74 = arith.constant dense<0.000000e+00> : vector<1x8xf32>
    %258 = vector.multi_reduction <add>, %257, %cst_74 [2] : vector<1x8x8xf32> to vector<1x8xf32>
    %259 = vector.shape_cast %258 : vector<1x8xf32> to vector<1x8x1xf32>
    %260 = tpu.reciprocal %259 {approx = true} : vector<1x8x1xf32> -> vector<1x8x1xf32>
    %261 = vector.broadcast %260 : vector<1x8x1xf32> to vector<1x8x8xf32>
    %262 = arith.mulf %257, %261 : vector<1x8x8xf32>
    %263 = arith.truncf %262 : vector<1x8x8xf32> to vector<1x8x8xbf16>
    "tpu.trace_start"() <{level = 10 : i32, message = "bqk,bkd->bqd"}> : () -> ()
    %cst_75 = arith.constant dense<0.000000e+00> : vector<1x8x8xf32>
    %264 = tpu.matmul %263, %247, %cst_75 {dimension_numbers = #tpu.dot_dimension_numbers<[2], [1], [1], [2], [0, 0, 0, 1, 1, 2], [0], [0]>} : vector<1x8x8xbf16>, vector<1x8x8xbf16>, vector<1x8x8xf32> -> vector<1x8x8xf32>
    "tpu.trace_stop"() : () -> ()
    %265 = arith.truncf %264 : vector<1x8x8xf32> to vector<1x8x8xbf16>
    %266 = vector.extract_strided_slice %175 {offsets = [0, 24], sizes = [8, 8], strides = [1, 1]} : vector<8x32xf32> to vector<8x8xf32>
    %267 = arith.truncf %266 : vector<8x8xf32> to vector<8x8xbf16>
    %268 = vector.shape_cast %267 : vector<8x8xbf16> to vector<1x8x8xbf16>
    %269 = vector.extract_strided_slice %183 {offsets = [0, 24], sizes = [8, 8], strides = [1, 1]} : vector<8x32xf32> to vector<8x8xf32>
    %270 = arith.truncf %269 : vector<8x8xf32> to vector<8x8xbf16>
    %271 = vector.shape_cast %270 : vector<8x8xbf16> to vector<1x8x8xbf16>
    %272 = vector.extract_strided_slice %184 {offsets = [0, 24], sizes = [8, 8], strides = [1, 1]} : vector<8x32xf32> to vector<8x8xf32>
    %273 = arith.truncf %272 : vector<8x8xf32> to vector<8x8xbf16>
    %274 = vector.shape_cast %273 : vector<8x8xbf16> to vector<1x8x8xbf16>
    "tpu.trace_start"() <{level = 10 : i32, message = "bqd,bkd->bqk"}> : () -> ()
    %cst_76 = arith.constant dense<0.000000e+00> : vector<1x8x8xf32>
    %275 = tpu.matmul %268, %271, %cst_76 {dimension_numbers = #tpu.dot_dimension_numbers<[2], [2], [1], [1], [0, 0, 0, 1, 1, 1], [0], [0]>} : vector<1x8x8xbf16>, vector<1x8x8xbf16>, vector<1x8x8xf32> -> vector<1x8x8xf32>
    %cst_77 = arith.constant -1.000000e+09 : f32
    "tpu.trace_stop"() : () -> ()
    %276 = vector.shape_cast %28 : vector<1x1x8xi1> to vector<1x1x8xi1>
    %277 = vector.broadcast %276 : vector<1x1x8xi1> to vector<1x8x8xi1>
    %278 = vector.broadcast %cst_77 : f32 to vector<1x8x8xf32>
    %279 = arith.select %277, %275, %278 : vector<1x8x8xi1>, vector<1x8x8xf32>
    %cst_78 = arith.constant dense<0xFF800000> : vector<1x8xf32>
    %280 = vector.multi_reduction <maximumf>, %279, %cst_78 [2] : vector<1x8x8xf32> to vector<1x8xf32>
    %281 = vector.shape_cast %280 : vector<1x8xf32> to vector<1x8x1xf32>
    %282 = vector.broadcast %281 : vector<1x8x1xf32> to vector<1x8x8xf32>
    %283 = arith.subf %279, %282 : vector<1x8x8xf32>
    %284 = math.exp %283 : vector<1x8x8xf32>
    %cst_79 = arith.constant dense<0.000000e+00> : vector<1x8xf32>
    %285 = vector.multi_reduction <add>, %284, %cst_79 [2] : vector<1x8x8xf32> to vector<1x8xf32>
    %286 = vector.shape_cast %285 : vector<1x8xf32> to vector<1x8x1xf32>
    %287 = tpu.reciprocal %286 {approx = true} : vector<1x8x1xf32> -> vector<1x8x1xf32>
    %288 = vector.broadcast %287 : vector<1x8x1xf32> to vector<1x8x8xf32>
    %289 = arith.mulf %284, %288 : vector<1x8x8xf32>
    %290 = arith.truncf %289 : vector<1x8x8xf32> to vector<1x8x8xbf16>
    "tpu.trace_start"() <{level = 10 : i32, message = "bqk,bkd->bqd"}> : () -> ()
    %cst_80 = arith.constant dense<0.000000e+00> : vector<1x8x8xf32>
    %291 = tpu.matmul %290, %274, %cst_80 {dimension_numbers = #tpu.dot_dimension_numbers<[2], [1], [1], [2], [0, 0, 0, 1, 1, 2], [0], [0]>} : vector<1x8x8xbf16>, vector<1x8x8xbf16>, vector<1x8x8xf32> -> vector<1x8x8xf32>
    "tpu.trace_stop"() : () -> ()
    %292 = arith.truncf %291 : vector<1x8x8xf32> to vector<1x8x8xbf16>
    %293 = tpu.concatenate %211, %238, %265, %292 in 2 : vector<1x8x8xbf16>, vector<1x8x8xbf16>, vector<1x8x8xbf16>, vector<1x8x8xbf16> -> vector<1x8x32xbf16>
    %294 = vector.shape_cast %293 : vector<1x8x32xbf16> to vector<8x32xbf16>
    %c0_81 = arith.constant 0 : index
    %c0_82 = arith.constant 0 : index
    %c0_83 = arith.constant 0 : index
    %295 = vector.load %arg12[%c0_81, %c0_82, %c0_83] : memref<1x32x32xbf16, #tpu.memory_space<vmem>>, vector<1x32x32xbf16>
    %296 = vector.shape_cast %295 : vector<1x32x32xbf16> to vector<32x32xbf16>
    %cst_84 = arith.constant dense<0.000000e+00> : vector<8x32xf32>
    %297 = tpu.matmul %294, %296, %cst_84 {dimension_numbers = #tpu.dot_dimension_numbers<[1], [0], [0], [1], [0, 0, 1, 1], [], []>} : vector<8x32xbf16>, vector<32x32xbf16>, vector<8x32xf32> -> vector<8x32xf32>
    %298 = arith.addf %169, %297 : vector<8x32xf32>
    %299 = vector.broadcast %10 : vector<1x32xf32> to vector<8x32xf32>
    %300 = arith.addf %298, %299 : vector<8x32xf32>
    %cst_85 = arith.constant dense<0.000000e+00> : vector<8xf32>
    %301 = vector.multi_reduction <add>, %300, %cst_85 [1] : vector<8x32xf32> to vector<8xf32>
    %302 = vector.shape_cast %301 : vector<8xf32> to vector<8x1xf32>
    %cst_86 = arith.constant 3.200000e+01 : f32
    %303 = vector.broadcast %cst_86 : f32 to vector<8x1xf32>
    %304 = arith.divf %302, %303 : vector<8x1xf32>
    %305 = vector.broadcast %304 : vector<8x1xf32> to vector<8x32xf32>
    %306 = arith.subf %300, %305 : vector<8x32xf32>
    %307 = arith.mulf %306, %306 : vector<8x32xf32>
    %cst_87 = arith.constant dense<0.000000e+00> : vector<8xf32>
    %308 = vector.multi_reduction <add>, %307, %cst_87 [1] : vector<8x32xf32> to vector<8xf32>
    %309 = vector.shape_cast %308 : vector<8xf32> to vector<8x1xf32>
    %cst_88 = arith.constant 3.200000e+01 : f32
    %310 = vector.broadcast %cst_88 : f32 to vector<8x1xf32>
    %311 = arith.divf %309, %310 : vector<8x1xf32>
    %312 = vector.broadcast %304 : vector<8x1xf32> to vector<8x32xf32>
    %313 = arith.subf %300, %312 : vector<8x32xf32>
    %cst_89 = arith.constant 9.99999974E-6 : f32
    %314 = vector.broadcast %cst_89 : f32 to vector<8x1xf32>
    %315 = arith.addf %311, %314 : vector<8x1xf32>
    %316 = math.rsqrt %315 : vector<8x1xf32>
    %317 = vector.broadcast %316 : vector<8x1xf32> to vector<8x32xf32>
    %318 = arith.mulf %313, %317 : vector<8x32xf32>
    %319 = vector.broadcast %11 : vector<1x32xf32> to vector<8x32xf32>
    %320 = arith.mulf %318, %319 : vector<8x32xf32>
    %321 = vector.broadcast %12 : vector<1x32xf32> to vector<8x32xf32>
    %322 = arith.addf %320, %321 : vector<8x32xf32>
    %323 = arith.truncf %322 : vector<8x32xf32> to vector<8x32xbf16>
    %cst_90 = arith.constant 0.000000e+00 : f32
    %324 = vector.broadcast %cst_90 : f32 to vector<8x32xf32>
    %c0_91 = arith.constant 0 : index
    %c0_92 = arith.constant 0 : index
    %c0_93 = arith.constant 0 : index
    %325 = vector.load %arg13[%c0_91, %c0_92, %c0_93] : memref<1x32x128xbf16, #tpu.memory_space<vmem>>, vector<1x32x128xbf16>
    %326 = vector.shape_cast %325 : vector<1x32x128xbf16> to vector<32x128xbf16>
    %cst_94 = arith.constant dense<0.000000e+00> : vector<8x128xf32>
    %327 = tpu.matmul %323, %326, %cst_94 {dimension_numbers = #tpu.dot_dimension_numbers<[1], [0], [0], [1], [0, 0, 1, 1], [], []>} : vector<8x32xbf16>, vector<32x128xbf16>, vector<8x128xf32> -> vector<8x128xf32>
    %c0_95 = arith.constant 0 : index
    %c0_96 = arith.constant 0 : index
    %c0_97 = arith.constant 0 : index
    %328 = vector.load %arg14[%c0_95, %c0_96, %c0_97] : memref<1x1x128xf32, #tpu.memory_space<vmem>>, vector<1x1x128xf32>
    %329 = vector.shape_cast %328 : vector<1x1x128xf32> to vector<1x128xf32>
    %330 = vector.broadcast %329 : vector<1x128xf32> to vector<8x128xf32>
    %331 = arith.addf %327, %330 : vector<8x128xf32>
    %cst_98 = arith.constant 0.000000e+00 : f32
    %332 = vector.broadcast %cst_98 : f32 to vector<8x128xf32>
    %333 = arith.maximumf %331, %332 : vector<8x128xf32>
    %334 = arith.truncf %333 : vector<8x128xf32> to vector<8x128xbf16>
    %c0_99 = arith.constant 0 : index
    %c0_100 = arith.constant 0 : index
    %c0_101 = arith.constant 0 : index
    %335 = vector.load %arg15[%c0_99, %c0_100, %c0_101] : memref<1x128x32xbf16, #tpu.memory_space<vmem>>, vector<1x128x32xbf16>
    %336 = vector.shape_cast %335 : vector<1x128x32xbf16> to vector<128x32xbf16>
    %cst_102 = arith.constant dense<0.000000e+00> : vector<8x32xf32>
    %337 = tpu.matmul %334, %336, %cst_102 {dimension_numbers = #tpu.dot_dimension_numbers<[1], [0], [0], [1], [0, 0, 1, 1], [], []>} : vector<8x128xbf16>, vector<128x32xbf16>, vector<8x32xf32> -> vector<8x32xf32>
    %338 = arith.addf %324, %337 : vector<8x32xf32>
    %339 = arith.addf %322, %338 : vector<8x32xf32>
    %340 = vector.broadcast %13 : vector<1x32xf32> to vector<8x32xf32>
    %341 = arith.addf %339, %340 : vector<8x32xf32>
    %cst_103 = arith.constant dense<0.000000e+00> : vector<8xf32>
    %342 = vector.multi_reduction <add>, %341, %cst_103 [1] : vector<8x32xf32> to vector<8xf32>
    %343 = vector.shape_cast %342 : vector<8xf32> to vector<8x1xf32>
    %cst_104 = arith.constant 3.200000e+01 : f32
    %344 = vector.broadcast %cst_104 : f32 to vector<8x1xf32>
    %345 = arith.divf %343, %344 : vector<8x1xf32>
    %346 = vector.broadcast %345 : vector<8x1xf32> to vector<8x32xf32>
    %347 = arith.subf %341, %346 : vector<8x32xf32>
    %348 = arith.mulf %347, %347 : vector<8x32xf32>
    %cst_105 = arith.constant dense<0.000000e+00> : vector<8xf32>
    %349 = vector.multi_reduction <add>, %348, %cst_105 [1] : vector<8x32xf32> to vector<8xf32>
    %350 = vector.shape_cast %349 : vector<8xf32> to vector<8x1xf32>
    %cst_106 = arith.constant 3.200000e+01 : f32
    %351 = vector.broadcast %cst_106 : f32 to vector<8x1xf32>
    %352 = arith.divf %350, %351 : vector<8x1xf32>
    %353 = vector.broadcast %345 : vector<8x1xf32> to vector<8x32xf32>
    %354 = arith.subf %341, %353 : vector<8x32xf32>
    %cst_107 = arith.constant 9.99999974E-6 : f32
    %355 = vector.broadcast %cst_107 : f32 to vector<8x1xf32>
    %356 = arith.addf %352, %355 : vector<8x1xf32>
    %357 = math.rsqrt %356 : vector<8x1xf32>
    %358 = vector.broadcast %357 : vector<8x1xf32> to vector<8x32xf32>
    %359 = arith.mulf %354, %358 : vector<8x32xf32>
    %360 = vector.broadcast %14 : vector<1x32xf32> to vector<8x32xf32>
    %361 = arith.mulf %359, %360 : vector<8x32xf32>
    %362 = vector.broadcast %15 : vector<1x32xf32> to vector<8x32xf32>
    %363 = arith.addf %361, %362 : vector<8x32xf32>
    %c0_108 = arith.constant 0 : index
    %c0_109 = arith.constant 0 : index
    %364 = vector.load %arg17[%c0_108, %c0_109] : memref<8x32xf32, #tpu.memory_space<vmem>>, vector<8x32xf32>
    tpu.vector_store %arg17[%c0_108, %c0_109], %363 {strides = array<i32>} : memref<8x32xf32, #tpu.memory_space<vmem>>, vector<8x32xf32>,
    return
  }
  func.func @transform_0(%arg0: i32, %arg1: i32) -> (i32, i32) {
    %c0_i32 = arith.constant 0 : i32
    %c0_i32_0 = arith.constant 0 : i32
    return %arg0, %c0_i32 : i32, i32
  }
  func.func @transform_1(%arg0: i32, %arg1: i32) -> (i32, i32) {
    %c0_i32 = arith.constant 0 : i32
    %c0_i32_0 = arith.constant 0 : i32
    return %arg0, %c0_i32 : i32, i32
  }
  func.func @transform_2(%arg0: i32, %arg1: i32) -> (i32, i32, i32) {
    %c0_i32 = arith.constant 0 : i32
    %c0_i32_0 = arith.constant 0 : i32
    %c0_i32_1 = arith.constant 0 : i32
    return %arg0, %c0_i32, %c0_i32_0 : i32, i32, i32
  }
  func.func @transform_3(%arg0: i32, %arg1: i32) -> (i32, i32, i32) {
    %c0_i32 = arith.constant 0 : i32
    %c0_i32_0 = arith.constant 0 : i32
    %c0_i32_1 = arith.constant 0 : i32
    return %arg0, %c0_i32, %c0_i32_0 : i32, i32, i32
  }
  func.func @transform_4(%arg0: i32, %arg1: i32) -> (i32, i32, i32) {
    %c0_i32 = arith.constant 0 : i32
    %c0_i32_0 = arith.constant 0 : i32
    %c0_i32_1 = arith.constant 0 : i32
    return %arg1, %c0_i32, %c0_i32_0 : i32, i32, i32
  }
  func.func @transform_5(%arg0: i32, %arg1: i32) -> (i32, i32, i32) {
    %c0_i32 = arith.constant 0 : i32
    %c0_i32_0 = arith.constant 0 : i32
    %c0_i32_1 = arith.constant 0 : i32
    return %arg1, %c0_i32, %c0_i32_0 : i32, i32, i32
  }
  func.func @transform_6(%arg0: i32, %arg1: i32) -> (i32, i32, i32) {
    %c0_i32 = arith.constant 0 : i32
    %c0_i32_0 = arith.constant 0 : i32
    %c0_i32_1 = arith.constant 0 : i32
    return %arg1, %c0_i32, %c0_i32_0 : i32, i32, i32
  }
  func.func @transform_7(%arg0: i32, %arg1: i32) -> (i32, i32, i32) {
    %c0_i32 = arith.constant 0 : i32
    %c0_i32_0 = arith.constant 0 : i32
    %c0_i32_1 = arith.constant 0 : i32
    return %arg1, %c0_i32, %c0_i32_0 : i32, i32, i32
  }
  func.func @transform_8(%arg0: i32, %arg1: i32) -> (i32, i32, i32) {
    %c0_i32 = arith.constant 0 : i32
    %c0_i32_0 = arith.constant 0 : i32
    %c0_i32_1 = arith.constant 0 : i32
    return %arg1, %c0_i32, %c0_i32_0 : i32, i32, i32
  }
  func.func @transform_9(%arg0: i32, %arg1: i32) -> (i32, i32, i32) {
    %c0_i32 = arith.constant 0 : i32
    %c0_i32_0 = arith.constant 0 : i32
    %c0_i32_1 = arith.constant 0 : i32
    return %arg1, %c0_i32, %c0_i32_0 : i32, i32, i32
  }
  func.func @transform_10(%arg0: i32, %arg1: i32) -> (i32, i32, i32) {
    %c0_i32 = arith.constant 0 : i32
    %c0_i32_0 = arith.constant 0 : i32
    %c0_i32_1 = arith.constant 0 : i32
    return %arg1, %c0_i32, %c0_i32_0 : i32, i32, i32
  }
  func.func @transform_11(%arg0: i32, %arg1: i32) -> (i32, i32, i32) {
    %c0_i32 = arith.constant 0 : i32
    %c0_i32_0 = arith.constant 0 : i32
    %c0_i32_1 = arith.constant 0 : i32
    return %arg1, %c0_i32, %c0_i32_0 : i32, i32, i32
  }
  func.func @transform_12(%arg0: i32, %arg1: i32) -> (i32, i32, i32) {
    %c0_i32 = arith.constant 0 : i32
    %c0_i32_0 = arith.constant 0 : i32
    %c0_i32_1 = arith.constant 0 : i32
    return %arg1, %c0_i32, %c0_i32_0 : i32, i32, i32
  }
  func.func @transform_13(%arg0: i32, %arg1: i32) -> (i32, i32, i32) {
    %c0_i32 = arith.constant 0 : i32
    %c0_i32_0 = arith.constant 0 : i32
    %c0_i32_1 = arith.constant 0 : i32
    return %arg1, %c0_i32, %c0_i32_0 : i32, i32, i32
  }
  func.func @transform_14(%arg0: i32, %arg1: i32) -> (i32, i32, i32) {
    %c0_i32 = arith.constant 0 : i32
    %c0_i32_0 = arith.constant 0 : i32
    %c0_i32_1 = arith.constant 0 : i32
    return %arg1, %c0_i32, %c0_i32_0 : i32, i32, i32
  }
  func.func @transform_15(%arg0: i32, %arg1: i32) -> (i32, i32) {
    %c0_i32 = arith.constant 0 : i32
    %c0_i32_0 = arith.constant 0 : i32
    return %arg0, %c0_i32 : i32, i32
  }
}

</mosaic_0001>

<llo_original>
// kernel: tpu_custom_call.1
$region0: #{tpu_custom_call.1}
  #allocation0 [shape = 'u32[]', space=smem, size = 0x4, offset = 0x4, fixed_abs, tag = 'smem constant byte address 0x4 - core index']
  #allocation1 [shape = 'u32[144,128]{1,0:T(1,128)}', space=vmem, size = 0x12000, scoped, tag = 'internal scratch']
  %s0 = inlined_call_operand.hbm [shape: f32[16,32], index: 0, kind: input, shape index: {}]
  %s1 = inlined_call_operand.hbm [shape: bf16[16,32], index: 1, kind: input, shape index: {}]
  %s2 = inlined_call_operand.vmem [shape: bf16[2,1,8], index: 2, kind: input, shape index: {}]
  %s3 = inlined_call_operand.vmem [shape: bf16[2,1,8], index: 3, kind: input, shape index: {}]
  %s4 = inlined_call_operand.vmem [shape: bf16[2,32,96], index: 4, kind: input, shape index: {}]
  %s5 = inlined_call_operand.vmem [shape: f32[2,1,96], index: 5, kind: input, shape index: {}]
  %s6 = inlined_call_operand.vmem [shape: bf16[2,32,32], index: 6, kind: input, shape index: {}]
  %s7 = inlined_call_operand.vmem [shape: bf16[2,32,32], index: 7, kind: input, shape index: {}]
  %s8 = inlined_call_operand.vmem [shape: bf16[2,32,64], index: 8, kind: input, shape index: {}]
  %s9 = inlined_call_operand.vmem [shape: f32[2,1,64], index: 9, kind: input, shape index: {}]
  %s10 = inlined_call_operand.vmem [shape: bf16[2,32,32], index: 10, kind: input, shape index: {}]
  %s11 = inlined_call_operand.vmem [shape: bf16[2,32,128], index: 11, kind: input, shape index: {}]
  %s12 = inlined_call_operand.vmem [shape: f32[2,1,128], index: 12, kind: input, shape index: {}]
  %s13 = inlined_call_operand.vmem [shape: bf16[2,128,32], index: 13, kind: input, shape index: {}]
  %s14 = inlined_call_operand.vmem [shape: f32[2,10,32], index: 14, kind: input, shape index: {}]
  %s15 = inlined_call_operand.hbm [shape: f32[16,32], index: 15, kind: output, shape index: {}]
  %s16 = sld [smem:[#allocation0]]
  $region105: #{tpu_custom_call.1} parent=0
    _
  %s18 = ssub.s32 1, %s16
  %s19 = scalar_select 0, %s18, %s16
  $region1: #{tpu_custom_call.1} parent=0
    #allocation2 [shape = 'u8[8192]{0}', space=vmem, size = 0x2000, scoped, tag = 'input window, operand 0']
    #allocation3 [shape = 's32[2]{0}', space=sflag, size = 0x8, scoped, tag = 'scoped memory for tpu_custom_call.1']
    #allocation4 [shape = 's32[2]{0}', space=sflag, size = 0x8, scoped, tag = 'scoped memory for tpu_custom_call.1']
    #allocation5 [shape = 'u8[4096]{0}', space=vmem, size = 0x1000, scoped, tag = 'input window, operand 1']
    #allocation6 [shape = 's32[2]{0}', space=sflag, size = 0x8, scoped, tag = 'scoped memory for tpu_custom_call.1']
    #allocation7 [shape = 'u8[8192]{0}', space=vmem, size = 0x2000, scoped, tag = 'output window, operand 0']
    %20 = vsyncpa [#allocation3], 0
    %s21 = scalar_lea.sflag [#allocation3], 1
    %22 = vsyncpa %s21, 0
    %23 = vsyncpa [#allocation6], 0
    %s24 = scalar_lea.sflag [#allocation6], 1
    %25 = vsyncpa %s24, 0
    %26 = vsyncpa [#allocation4], 0
    %s27 = scalar_lea.sflag [#allocation4], 1
    %28 = vsyncpa %s27, 0
    loop: start=0, step=1, limit=6
    $region2: #{tpu_custom_call.1} parent=1 // loop_pre_header
      _
    $region3: #{tpu_custom_call.1} parent=1 // loop_header
      %s30 = sphi 0, %s34
      %p31 = scmp.ge.s32.totalorder %s30, 6
      %s37 = sphi 0, %s49
      %s38 = sphi 0, %s45
      %s39 = sphi 0, %s37
      %s40 = sphi 0, %s38
      %s41 = sphi 0, %s39
      %s42 = sphi 0, %s40
      %s52 = sphi 0, %s54
      %s55 = sphi 0, %s52
      %s56 = sphi 0, %s55
      %s72 = sphi 0, %s56
      %s78 = sphi 0, %s80
      %s81 = sphi 0, %s78
      %s82 = sphi 0, %s81
      %s98 = sphi 0, %s82
      %s104 = sphi 0, %s106
      %s107 = sphi 0, %s104
      %s108 = sphi 0, %s107
      %s124 = sphi 0, %s108
      %s130 = sphi 0, %s132
      %s133 = sphi 0, %s130
      %s134 = sphi 0, %s133
      %s150 = sphi 0, %s134
      %s156 = sphi 0, %s158
      %s159 = sphi 0, %s156
      %s160 = sphi 0, %s159
      %s176 = sphi 0, %s160
      %s182 = sphi 0, %s184
      %s185 = sphi 0, %s182
      %s186 = sphi 0, %s185
      %s202 = sphi 0, %s186
      %s208 = sphi 0, %s210
      %s211 = sphi 0, %s208
      %s212 = sphi 0, %s211
      %s228 = sphi 0, %s212
      %s234 = sphi 0, %s236
      %s237 = sphi 0, %s234
      %s238 = sphi 0, %s237
      %s254 = sphi 0, %s238
      %s260 = sphi 0, %s262
      %s263 = sphi 0, %s260
      %s264 = sphi 0, %s263
      %s280 = sphi 0, %s264
      %s286 = sphi 0, %s288
      %s289 = sphi 0, %s286
      %s290 = sphi 0, %s289
      %s306 = sphi 0, %s290
      %s312 = sphi 0, %s314
      %s315 = sphi 0, %s312
      %s316 = sphi 0, %s315
      %s332 = sphi 0, %s316
      %s338 = sphi 0, %s340
      %s341 = sphi 0, %s338
      %s342 = sphi 0, %s341
      %s358 = sphi 0, %s342
      %s364 = sphi 0, %s366
      %s367 = sphi 0, %s364
      %s368 = sphi 0, %s367
      %s384 = sphi 0, %s368
      %s390 = sphi 0, %s392
      %s393 = sphi 0, %s390
      %s394 = sphi 0, %s393
      %s410 = sphi 0, %s394
      %s416 = sphi 0, %s418
      %s419 = sphi 0, %s416
      %s420 = sphi 0, %s419
      %s436 = sphi 0, %s420
      %s442 = sphi 0, %s444
      %s445 = sphi 0, %s442
      %s446 = sphi 0, %s445
      %s462 = sphi 0, %s446
    $region4: #{tpu_custom_call.1} parent=1 // loop_header_branch
      %33 = sbr.rel (%p31) target = $region8
    $region5: #{tpu_custom_call.1} parent=1 // loop_body
      %s35 = ssub.s32 %s30, 1
      %s36 = ssub.s32 %s30, 2
      %s43 = sadd.s32 1, %s38
      %p44 = scmp.ge.s32.totalorder %s43, 2
      %s45 = scalar_select %p44, 0, %s43
      %s46 = sadd.s32 1, %s37
      %s47 = scalar_select %p44, %s46, %s37
      %p48 = scmp.ge.s32.totalorder %s47, 2
      %s49 = scalar_select %p48, 0, %s47
      %s50 = ssub.s32 %s37, %s49
      %p51 = scmp.eq.s32.totalorder %s50, 0
      %s53 = sadd.s32 %s52, 1
      %s54 = scalar_select %p51, %s52, %s53
      %p57 = pneg %p51
      %p58 = scmp.eq.s32.totalorder %s30, 3
      %p59 = por %p57, %p58
      %p60 = scmp.ne.s32.totalorder %s52, %s55
      %p61 = scmp.eq.s32.totalorder %s30, 0
      %p62 = por %p60, %p61
      %p63 = scmp.ne.s32.totalorder %s52, %s55
      %p64 = scmp.eq.s32.totalorder %s35, 3
      %p65 = por %p63, %p64
      %p66 = scmp.ne.s32.totalorder %s55, %s56
      %p67 = scmp.eq.s32.totalorder %s35, 0
      %p68 = por %p66, %p67
      %p69 = scmp.ne.s32.totalorder %s55, %s56
      %p70 = scmp.eq.s32.totalorder %s36, 3
      %p71 = por %p69, %p70
      %p73 = scmp.ne.s32.totalorder %s56, %s72
      %p74 = scmp.eq.s32.totalorder %s36, 0
      %p75 = por %p73, %p74
      %s76 = ssub.s32 %s37, %s49
      %p77 = scmp.eq.s32.totalorder %s76, 0
      %s79 = sadd.s32 %s78, 1
      %s80 = scalar_select %p77, %s78, %s79
      %p83 = pneg %p77
      %p84 = scmp.eq.s32.totalorder %s30, 3
      %p85 = por %p83, %p84
      %p86 = scmp.ne.s32.totalorder %s78, %s81
      %p87 = scmp.eq.s32.totalorder %s30, 0
      %p88 = por %p86, %p87
      %p89 = scmp.ne.s32.totalorder %s78, %s81
      %p90 = scmp.eq.s32.totalorder %s35, 3
      %p91 = por %p89, %p90
      %p92 = scmp.ne.s32.totalorder %s81, %s82
      %p93 = scmp.eq.s32.totalorder %s35, 0
      %p94 = por %p92, %p93
      %p95 = scmp.ne.s32.totalorder %s81, %s82
      %p96 = scmp.eq.s32.totalorder %s36, 3
      %p97 = por %p95, %p96
      %p99 = scmp.ne.s32.totalorder %s82, %s98
      %p100 = scmp.eq.s32.totalorder %s36, 0
      %p101 = por %p99, %p100
      %s102 = ssub.s32 %s37, %s49
      %p103 = scmp.eq.s32.totalorder %s102, 0
      %s105 = sadd.s32 %s104, 1
      %s106 = scalar_select %p103, %s104, %s105
      %p109 = pneg %p103
      %p110 = scmp.eq.s32.totalorder %s30, 3
      %p111 = por %p109, %p110
      %p112 = scmp.ne.s32.totalorder %s104, %s107
      %p113 = scmp.eq.s32.totalorder %s30, 0
      %p114 = por %p112, %p113
      %p115 = scmp.ne.s32.totalorder %s104, %s107
      %p116 = scmp.eq.s32.totalorder %s35, 3
      %p117 = por %p115, %p116
      %p118 = scmp.ne.s32.totalorder %s107, %s108
      %p119 = scmp.eq.s32.totalorder %s35, 0
      %p120 = por %p118, %p119
      %p121 = scmp.ne.s32.totalorder %s107, %s108
      %p122 = scmp.eq.s32.totalorder %s36, 3
      %p123 = por %p121, %p122
      %p125 = scmp.ne.s32.totalorder %s108, %s124
      %p126 = scmp.eq.s32.totalorder %s36, 0
      %p127 = por %p125, %p126
      %s128 = ssub.s32 %s37, %s49
      %p129 = scmp.eq.s32.totalorder %s128, 0
      %s131 = sadd.s32 %s130, 1
      %s132 = scalar_select %p129, %s130, %s131
      %p135 = pneg %p129
      %p136 = scmp.eq.s32.totalorder %s30, 3
      %p137 = por %p135, %p136
      %p138 = scmp.ne.s32.totalorder %s130, %s133
      %p139 = scmp.eq.s32.totalorder %s30, 0
      %p140 = por %p138, %p139
      %p141 = scmp.ne.s32.totalorder %s130, %s133
      %p142 = scmp.eq.s32.totalorder %s35, 3
      %p143 = por %p141, %p142
      %p144 = scmp.ne.s32.totalorder %s133, %s134
      %p145 = scmp.eq.s32.totalorder %s35, 0
      %p146 = por %p144, %p145
      %p147 = scmp.ne.s32.totalorder %s133, %s134
      %p148 = scmp.eq.s32.totalorder %s36, 3
      %p149 = por %p147, %p148
      %p151 = scmp.ne.s32.totalorder %s134, %s150
      %p152 = scmp.eq.s32.totalorder %s36, 0
      %p153 = por %p151, %p152
      %s154 = ssub.s32 %s38, %s45
      %p155 = scmp.eq.s32.totalorder %s154, 0
      %s157 = sadd.s32 %s156, 1
      %s158 = scalar_select %p155, %s156, %s157
      %p161 = pneg %p155
      %p162 = scmp.eq.s32.totalorder %s30, 3
      %p163 = por %p161, %p162
      %p164 = scmp.ne.s32.totalorder %s156, %s159
      %p165 = scmp.eq.s32.totalorder %s30, 0
      %p166 = por %p164, %p165
      %p167 = scmp.ne.s32.totalorder %s156, %s159
      %p168 = scmp.eq.s32.totalorder %s35, 3
      %p169 = por %p167, %p168
      %p170 = scmp.ne.s32.totalorder %s159, %s160
      %p171 = scmp.eq.s32.totalorder %s35, 0
      %p172 = por %p170, %p171
      %p173 = scmp.ne.s32.totalorder %s159, %s160
      %p174 = scmp.eq.s32.totalorder %s36, 3
      %p175 = por %p173, %p174
      %p177 = scmp.ne.s32.totalorder %s160, %s176
      %p178 = scmp.eq.s32.totalorder %s36, 0
      %p179 = por %p177, %p178
      %s180 = ssub.s32 %s38, %s45
      %p181 = scmp.eq.s32.totalorder %s180, 0
      %s183 = sadd.s32 %s182, 1
      %s184 = scalar_select %p181, %s182, %s183
      %p187 = pneg %p181
      %p188 = scmp.eq.s32.totalorder %s30, 3
      %p189 = por %p187, %p188
      %p190 = scmp.ne.s32.totalorder %s182, %s185
      %p191 = scmp.eq.s32.totalorder %s30, 0
      %p192 = por %p190, %p191
      %p193 = scmp.ne.s32.totalorder %s182, %s185
      %p194 = scmp.eq.s32.totalorder %s35, 3
      %p195 = por %p193, %p194
      %p196 = scmp.ne.s32.totalorder %s185, %s186
      %p197 = scmp.eq.s32.totalorder %s35, 0
      %p198 = por %p196, %p197
      %p199 = scmp.ne.s32.totalorder %s185, %s186
      %p200 = scmp.eq.s32.totalorder %s36, 3
      %p201 = por %p199, %p200
      %p203 = scmp.ne.s32.totalorder %s186, %s202
      %p204 = scmp.eq.s32.totalorder %s36, 0
      %p205 = por %p203, %p204
      %s206 = ssub.s32 %s38, %s45
      %p207 = scmp.eq.s32.totalorder %s206, 0
      %s209 = sadd.s32 %s208, 1
      %s210 = scalar_select %p207, %s208, %s209
      %p213 = pneg %p207
      %p214 = scmp.eq.s32.totalorder %s30, 3
      %p215 = por %p213, %p214
      %p216 = scmp.ne.s32.totalorder %s208, %s211
      %p217 = scmp.eq.s32.totalorder %s30, 0
      %p218 = por %p216, %p217
      %p219 = scmp.ne.s32.totalorder %s208, %s211
      %p220 = scmp.eq.s32.totalorder %s35, 3
      %p221 = por %p219, %p220
      %p222 = scmp.ne.s32.totalorder %s211, %s212
      %p223 = scmp.eq.s32.totalorder %s35, 0
      %p224 = por %p222, %p223
      %p225 = scmp.ne.s32.totalorder %s211, %s212
      %p226 = scmp.eq.s32.totalorder %s36, 3
      %p227 = por %p225, %p226
      %p229 = scmp.ne.s32.totalorder %s212, %s228
      %p230 = scmp.eq.s32.totalorder %s36, 0
      %p231 = por %p229, %p230
      %s232 = ssub.s32 %s38, %s45
      %p233 = scmp.eq.s32.totalorder %s232, 0
      %s235 = sadd.s32 %s234, 1
      %s236 = scalar_select %p233, %s234, %s235
      %p239 = pneg %p233
      %p240 = scmp.eq.s32.totalorder %s30, 3
      %p241 = por %p239, %p240
      %p242 = scmp.ne.s32.totalorder %s234, %s237
      %p243 = scmp.eq.s32.totalorder %s30, 0
      %p244 = por %p242, %p243
      %p245 = scmp.ne.s32.totalorder %s234, %s237
      %p246 = scmp.eq.s32.totalorder %s35, 3
      %p247 = por %p245, %p246
      %p248 = scmp.ne.s32.totalorder %s237, %s238
      %p249 = scmp.eq.s32.totalorder %s35, 0
      %p250 = por %p248, %p249
      %p251 = scmp.ne.s32.totalorder %s237, %s238
      %p252 = scmp.eq.s32.totalorder %s36, 3
      %p253 = por %p251, %p252
      %p255 = scmp.ne.s32.totalorder %s238, %s254
      %p256 = scmp.eq.s32.totalorder %s36, 0
      %p257 = por %p255, %p256
      %s258 = ssub.s32 %s38, %s45
      %p259 = scmp.eq.s32.totalorder %s258, 0
      %s261 = sadd.s32 %s260, 1
      %s262 = scalar_select %p259, %s260, %s261
      %p265 = pneg %p259
      %p266 = scmp.eq.s32.totalorder %s30, 3
      %p267 = por %p265, %p266
      %p268 = scmp.ne.s32.totalorder %s260, %s263
      %p269 = scmp.eq.s32.totalorder %s30, 0
      %p270 = por %p268, %p269
      %p271 = scmp.ne.s32.totalorder %s260, %s263
      %p272 = scmp.eq.s32.totalorder %s35, 3
      %p273 = por %p271, %p272
      %p274 = scmp.ne.s32.totalorder %s263, %s264
      %p275 = scmp.eq.s32.totalorder %s35, 0
      %p276 = por %p274, %p275
      %p277 = scmp.ne.s32.totalorder %s263, %s264
      %p278 = scmp.eq.s32.totalorder %s36, 3
      %p279 = por %p277, %p278
      %p281 = scmp.ne.s32.totalorder %s264, %s280
      %p282 = scmp.eq.s32.totalorder %s36, 0
      %p283 = por %p281, %p282
      %s284 = ssub.s32 %s38, %s45
      %p285 = scmp.eq.s32.totalorder %s284, 0
      %s287 = sadd.s32 %s286, 1
      %s288 = scalar_select %p285, %s286, %s287
      %p291 = pneg %p285
      %p292 = scmp.eq.s32.totalorder %s30, 3
      %p293 = por %p291, %p292
      %p294 = scmp.ne.s32.totalorder %s286, %s289
      %p295 = scmp.eq.s32.totalorder %s30, 0
      %p296 = por %p294, %p295
      %p297 = scmp.ne.s32.totalorder %s286, %s289
      %p298 = scmp.eq.s32.totalorder %s35, 3
      %p299 = por %p297, %p298
      %p300 = scmp.ne.s32.totalorder %s289, %s290
      %p301 = scmp.eq.s32.totalorder %s35, 0
      %p302 = por %p300, %p301
      %p303 = scmp.ne.s32.totalorder %s289, %s290
      %p304 = scmp.eq.s32.totalorder %s36, 3
      %p305 = por %p303, %p304
      %p307 = scmp.ne.s32.totalorder %s290, %s306
      %p308 = scmp.eq.s32.totalorder %s36, 0
      %p309 = por %p307, %p308
      %s310 = ssub.s32 %s38, %s45
      %p311 = scmp.eq.s32.totalorder %s310, 0
      %s313 = sadd.s32 %s312, 1
      %s314 = scalar_select %p311, %s312, %s313
      %p317 = pneg %p311
      %p318 = scmp.eq.s32.totalorder %s30, 3
      %p319 = por %p317, %p318
      %p320 = scmp.ne.s32.totalorder %s312, %s315
      %p321 = scmp.eq.s32.totalorder %s30, 0
      %p322 = por %p320, %p321
      %p323 = scmp.ne.s32.totalorder %s312, %s315
      %p324 = scmp.eq.s32.totalorder %s35, 3
      %p325 = por %p323, %p324
      %p326 = scmp.ne.s32.totalorder %s315, %s316
      %p327 = scmp.eq.s32.totalorder %s35, 0
      %p328 = por %p326, %p327
      %p329 = scmp.ne.s32.totalorder %s315, %s316
      %p330 = scmp.eq.s32.totalorder %s36, 3
      %p331 = por %p329, %p330
      %p333 = scmp.ne.s32.totalorder %s316, %s332
      %p334 = scmp.eq.s32.totalorder %s36, 0
      %p335 = por %p333, %p334
      %s336 = ssub.s32 %s38, %s45
      %p337 = scmp.eq.s32.totalorder %s336, 0
      %s339 = sadd.s32 %s338, 1
      %s340 = scalar_select %p337, %s338, %s339
      %p343 = pneg %p337
      %p344 = scmp.eq.s32.totalorder %s30, 3
      %p345 = por %p343, %p344
      %p346 = scmp.ne.s32.totalorder %s338, %s341
      %p347 = scmp.eq.s32.totalorder %s30, 0
      %p348 = por %p346, %p347
      %p349 = scmp.ne.s32.totalorder %s338, %s341
      %p350 = scmp.eq.s32.totalorder %s35, 3
      %p351 = por %p349, %p350
      %p352 = scmp.ne.s32.totalorder %s341, %s342
      %p353 = scmp.eq.s32.totalorder %s35, 0
      %p354 = por %p352, %p353
      %p355 = scmp.ne.s32.totalorder %s341, %s342
      %p356 = scmp.eq.s32.totalorder %s36, 3
      %p357 = por %p355, %p356
      %p359 = scmp.ne.s32.totalorder %s342, %s358
      %p360 = scmp.eq.s32.totalorder %s36, 0
      %p361 = por %p359, %p360
      %s362 = ssub.s32 %s38, %s45
      %p363 = scmp.eq.s32.totalorder %s362, 0
      %s365 = sadd.s32 %s364, 1
      %s366 = scalar_select %p363, %s364, %s365
      %p369 = pneg %p363
      %p370 = scmp.eq.s32.totalorder %s30, 3
      %p371 = por %p369, %p370
      %p372 = scmp.ne.s32.totalorder %s364, %s367
      %p373 = scmp.eq.s32.totalorder %s30, 0
      %p374 = por %p372, %p373
      %p375 = scmp.ne.s32.totalorder %s364, %s367
      %p376 = scmp.eq.s32.totalorder %s35, 3
      %p377 = por %p375, %p376
      %p378 = scmp.ne.s32.totalorder %s367, %s368
      %p379 = scmp.eq.s32.totalorder %s35, 0
      %p380 = por %p378, %p379
      %p381 = scmp.ne.s32.totalorder %s367, %s368
      %p382 = scmp.eq.s32.totalorder %s36, 3
      %p383 = por %p381, %p382
      %p385 = scmp.ne.s32.totalorder %s368, %s384
      %p386 = scmp.eq.s32.totalorder %s36, 0
      %p387 = por %p385, %p386
      %s388 = ssub.s32 %s38, %s45
      %p389 = scmp.eq.s32.totalorder %s388, 0
      %s391 = sadd.s32 %s390, 1
      %s392 = scalar_select %p389, %s390, %s391
      %p395 = pneg %p389
      %p396 = scmp.eq.s32.totalorder %s30, 3
      %p397 = por %p395, %p396
      %p398 = scmp.ne.s32.totalorder %s390, %s393
      %p399 = scmp.eq.s32.totalorder %s30, 0
      %p400 = por %p398, %p399
      %p401 = scmp.ne.s32.totalorder %s390, %s393
      %p402 = scmp.eq.s32.totalorder %s35, 3
      %p403 = por %p401, %p402
      %p404 = scmp.ne.s32.totalorder %s393, %s394
      %p405 = scmp.eq.s32.totalorder %s35, 0
      %p406 = por %p404, %p405
      %p407 = scmp.ne.s32.totalorder %s393, %s394
      %p408 = scmp.eq.s32.totalorder %s36, 3
      %p409 = por %p407, %p408
      %p411 = scmp.ne.s32.totalorder %s394, %s410
      %p412 = scmp.eq.s32.totalorder %s36, 0
      %p413 = por %p411, %p412
      %s414 = ssub.s32 %s38, %s45
      %p415 = scmp.eq.s32.totalorder %s414, 0
      %s417 = sadd.s32 %s416, 1
      %s418 = scalar_select %p415, %s416, %s417
      %p421 = pneg %p415
      %p422 = scmp.eq.s32.totalorder %s30, 3
      %p423 = por %p421, %p422
      %p424 = scmp.ne.s32.totalorder %s416, %s419
      %p425 = scmp.eq.s32.totalorder %s30, 0
      %p426 = por %p424, %p425
      %p427 = scmp.ne.s32.totalorder %s416, %s419
      %p428 = scmp.eq.s32.totalorder %s35, 3
      %p429 = por %p427, %p428
      %p430 = scmp.ne.s32.totalorder %s419, %s420
      %p431 = scmp.eq.s32.totalorder %s35, 0
      %p432 = por %p430, %p431
      %p433 = scmp.ne.s32.totalorder %s419, %s420
      %p434 = scmp.eq.s32.totalorder %s36, 3
      %p435 = por %p433, %p434
      %p437 = scmp.ne.s32.totalorder %s420, %s436
      %p438 = scmp.eq.s32.totalorder %s36, 0
      %p439 = por %p437, %p438
      %s440 = ssub.s32 %s37, %s49
      %p441 = scmp.eq.s32.totalorder %s440, 0
      %s443 = sadd.s32 %s442, 1
      %s444 = scalar_select %p441, %s442, %s443
      %p447 = pneg %p441
      %p448 = scmp.eq.s32.totalorder %s30, 3
      %p449 = por %p447, %p448
      %p450 = scmp.ne.s32.totalorder %s442, %s445
      %p451 = scmp.eq.s32.totalorder %s30, 0
      %p452 = por %p450, %p451
      %p453 = scmp.ne.s32.totalorder %s442, %s445
      %p454 = scmp.eq.s32.totalorder %s35, 3
      %p455 = por %p453, %p454
      %p456 = scmp.ne.s32.totalorder %s445, %s446
      %p457 = scmp.eq.s32.totalorder %s35, 0
      %p458 = por %p456, %p457
      %p459 = scmp.ne.s32.totalorder %s445, %s446
      %p460 = scmp.eq.s32.totalorder %s36, 3
      %p461 = por %p459, %p460
      %p463 = scmp.ne.s32.totalorder %s446, %s462
      %p464 = scmp.eq.s32.totalorder %s36, 0
      %p465 = por %p463, %p464
      %p466 = scmp.le.s32.totalorder 1, %s30
      %p467 = scmp.lt.s32.totalorder %s30, 5
      %p468 = pnand %p466, %p467
      %p469 = pneg %p468
      // Predicated region
      $region9: #{tpu_custom_call.1} parent=5 // pred_check
        _
      $region10: #{tpu_custom_call.1} parent=5 // pred_check_branch
        %471 = sbr.rel (%p468) target = $region12
      $region11: #{tpu_custom_call.1} parent=5 // pred_region
        %s472 = ssub.s32 %s30, 1
      $region12: #{tpu_custom_call.1} parent=5 // pred_fallthru
        _
      %p473 = scmp.lt.s32.totalorder %s30, 4
      // Predicated region
      $region13: #{tpu_custom_call.1} parent=5 // pred_check
        %p474 = pneg %p473
      $region14: #{tpu_custom_call.1} parent=5 // pred_check_branch
        %476 = sbr.rel (%p474) target = $region16
      $region15: #{tpu_custom_call.1} parent=5 // pred_region
        // Predicated region
        $region17: #{tpu_custom_call.1} parent=15 // pred_check
          %p477 = pneg %p62
        $region18: #{tpu_custom_call.1} parent=15 // pred_check_branch
          %479 = sbr.rel (%p477) target = $region20
        $region19: #{tpu_custom_call.1} parent=15 // pred_region
          %s480 = sand.u32 %s52, 1
          %s481 = scalar_lea.sflag [#allocation3], %s480
          %s482 = sand.u32 %s52, 1
          %s483 = smul.addr %s482, 8
          %s484 = scalar_lea.vmem [#allocation2], %s483
          %s486 = ssub.s32 128, 128
          %487 = vsyncadd %s481, %s486
          %s488 = smul.addr %s37, 128
          %s489 = scalar_lea.hbm %s0, %s488
          %s491 = sshll.u32 %s484, 4
          %s492 = int_to_ptr.vmem [resolvable:$true] %s491
          %494 = dma.hbm_to_vmem [thread:$0]  %s489, 128, %s492, %s481
        $region20: #{tpu_custom_call.1} parent=15 // pred_fallthru
          _
        // Predicated region
        $region21: #{tpu_custom_call.1} parent=15 // pred_check
          %p495 = pneg %p88
        $region22: #{tpu_custom_call.1} parent=15 // pred_check_branch
          %497 = sbr.rel (%p495) target = $region24
        $region23: #{tpu_custom_call.1} parent=15 // pred_region
          %s498 = sand.u32 %s78, 1
          %s499 = scalar_lea.sflag [#allocation6], %s498
          %s500 = sand.u32 %s78, 1
          %s501 = smul.addr %s500, 4
          %s502 = scalar_lea.vmem [#allocation5], %s501
          %s504 = ssub.s32 64, 64
          %505 = vsyncadd %s499, %s504
          %s506 = smul.addr %s37, 64
          %s507 = scalar_lea.hbm %s1, %s506
          %s509 = sshll.u32 %s502, 4
          %s510 = int_to_ptr.vmem [resolvable:$true] %s509
          %512 = dma.hbm_to_vmem [thread:$0]  %s507, 64, %s510, %s499
        $region24: #{tpu_custom_call.1} parent=15 // pred_fallthru
          _
        // Predicated region
        $region25: #{tpu_custom_call.1} parent=15 // pred_check
          %p513 = pneg %p114
        $region26: #{tpu_custom_call.1} parent=15 // pred_check_branch
          %515 = sbr.rel (%p513) target = $region28
        $region27: #{tpu_custom_call.1} parent=15 // pred_region
          %p516 = scmp.lt.s32.totalorder %s37, 1
          %s517 = scalar_select %p516, %s37, 1
          %s518 = scalar_lea.vmem %s2, %s517
        $region28: #{tpu_custom_call.1} parent=15 // pred_fallthru
          _
        // Predicated region
        $region29: #{tpu_custom_call.1} parent=15 // pred_check
          %p519 = pneg %p140
        $region30: #{tpu_custom_call.1} parent=15 // pred_check_branch
          %521 = sbr.rel (%p519) target = $region32
        $region31: #{tpu_custom_call.1} parent=15 // pred_region
          %p522 = scmp.lt.s32.totalorder %s37, 1
          %s523 = scalar_select %p522, %s37, 1
          %s524 = scalar_lea.vmem %s3, %s523
        $region32: #{tpu_custom_call.1} parent=15 // pred_fallthru
          _
        // Predicated region
        $region33: #{tpu_custom_call.1} parent=15 // pred_check
          %p525 = pneg %p166
        $region34: #{tpu_custom_call.1} parent=15 // pred_check_branch
          %527 = sbr.rel (%p525) target = $region36
        $region35: #{tpu_custom_call.1} parent=15 // pred_region
          %p528 = scmp.lt.s32.totalorder %s38, 1
          %s529 = scalar_select %p528, %s38, 1
          %s530 = smul.addr %s529, 4
          %s531 = smul.addr %s530, 4
          %s532 = scalar_lea.vmem %s4, %s531
        $region36: #{tpu_custom_call.1} parent=15 // pred_fallthru
          _
        // Predicated region
        $region37: #{tpu_custom_call.1} parent=15 // pred_check
          %p533 = pneg %p192
        $region38: #{tpu_custom_call.1} parent=15 // pred_check_branch
          %535 = sbr.rel (%p533) target = $region40
        $region39: #{tpu_custom_call.1} parent=15 // pred_region
          %p536 = scmp.lt.s32.totalorder %s38, 1
          %s537 = scalar_select %p536, %s38, 1
          %s538 = scalar_lea.vmem %s5, %s537
        $region40: #{tpu_custom_call.1} parent=15 // pred_fallthru
          _
        // Predicated region
        $region41: #{tpu_custom_call.1} parent=15 // pred_check
          %p539 = pneg %p218
        $region42: #{tpu_custom_call.1} parent=15 // pred_check_branch
          %541 = sbr.rel (%p539) target = $region44
        $region43: #{tpu_custom_call.1} parent=15 // pred_region
          %p542 = scmp.lt.s32.totalorder %s38, 1
          %s543 = scalar_select %p542, %s38, 1
          %s544 = smul.addr %s543, 4
          %s545 = smul.addr %s544, 4
          %s546 = scalar_lea.vmem %s6, %s545
        $region44: #{tpu_custom_call.1} parent=15 // pred_fallthru
          _
        // Predicated region
        $region45: #{tpu_custom_call.1} parent=15 // pred_check
          %p547 = pneg %p244
        $region46: #{tpu_custom_call.1} parent=15 // pred_check_branch
          %549 = sbr.rel (%p547) target = $region48
        $region47: #{tpu_custom_call.1} parent=15 // pred_region
          %p550 = scmp.lt.s32.totalorder %s38, 1
          %s551 = scalar_select %p550, %s38, 1
          %s552 = smul.addr %s551, 4
          %s553 = smul.addr %s552, 4
          %s554 = scalar_lea.vmem %s7, %s553
        $region48: #{tpu_custom_call.1} parent=15 // pred_fallthru
          _
        // Predicated region
        $region49: #{tpu_custom_call.1} parent=15 // pred_check
          %p555 = pneg %p270
        $region50: #{tpu_custom_call.1} parent=15 // pred_check_branch
          %557 = sbr.rel (%p555) target = $region52
        $region51: #{tpu_custom_call.1} parent=15 // pred_region
          %p558 = scmp.lt.s32.totalorder %s38, 1
          %s559 = scalar_select %p558, %s38, 1
          %s560 = smul.addr %s559, 4
          %s561 = smul.addr %s560, 4
          %s562 = scalar_lea.vmem %s8, %s561
        $region52: #{tpu_custom_call.1} parent=15 // pred_fallthru
          _
        // Predicated region
        $region53: #{tpu_custom_call.1} parent=15 // pred_check
          %p563 = pneg %p296
        $region54: #{tpu_custom_call.1} parent=15 // pred_check_branch
          %565 = sbr.rel (%p563) target = $region56
        $region55: #{tpu_custom_call.1} parent=15 // pred_region
          %p566 = scmp.lt.s32.totalorder %s38, 1
          %s567 = scalar_select %p566, %s38, 1
          %s568 = scalar_lea.vmem %s9, %s567
        $region56: #{tpu_custom_call.1} parent=15 // pred_fallthru
          _
        // Predicated region
        $region57: #{tpu_custom_call.1} parent=15 // pred_check
          %p569 = pneg %p322
        $region58: #{tpu_custom_call.1} parent=15 // pred_check_branch
          %571 = sbr.rel (%p569) target = $region60
        $region59: #{tpu_custom_call.1} parent=15 // pred_region
          %p572 = scmp.lt.s32.totalorder %s38, 1
          %s573 = scalar_select %p572, %s38, 1
          %s574 = smul.addr %s573, 4
          %s575 = smul.addr %s574, 4
          %s576 = scalar_lea.vmem %s10, %s575
        $region60: #{tpu_custom_call.1} parent=15 // pred_fallthru
          _
        // Predicated region
        $region61: #{tpu_custom_call.1} parent=15 // pred_check
          %p577 = pneg %p348
        $region62: #{tpu_custom_call.1} parent=15 // pred_check_branch
          %579 = sbr.rel (%p577) target = $region64
        $region63: #{tpu_custom_call.1} parent=15 // pred_region
          %p580 = scmp.lt.s32.totalorder %s38, 1
          %s581 = scalar_select %p580, %s38, 1
          %s582 = smul.addr %s581, 4
          %s583 = smul.addr %s582, 4
          %s584 = scalar_lea.vmem %s11, %s583
        $region64: #{tpu_custom_call.1} parent=15 // pred_fallthru
          _
        // Predicated region
        $region65: #{tpu_custom_call.1} parent=15 // pred_check
          %p585 = pneg %p374
        $region66: #{tpu_custom_call.1} parent=15 // pred_check_branch
          %587 = sbr.rel (%p585) target = $region68
        $region67: #{tpu_custom_call.1} parent=15 // pred_region
          %p588 = scmp.lt.s32.totalorder %s38, 1
          %s589 = scalar_select %p588, %s38, 1
          %s590 = scalar_lea.vmem %s12, %s589
        $region68: #{tpu_custom_call.1} parent=15 // pred_fallthru
          _
        // Predicated region
        $region69: #{tpu_custom_call.1} parent=15 // pred_check
          %p591 = pneg %p400
        $region70: #{tpu_custom_call.1} parent=15 // pred_check_branch
          %593 = sbr.rel (%p591) target = $region72
        $region71: #{tpu_custom_call.1} parent=15 // pred_region
          %p594 = scmp.lt.s32.totalorder %s38, 1
          %s595 = scalar_select %p594, %s38, 1
          %s596 = smul.addr %s595, 16
          %s597 = smul.addr %s596, 4
          %s598 = scalar_lea.vmem %s13, %s597
        $region72: #{tpu_custom_call.1} parent=15 // pred_fallthru
          _
        // Predicated region
        $region73: #{tpu_custom_call.1} parent=15 // pred_check
          %p599 = pneg %p426
        $region74: #{tpu_custom_call.1} parent=15 // pred_check_branch
          %601 = sbr.rel (%p599) target = $region76
        $region75: #{tpu_custom_call.1} parent=15 // pred_region
          %p602 = scmp.lt.s32.totalorder %s38, 1
          %s603 = scalar_select %p602, %s38, 1
          %s604 = smul.addr %s603, 2
          %s605 = smul.addr %s604, 8
          %s606 = scalar_lea.vmem %s14, %s605
        $region76: #{tpu_custom_call.1} parent=15 // pred_fallthru
          _
      $region16: #{tpu_custom_call.1} parent=5 // pred_fallthru
        _
      %p607 = scmp.le.s32.totalorder 1, %s30
      %p608 = scmp.lt.s32.totalorder %s30, 5
      %p609 = pnand %p607, %p608
      %p610 = pneg %p609
      // Predicated region
      $region77: #{tpu_custom_call.1} parent=5 // pred_check
        _
      $region78: #{tpu_custom_call.1} parent=5 // pred_check_branch
        %612 = sbr.rel (%p609) target = $region80
      $region79: #{tpu_custom_call.1} parent=5 // pred_region
        %s613 = ssub.s32 %s30, 1
        %s614 = sand.u32 %s55, 1
        %s615 = scalar_lea.sflag [#allocation3], %s614
        %s616 = sand.u32 %s55, 1
        %s617 = smul.addr %s616, 8
        %s618 = scalar_lea.vmem [#allocation2], %s617
        // Predicated region
        $region81: #{tpu_custom_call.1} parent=79 // pred_check
          %p619 = pneg %p68
        $region82: #{tpu_custom_call.1} parent=79 // pred_check_branch
          %621 = sbr.rel (%p619) target = $region84
        $region83: #{tpu_custom_call.1} parent=79 // pred_region
          %622 = dma.done %s615, 128
        $region84: #{tpu_custom_call.1} parent=79 // pred_fallthru
          _
        %s623 = sand.u32 %s81, 1
        %s624 = scalar_lea.sflag [#allocation6], %s623
        %s625 = sand.u32 %s81, 1
        %s626 = smul.addr %s625, 4
        %s627 = scalar_lea.vmem [#allocation5], %s626
        // Predicated region
        $region85: #{tpu_custom_call.1} parent=79 // pred_check
          %p628 = pneg %p94
        $region86: #{tpu_custom_call.1} parent=79 // pred_check_branch
          %630 = sbr.rel (%p628) target = $region88
        $region87: #{tpu_custom_call.1} parent=79 // pred_region
          %631 = dma.done %s624, 64
        $region88: #{tpu_custom_call.1} parent=79 // pred_fallthru
          _
        %s632 = sand.u32 %s55, 1
        %s633 = scalar_lea.sflag [#allocation3], %s632
        %s634 = sand.u32 %s55, 1
        %s635 = smul.addr %s634, 8
        %s636 = scalar_lea.vmem [#allocation2], %s635
        %p637 = pneg %p68
        %p638 = pneg %p65
        %s639 = sand.u32 %s81, 1
        %s640 = scalar_lea.sflag [#allocation6], %s639
        %s641 = sand.u32 %s81, 1
        %s642 = smul.addr %s641, 4
        %s643 = scalar_lea.vmem [#allocation5], %s642
        %p644 = pneg %p94
        %p645 = pneg %p91
        %p646 = scmp.lt.s32.totalorder %s39, 1
        %s647 = scalar_select %p646, %s39, 1
        %s648 = scalar_lea.vmem %s2, %s647
        %p649 = pneg %p120
        %p650 = pneg %p117
        %p651 = scmp.lt.s32.totalorder %s39, 1
        %s652 = scalar_select %p651, %s39, 1
        %s653 = scalar_lea.vmem %s3, %s652
        %p654 = pneg %p146
        %p655 = pneg %p143
        %p656 = scmp.lt.s32.totalorder %s40, 1
        %s657 = scalar_select %p656, %s40, 1
        %s658 = smul.addr %s657, 4
        %s659 = smul.addr %s658, 4
        %s660 = scalar_lea.vmem %s4, %s659
        %p661 = pneg %p172
        %p662 = pneg %p169
        %p663 = scmp.lt.s32.totalorder %s40, 1
        %s664 = scalar_select %p663, %s40, 1
        %s665 = scalar_lea.vmem %s5, %s664
        %p666 = pneg %p198
        %p667 = pneg %p195
        %p668 = scmp.lt.s32.totalorder %s40, 1
        %s669 = scalar_select %p668, %s40, 1
        %s670 = smul.addr %s669, 4
        %s671 = smul.addr %s670, 4
        %s672 = scalar_lea.vmem %s6, %s671
        %p673 = pneg %p224
        %p674 = pneg %p221
        %p675 = scmp.lt.s32.totalorder %s40, 1
        %s676 = scalar_select %p675, %s40, 1
        %s677 = smul.addr %s676, 4
        %s678 = smul.addr %s677, 4
        %s679 = scalar_lea.vmem %s7, %s678
        %p680 = pneg %p250
        %p681 = pneg %p247
        %p682 = scmp.lt.s32.totalorder %s40, 1
        %s683 = scalar_select %p682, %s40, 1
        %s684 = smul.addr %s683, 4
        %s685 = smul.addr %s684, 4
        %s686 = scalar_lea.vmem %s8, %s685
        %p687 = pneg %p276
        %p688 = pneg %p273
        %p689 = scmp.lt.s32.totalorder %s40, 1
        %s690 = scalar_select %p689, %s40, 1
        %s691 = scalar_lea.vmem %s9, %s690
        %p692 = pneg %p302
        %p693 = pneg %p299
        %p694 = scmp.lt.s32.totalorder %s40, 1
        %s695 = scalar_select %p694, %s40, 1
        %s696 = smul.addr %s695, 4
        %s697 = smul.addr %s696, 4
        %s698 = scalar_lea.vmem %s10, %s697
        %p699 = pneg %p328
        %p700 = pneg %p325
        %p701 = scmp.lt.s32.totalorder %s40, 1
        %s702 = scalar_select %p701, %s40, 1
        %s703 = smul.addr %s702, 4
        %s704 = smul.addr %s703, 4
        %s705 = scalar_lea.vmem %s11, %s704
        %p706 = pneg %p354
        %p707 = pneg %p351
        %p708 = scmp.lt.s32.totalorder %s40, 1
        %s709 = scalar_select %p708, %s40, 1
        %s710 = scalar_lea.vmem %s12, %s709
        %p711 = pneg %p380
        %p712 = pneg %p377
        %p713 = scmp.lt.s32.totalorder %s40, 1
        %s714 = scalar_select %p713, %s40, 1
        %s715 = smul.addr %s714, 16
        %s716 = smul.addr %s715, 4
        %s717 = scalar_lea.vmem %s13, %s716
        %p718 = pneg %p406
        %p719 = pneg %p403
        %p720 = scmp.lt.s32.totalorder %s40, 1
        %s721 = scalar_select %p720, %s40, 1
        %s722 = smul.addr %s721, 2
        %s723 = smul.addr %s722, 8
        %s724 = scalar_lea.vmem %s14, %s723
        %p725 = pneg %p432
        %p726 = pneg %p429
        %p727 = pneg %p458
        %p728 = pneg %p455
        %s729 = sand.u32 %s445, 1
        %s730 = scalar_lea.sflag [#allocation4], %s729
        %s731 = sand.u32 %s445, 1
        %s732 = smul.addr %s731, 8
        %s733 = scalar_lea.vmem [#allocation7], %s732
        %p734 = scmp.lt.s32.totalorder %s39, 1
        %s735 = scalar_select %p734, %s39, 1
        %s736 = scalar_lea.vmem %s2, %s735
        %p737 = scmp.lt.s32.totalorder %s39, 1
        %s738 = scalar_select %p737, %s39, 1
        %s739 = scalar_lea.vmem %s3, %s738
        %p740 = scmp.lt.s32.totalorder %s40, 1
        %s741 = scalar_select %p740, %s40, 1
        %s742 = smul.addr %s741, 4
        %s743 = smul.addr %s742, 4
        %s744 = scalar_lea.vmem %s4, %s743
        %p745 = scmp.lt.s32.totalorder %s40, 1
        %s746 = scalar_select %p745, %s40, 1
        %s747 = scalar_lea.vmem %s5, %s746
        %p748 = scmp.lt.s32.totalorder %s40, 1
        %s749 = scalar_select %p748, %s40, 1
        %s750 = smul.addr %s749, 4
        %s751 = smul.addr %s750, 4
        %s752 = scalar_lea.vmem %s6, %s751
        %p753 = scmp.lt.s32.totalorder %s40, 1
        %s754 = scalar_select %p753, %s40, 1
        %s755 = smul.addr %s754, 4
        %s756 = smul.addr %s755, 4
        %s757 = scalar_lea.vmem %s7, %s756
        %p758 = scmp.lt.s32.totalorder %s40, 1
        %s759 = scalar_select %p758, %s40, 1
        %s760 = smul.addr %s759, 4
        %s761 = smul.addr %s760, 4
        %s762 = scalar_lea.vmem %s8, %s761
        %p763 = scmp.lt.s32.totalorder %s40, 1
        %s764 = scalar_select %p763, %s40, 1
        %s765 = scalar_lea.vmem %s9, %s764
        %p766 = scmp.lt.s32.totalorder %s40, 1
        %s767 = scalar_select %p766, %s40, 1
        %s768 = smul.addr %s767, 4
        %s769 = smul.addr %s768, 4
        %s770 = scalar_lea.vmem %s10, %s769
        %p771 = scmp.lt.s32.totalorder %s40, 1
        %s772 = scalar_select %p771, %s40, 1
        %s773 = smul.addr %s772, 4
        %s774 = smul.addr %s773, 4
        %s775 = scalar_lea.vmem %s11, %s774
        %p776 = scmp.lt.s32.totalorder %s40, 1
        %s777 = scalar_select %p776, %s40, 1
        %s778 = scalar_lea.vmem %s12, %s777
        %p779 = scmp.lt.s32.totalorder %s40, 1
        %s780 = scalar_select %p779, %s40, 1
        %s781 = smul.addr %s780, 16
        %s782 = smul.addr %s781, 4
        %s783 = scalar_lea.vmem %s13, %s782
        %p784 = scmp.lt.s32.totalorder %s40, 1
        %s785 = scalar_select %p784, %s40, 1
        %s786 = smul.addr %s785, 2
        %s787 = smul.addr %s786, 8
        %s788 = scalar_lea.vmem %s14, %s787
        %p792 = scmp.eq.s32.totalorder %s40, 0
        // Predicated region
        $region89: #{tpu_custom_call.1} parent=79 // pred_check
          %p793 = pneg %p792
        $region90: #{tpu_custom_call.1} parent=79 // pred_check_branch
          %795 = sbr.rel (%p793) target = $region92
        $region91: #{tpu_custom_call.1} parent=79 // pred_region
          %v796 = vld [vmem:[%s618] sm:$0xff]
          %vm797 = vcmask 261120
          %798 = vst.msk [vmem:[%s733] sm:$0xff] %vm797, %v796
        $region92: #{tpu_custom_call.1} parent=79 // pred_fallthru
          _
        %v799 = vld [vmem:[%s733] sm:$0xff]
        %v800 = vld [vmem:[%s788] sm:$0xff]
        %v801 = vld [vmem:[%s788 + $0x8] sm:$0x3]
        %v802 = vld [vmem:[%s627] sm:$0xf]
        %v803 = vlaneseq
        %v804 = vshrl.u32 %v803, 7
        %v805 = vlaneseq
        %v806 = vand.u32 %v805, 127
        %vm807 = vcmp.le.s32.totalorder %v806, %v804
        %v808 = vld [vmem:[%s736] sm:$0x1]
        %vm809 = vcmp.gt.bf16.partialorder %v808, 0
        %v810 = vsel %vm809, 65537, 0
        %v811 = vunpack.c.l.b16 %v810
        %vm812 = vcmp.ne.s32.totalorder %v811, 0
        %v813 = vsel %vm812, 1, 0
        %v814 = vlaneseq
        %v815 = vshrl.u32 %v814, 7
        %v816 = vsub.s32 0, %v815
        %v817 = vrot.slane %v813, %v816
        %vm818 = vcmp.eq.s32.totalorder %v817, 1
        %vm819 = vmand %vm807, %vm818
        %v820 = vld [vmem:[%s739] sm:$0x1]
        %vm821 = vcmp.gt.bf16.partialorder %v820, 0
        %v822 = vpack.c.bf16 %v799, %v799
        %v823 = vld [vmem:[%s744] sm:$0xf]
        %v824 = vld [vmem:[%s744 + $0x4] sm:$0xf]
        %v825 = vld [vmem:[%s744 + $0x8] sm:$0xf]
        %v826 = vld [vmem:[%s744 + $0xc] sm:$0xf]
        %v827 = vld [vmem:[%s747] sm:$0x1]
        %v829 = vlaneseq
        %v830 = vshrl.u32 %v829, 7
        %v831 = vsub.s32 0, %v830
        %v832 = vrot.slane %v827, %v831
        %v838 = vunpack.c.l.b16 %v823
        %v839 = vunpack.c.l.b16 %v824
        %v840 = vunpack.c.l.b16 %v825
        %v841 = vunpack.c.l.b16 %v826
        %v842 = vpack.c.b16 %v839, %v838
        %v843 = vpack.c.b16 %v841, %v840
        %vm846 = vcmask 261120
        %v848 = vsel %vm846, %v822, 0
        %850 = vmatprep.subr.bf16.mxu0 0
        %851 = vmatpush1.bf16.msra.mxu0 %v842
        %852 = vmatprep.subr.bf16.mxu0 0
        %853 = vmatpush1.bf16.msra.mxu0 %v843
        %854 = vmatprep.subr.bf16.mxu0 0
        %855 = vmatpush1.bf16.msra.mxu0 0
        %856 = vmatprep.subr.bf16.mxu0 0
        %857 = vmatpush1.bf16.msra.mxu0 0
        %858 = vmatprep.subr.bf16.mxu0 0
        %859 = vmatpush1.bf16.msra.mxu0 0
        %860 = vmatprep.subr.bf16.mxu0 0
        %861 = vmatpush1.bf16.msra.mxu0 0
        %862 = vmatprep.subr.bf16.mxu0 0
        %863 = vmatpush1.bf16.msra.mxu0 0
        %864 = vmatprep.subr.bf16.mxu0 0
        %865 = vmatpush1.bf16.msra.mxu0 0
        %866 = vmatprep.subr.bf16.mxu0 0
        %867 = vmatpush1.bf16.msra.mxu0 0
        %868 = vmatprep.subr.bf16.mxu0 0
        %869 = vmatpush1.bf16.msra.mxu0 0
        %870 = vmatprep.subr.bf16.mxu0 0
        %871 = vmatpush1.bf16.msra.mxu0 0
        %872 = vmatprep.subr.bf16.mxu0 0
        %873 = vmatpush1.bf16.msra.mxu0 0
        %874 = vmatprep.subr.bf16.mxu0 0
        %875 = vmatpush1.bf16.msra.mxu0 0
        %876 = vmatprep.subr.bf16.mxu0 0
        %877 = vmatpush1.bf16.msra.mxu0 0
        %878 = vmatprep.subr.bf16.mxu0 0
        %879 = vmatpush1.bf16.msra.mxu0 0
        %880 = vmatprep.subr.bf16.mxu0 0
        %881 = vmatpush1.bf16.msra.mxu0 0
        %882 = vmatprep.mubr.bf16.mxu0 0
        %883 = vmatmul.mubr.bf16.gmra.mrb[0].mxu0 %v848
        %v884 = vpop.f32.mrb[0].mxu0
        %v885 = vadd.f32 %v832, %v884
        %v886 = vpop.f32.mrb[0].mxu0
        %v887 = vpop.f32.mrb[0].mxu0
        %v888 = vpop.f32.mrb[0].mxu0
        %889 = vdwg.mxu0
        %v890 = vpack.c.bf16 %v885, %v885
        %892 = vrot.lane.b32.xlu0 %v890, 96
        %v893 = vpop.permute.xlu0 %892
        %vm894 = vcmask 64512
        %v896 = vsel %vm894, %v890, 0
        %v899 = vsel %vm894, %v893, 0
        %901 = vmatprep.subr.bf16.mxu0 0
        %902 = vmatpush1.bf16.xpose.msra.mxu0 %v899
        %903 = vmatprep.subr.bf16.mxu0 0
        %904 = vmatpush1.bf16.xpose.msra.mxu0 0
        %905 = vmatprep.subr.bf16.mxu0 0
        %906 = vmatpush1.bf16.xpose.msra.mxu0 0
        %907 = vmatprep.subr.bf16.mxu0 0
        %908 = vmatpush1.bf16.xpose.msra.mxu0 0
        %909 = vmatprep.subr.bf16.mxu0 0
        %910 = vmatpush1.bf16.xpose.msra.mxu0 0
        %911 = vmatprep.subr.bf16.mxu0 0
        %912 = vmatpush1.bf16.xpose.msra.mxu0 0
        %913 = vmatprep.subr.bf16.mxu0 0
        %914 = vmatpush1.bf16.xpose.msra.mxu0 0
        %915 = vmatprep.subr.bf16.mxu0 0
        %916 = vmatpush1.bf16.xpose.msra.mxu0 0
        %917 = vmatprep.subr.bf16.mxu0 0
        %918 = vmatpush1.bf16.xpose.msra.mxu0 0
        %919 = vmatprep.subr.bf16.mxu0 0
        %920 = vmatpush1.bf16.xpose.msra.mxu0 0
        %921 = vmatprep.subr.bf16.mxu0 0
        %922 = vmatpush1.bf16.xpose.msra.mxu0 0
        %923 = vmatprep.subr.bf16.mxu0 0
        %924 = vmatpush1.bf16.xpose.msra.mxu0 0
        %925 = vmatprep.subr.bf16.mxu0 0
        %926 = vmatpush1.bf16.xpose.msra.mxu0 0
        %927 = vmatprep.subr.bf16.mxu0 0
        %928 = vmatpush1.bf16.xpose.msra.mxu0 0
        %929 = vmatprep.subr.bf16.mxu0 0
        %930 = vmatpush1.bf16.xpose.msra.mxu0 0
        %931 = vmatprep.subr.bf16.mxu0 0
        %932 = vmatpush1.bf16.xpose.msra.mxu0 0
        %933 = vmatprep.mubr.bf16.mxu0 0
        %934 = vmatmul.mubr.bf16.gmra.mrb[0].mxu0 %v896
        %v935 = vpop.f32.mrb[0].mxu0
        %v936 = vadd.f32 0.0, %v935
        %v937 = vpop.f32.mrb[0].mxu0
        %v938 = vpop.f32.mrb[0].mxu0
        %v939 = vpop.f32.mrb[0].mxu0
        %940 = vdwg.mxu0
        %v941 = vsel %vm819, %v936, -1e+09
        %v942 = vsel %vm894, %v941, -inf
        %943 = vmax.xlane.f32.xlu0 %v942
        %v944 = vpop.xlane.xlu0 %943
        %v945 = vsub.f32 %v941, %v944
        %v946 = vmul.f32 %v945, 1.442695
        %v947 = vpow.pop %v946
        %v948 = vsel %vm894, %v947, 0.0
        %949 = vadd.xlane.f32.xlu0 %v948
        %v950 = vpop.xlane.xlu0 %949
        %v951 = vrcp.pop %v950
        %v952 = vmul.f32 %v947, %v951
        %v953 = vpack.c.bf16 %v952, %v952
        %954 = vrot.lane.b32.xlu0 %v890, 64
        %v955 = vpop.permute.xlu0 %954
        %v957 = vsel %vm894, %v953, 0
        %vm959 = vcmask 1043456
        %v961 = vsel %vm959, %v955, 0
        %963 = vmatprep.subr.bf16.mxu0 0
        %964 = vmatpush1.bf16.msra.mxu0 %v961
        %965 = vmatprep.subr.bf16.mxu0 0
        %966 = vmatpush1.bf16.msra.mxu0 0
        %967 = vmatprep.subr.bf16.mxu0 0
        %968 = vmatpush1.bf16.msra.mxu0 0
        %969 = vmatprep.subr.bf16.mxu0 0
        %970 = vmatpush1.bf16.msra.mxu0 0
        %971 = vmatprep.subr.bf16.mxu0 0
        %972 = vmatpush1.bf16.msra.mxu0 0
        %973 = vmatprep.subr.bf16.mxu0 0
        %974 = vmatpush1.bf16.msra.mxu0 0
        %975 = vmatprep.subr.bf16.mxu0 0
        %976 = vmatpush1.bf16.msra.mxu0 0
        %977 = vmatprep.subr.bf16.mxu0 0
        %978 = vmatpush1.bf16.msra.mxu0 0
        %979 = vmatprep.subr.bf16.mxu0 0
        %980 = vmatpush1.bf16.msra.mxu0 0
        %981 = vmatprep.subr.bf16.mxu0 0
        %982 = vmatpush1.bf16.msra.mxu0 0
        %983 = vmatprep.subr.bf16.mxu0 0
        %984 = vmatpush1.bf16.msra.mxu0 0
        %985 = vmatprep.subr.bf16.mxu0 0
        %986 = vmatpush1.bf16.msra.mxu0 0
        %987 = vmatprep.subr.bf16.mxu0 0
        %988 = vmatpush1.bf16.msra.mxu0 0
        %989 = vmatprep.subr.bf16.mxu0 0
        %990 = vmatpush1.bf16.msra.mxu0 0
        %991 = vmatprep.subr.bf16.mxu0 0
        %992 = vmatpush1.bf16.msra.mxu0 0
        %993 = vmatprep.subr.bf16.mxu0 0
        %994 = vmatpush1.bf16.msra.mxu0 0
        %995 = vmatprep.mubr.bf16.mxu0 0
        %996 = vmatmul.mubr.bf16.gmra.mrb[0].mxu0 %v957
        %v997 = vpop.f32.mrb[0].mxu0
        %v998 = vadd.f32 0.0, %v997
        %v999 = vpop.f32.mrb[0].mxu0
        %v1000 = vpop.f32.mrb[0].mxu0
        %v1001 = vpop.f32.mrb[0].mxu0
        %1002 = vdwg.mxu0
        %v1003 = vpack.c.bf16 %v998, %v998
        %1004 = vrot.lane.b32.xlu0 %v890, 120
        %v1005 = vpop.permute.xlu0 %1004
        %1006 = vrot.lane.b32.xlu0 %v890, 88
        %v1007 = vpop.permute.xlu0 %1006
        %v1009 = vsel %vm894, %v1005, 0
        %v1012 = vsel %vm894, %v1007, 0
        %1014 = vmatprep.subr.bf16.mxu0 0
        %1015 = vmatpush1.bf16.xpose.msra.mxu0 %v1012
        %1016 = vmatprep.subr.bf16.mxu0 0
        %1017 = vmatpush1.bf16.xpose.msra.mxu0 0
        %1018 = vmatprep.subr.bf16.mxu0 0
        %1019 = vmatpush1.bf16.xpose.msra.mxu0 0
        %1020 = vmatprep.subr.bf16.mxu0 0
        %1021 = vmatpush1.bf16.xpose.msra.mxu0 0
        %1022 = vmatprep.subr.bf16.mxu0 0
        %1023 = vmatpush1.bf16.xpose.msra.mxu0 0
        %1024 = vmatprep.subr.bf16.mxu0 0
        %1025 = vmatpush1.bf16.xpose.msra.mxu0 0
        %1026 = vmatprep.subr.bf16.mxu0 0
        %1027 = vmatpush1.bf16.xpose.msra.mxu0 0
        %1028 = vmatprep.subr.bf16.mxu0 0
        %1029 = vmatpush1.bf16.xpose.msra.mxu0 0
        %1030 = vmatprep.subr.bf16.mxu0 0
        %1031 = vmatpush1.bf16.xpose.msra.mxu0 0
        %1032 = vmatprep.subr.bf16.mxu0 0
        %1033 = vmatpush1.bf16.xpose.msra.mxu0 0
        %1034 = vmatprep.subr.bf16.mxu0 0
        %1035 = vmatpush1.bf16.xpose.msra.mxu0 0
        %1036 = vmatprep.subr.bf16.mxu0 0
        %1037 = vmatpush1.bf16.xpose.msra.mxu0 0
        %1038 = vmatprep.subr.bf16.mxu0 0
        %1039 = vmatpush1.bf16.xpose.msra.mxu0 0
        %1040 = vmatprep.subr.bf16.mxu0 0
        %1041 = vmatpush1.bf16.xpose.msra.mxu0 0
        %1042 = vmatprep.subr.bf16.mxu0 0
        %1043 = vmatpush1.bf16.xpose.msra.mxu0 0
        %1044 = vmatprep.subr.bf16.mxu0 0
        %1045 = vmatpush1.bf16.xpose.msra.mxu0 0
        %1046 = vmatprep.mubr.bf16.mxu0 0
        %1047 = vmatmul.mubr.bf16.gmra.mrb[0].mxu0 %v1009
        %v1048 = vpop.f32.mrb[0].mxu0
        %v1049 = vadd.f32 0.0, %v1048
        %v1050 = vpop.f32.mrb[0].mxu0
        %v1051 = vpop.f32.mrb[0].mxu0
        %v1052 = vpop.f32.mrb[0].mxu0
        %1053 = vdwg.mxu0
        %v1054 = vsel %vm819, %v1049, -1e+09
        %v1055 = vsel %vm894, %v1054, -inf
        %1056 = vmax.xlane.f32.xlu0 %v1055
        %v1057 = vpop.xlane.xlu0 %1056
        %v1058 = vsub.f32 %v1054, %v1057
        %v1059 = vmul.f32 %v1058, 1.442695
        %v1060 = vpow.pop %v1059
        %v1061 = vsel %vm894, %v1060, 0.0
        %1062 = vadd.xlane.f32.xlu0 %v1061
        %v1063 = vpop.xlane.xlu0 %1062
        %v1064 = vrcp.pop %v1063
        %v1065 = vmul.f32 %v1060, %v1064
        %v1066 = vpack.c.bf16 %v1065, %v1065
        %1067 = vrot.lane.b32.xlu0 %v890, 56
        %v1068 = vpop.permute.xlu0 %1067
        %v1070 = vsel %vm894, %v1066, 0
        %v1073 = vsel %vm959, %v1068, 0
        %1075 = vmatprep.subr.bf16.mxu0 0
        %1076 = vmatpush1.bf16.msra.mxu0 %v1073
        %1077 = vmatprep.subr.bf16.mxu0 0
        %1078 = vmatpush1.bf16.msra.mxu0 0
        %1079 = vmatprep.subr.bf16.mxu0 0
        %1080 = vmatpush1.bf16.msra.mxu0 0
        %1081 = vmatprep.subr.bf16.mxu0 0
        %1082 = vmatpush1.bf16.msra.mxu0 0
        %1083 = vmatprep.subr.bf16.mxu0 0
        %1084 = vmatpush1.bf16.msra.mxu0 0
        %1085 = vmatprep.subr.bf16.mxu0 0
        %1086 = vmatpush1.bf16.msra.mxu0 0
        %1087 = vmatprep.subr.bf16.mxu0 0
        %1088 = vmatpush1.bf16.msra.mxu0 0
        %1089 = vmatprep.subr.bf16.mxu0 0
        %1090 = vmatpush1.bf16.msra.mxu0 0
        %1091 = vmatprep.subr.bf16.mxu0 0
        %1092 = vmatpush1.bf16.msra.mxu0 0
        %1093 = vmatprep.subr.bf16.mxu0 0
        %1094 = vmatpush1.bf16.msra.mxu0 0
        %1095 = vmatprep.subr.bf16.mxu0 0
        %1096 = vmatpush1.bf16.msra.mxu0 0
        %1097 = vmatprep.subr.bf16.mxu0 0
        %1098 = vmatpush1.bf16.msra.mxu0 0
        %1099 = vmatprep.subr.bf16.mxu0 0
        %1100 = vmatpush1.bf16.msra.mxu0 0
        %1101 = vmatprep.subr.bf16.mxu0 0
        %1102 = vmatpush1.bf16.msra.mxu0 0
        %1103 = vmatprep.subr.bf16.mxu0 0
        %1104 = vmatpush1.bf16.msra.mxu0 0
        %1105 = vmatprep.subr.bf16.mxu0 0
        %1106 = vmatpush1.bf16.msra.mxu0 0
        %1107 = vmatprep.mubr.bf16.mxu0 0
        %1108 = vmatmul.mubr.bf16.gmra.mrb[0].mxu0 %v1070
        %v1109 = vpop.f32.mrb[0].mxu0
        %v1110 = vadd.f32 0.0, %v1109
        %v1111 = vpop.f32.mrb[0].mxu0
        %v1112 = vpop.f32.mrb[0].mxu0
        %v1113 = vpop.f32.mrb[0].mxu0
        %1114 = vdwg.mxu0
        %v1115 = vpack.c.bf16 %v1110, %v1110
        %1116 = vrot.lane.b32.xlu0 %v890, 112
        %v1117 = vpop.permute.xlu0 %1116
        %1118 = vrot.lane.b32.xlu0 %v890, 80
        %v1119 = vpop.permute.xlu0 %1118
        %v1121 = vsel %vm894, %v1117, 0
        %v1124 = vsel %vm894, %v1119, 0
        %1126 = vmatprep.subr.bf16.mxu0 0
        %1127 = vmatpush1.bf16.xpose.msra.mxu0 %v1124
        %1128 = vmatprep.subr.bf16.mxu0 0
        %1129 = vmatpush1.bf16.xpose.msra.mxu0 0
        %1130 = vmatprep.subr.bf16.mxu0 0
        %1131 = vmatpush1.bf16.xpose.msra.mxu0 0
        %1132 = vmatprep.subr.bf16.mxu0 0
        %1133 = vmatpush1.bf16.xpose.msra.mxu0 0
        %1134 = vmatprep.subr.bf16.mxu0 0
        %1135 = vmatpush1.bf16.xpose.msra.mxu0 0
        %1136 = vmatprep.subr.bf16.mxu0 0
        %1137 = vmatpush1.bf16.xpose.msra.mxu0 0
        %1138 = vmatprep.subr.bf16.mxu0 0
        %1139 = vmatpush1.bf16.xpose.msra.mxu0 0
        %1140 = vmatprep.subr.bf16.mxu0 0
        %1141 = vmatpush1.bf16.xpose.msra.mxu0 0
        %1142 = vmatprep.subr.bf16.mxu0 0
        %1143 = vmatpush1.bf16.xpose.msra.mxu0 0
        %1144 = vmatprep.subr.bf16.mxu0 0
        %1145 = vmatpush1.bf16.xpose.msra.mxu0 0
        %1146 = vmatprep.subr.bf16.mxu0 0
        %1147 = vmatpush1.bf16.xpose.msra.mxu0 0
        %1148 = vmatprep.subr.bf16.mxu0 0
        %1149 = vmatpush1.bf16.xpose.msra.mxu0 0
        %1150 = vmatprep.subr.bf16.mxu0 0
        %1151 = vmatpush1.bf16.xpose.msra.mxu0 0
        %1152 = vmatprep.subr.bf16.mxu0 0
        %1153 = vmatpush1.bf16.xpose.msra.mxu0 0
        %1154 = vmatprep.subr.bf16.mxu0 0
        %1155 = vmatpush1.bf16.xpose.msra.mxu0 0
        %1156 = vmatprep.subr.bf16.mxu0 0
        %1157 = vmatpush1.bf16.xpose.msra.mxu0 0
        %1158 = vmatprep.mubr.bf16.mxu0 0
        %1159 = vmatmul.mubr.bf16.gmra.mrb[0].mxu0 %v1121
        %v1160 = vpop.f32.mrb[0].mxu0
        %v1161 = vadd.f32 0.0, %v1160
        %v1162 = vpop.f32.mrb[0].mxu0
        %v1163 = vpop.f32.mrb[0].mxu0
        %v1164 = vpop.f32.mrb[0].mxu0
        %1165 = vdwg.mxu0
        %v1166 = vsel %vm819, %v1161, -1e+09
        %v1167 = vsel %vm894, %v1166, -inf
        %1168 = vmax.xlane.f32.xlu0 %v1167
        %v1169 = vpop.xlane.xlu0 %1168
        %v1170 = vsub.f32 %v1166, %v1169
        %v1171 = vmul.f32 %v1170, 1.442695
        %v1172 = vpow.pop %v1171
        %v1173 = vsel %vm894, %v1172, 0.0
        %1174 = vadd.xlane.f32.xlu0 %v1173
        %v1175 = vpop.xlane.xlu0 %1174
        %v1176 = vrcp.pop %v1175
        %v1177 = vmul.f32 %v1172, %v1176
        %v1178 = vpack.c.bf16 %v1177, %v1177
        %1179 = vrot.lane.b32.xlu0 %v890, 48
        %v1180 = vpop.permute.xlu0 %1179
        %v1182 = vsel %vm894, %v1178, 0
        %v1185 = vsel %vm959, %v1180, 0
        %1187 = vmatprep.subr.bf16.mxu0 0
        %1188 = vmatpush1.bf16.msra.mxu0 %v1185
        %1189 = vmatprep.subr.bf16.mxu0 0
        %1190 = vmatpush1.bf16.msra.mxu0 0
        %1191 = vmatprep.subr.bf16.mxu0 0
        %1192 = vmatpush1.bf16.msra.mxu0 0
        %1193 = vmatprep.subr.bf16.mxu0 0
        %1194 = vmatpush1.bf16.msra.mxu0 0
        %1195 = vmatprep.subr.bf16.mxu0 0
        %1196 = vmatpush1.bf16.msra.mxu0 0
        %1197 = vmatprep.subr.bf16.mxu0 0
        %1198 = vmatpush1.bf16.msra.mxu0 0
        %1199 = vmatprep.subr.bf16.mxu0 0
        %1200 = vmatpush1.bf16.msra.mxu0 0
        %1201 = vmatprep.subr.bf16.mxu0 0
        %1202 = vmatpush1.bf16.msra.mxu0 0
        %1203 = vmatprep.subr.bf16.mxu0 0
        %1204 = vmatpush1.bf16.msra.mxu0 0
        %1205 = vmatprep.subr.bf16.mxu0 0
        %1206 = vmatpush1.bf16.msra.mxu0 0
        %1207 = vmatprep.subr.bf16.mxu0 0
        %1208 = vmatpush1.bf16.msra.mxu0 0
        %1209 = vmatprep.subr.bf16.mxu0 0
        %1210 = vmatpush1.bf16.msra.mxu0 0
        %1211 = vmatprep.subr.bf16.mxu0 0
        %1212 = vmatpush1.bf16.msra.mxu0 0
        %1213 = vmatprep.subr.bf16.mxu0 0
        %1214 = vmatpush1.bf16.msra.mxu0 0
        %1215 = vmatprep.subr.bf16.mxu0 0
        %1216 = vmatpush1.bf16.msra.mxu0 0
        %1217 = vmatprep.subr.bf16.mxu0 0
        %1218 = vmatpush1.bf16.msra.mxu0 0
        %1219 = vmatprep.mubr.bf16.mxu0 0
        %1220 = vmatmul.mubr.bf16.gmra.mrb[0].mxu0 %v1182
        %v1221 = vpop.f32.mrb[0].mxu0
        %v1222 = vadd.f32 0.0, %v1221
        %v1223 = vpop.f32.mrb[0].mxu0
        %v1224 = vpop.f32.mrb[0].mxu0
        %v1225 = vpop.f32.mrb[0].mxu0
        %1226 = vdwg.mxu0
        %v1227 = vpack.c.bf16 %v1222, %v1222
        %1228 = vrot.lane.b32.xlu0 %v890, 104
        %v1229 = vpop.permute.xlu0 %1228
        %1230 = vrot.lane.b32.xlu0 %v890, 72
        %v1231 = vpop.permute.xlu0 %1230
        %v1233 = vsel %vm894, %v1229, 0
        %v1236 = vsel %vm894, %v1231, 0
        %1238 = vmatprep.subr.bf16.mxu0 0
        %1239 = vmatpush1.bf16.xpose.msra.mxu0 %v1236
        %1240 = vmatprep.subr.bf16.mxu0 0
        %1241 = vmatpush1.bf16.xpose.msra.mxu0 0
        %1242 = vmatprep.subr.bf16.mxu0 0
        %1243 = vmatpush1.bf16.xpose.msra.mxu0 0
        %1244 = vmatprep.subr.bf16.mxu0 0
        %1245 = vmatpush1.bf16.xpose.msra.mxu0 0
        %1246 = vmatprep.subr.bf16.mxu0 0
        %1247 = vmatpush1.bf16.xpose.msra.mxu0 0
        %1248 = vmatprep.subr.bf16.mxu0 0
        %1249 = vmatpush1.bf16.xpose.msra.mxu0 0
        %1250 = vmatprep.subr.bf16.mxu0 0
        %1251 = vmatpush1.bf16.xpose.msra.mxu0 0
        %1252 = vmatprep.subr.bf16.mxu0 0
        %1253 = vmatpush1.bf16.xpose.msra.mxu0 0
        %1254 = vmatprep.subr.bf16.mxu0 0
        %1255 = vmatpush1.bf16.xpose.msra.mxu0 0
        %1256 = vmatprep.subr.bf16.mxu0 0
        %1257 = vmatpush1.bf16.xpose.msra.mxu0 0
        %1258 = vmatprep.subr.bf16.mxu0 0
        %1259 = vmatpush1.bf16.xpose.msra.mxu0 0
        %1260 = vmatprep.subr.bf16.mxu0 0
        %1261 = vmatpush1.bf16.xpose.msra.mxu0 0
        %1262 = vmatprep.subr.bf16.mxu0 0
        %1263 = vmatpush1.bf16.xpose.msra.mxu0 0
        %1264 = vmatprep.subr.bf16.mxu0 0
        %1265 = vmatpush1.bf16.xpose.msra.mxu0 0
        %1266 = vmatprep.subr.bf16.mxu0 0
        %1267 = vmatpush1.bf16.xpose.msra.mxu0 0
        %1268 = vmatprep.subr.bf16.mxu0 0
        %1269 = vmatpush1.bf16.xpose.msra.mxu0 0
        %1270 = vmatprep.mubr.bf16.mxu0 0
        %1271 = vmatmul.mubr.bf16.gmra.mrb[0].mxu0 %v1233
        %v1272 = vpop.f32.mrb[0].mxu0
        %v1273 = vadd.f32 0.0, %v1272
        %v1274 = vpop.f32.mrb[0].mxu0
        %v1275 = vpop.f32.mrb[0].mxu0
        %v1276 = vpop.f32.mrb[0].mxu0
        %1277 = vdwg.mxu0
        %v1278 = vsel %vm819, %v1273, -1e+09
        %v1279 = vsel %vm894, %v1278, -inf
        %1280 = vmax.xlane.f32.xlu0 %v1279
        %v1281 = vpop.xlane.xlu0 %1280
        %v1282 = vsub.f32 %v1278, %v1281
        %v1283 = vmul.f32 %v1282, 1.442695
        %v1284 = vpow.pop %v1283
        %v1285 = vsel %vm894, %v1284, 0.0
        %1286 = vadd.xlane.f32.xlu0 %v1285
        %v1287 = vpop.xlane.xlu0 %1286
        %v1288 = vrcp.pop %v1287
        %v1289 = vmul.f32 %v1284, %v1288
        %v1290 = vpack.c.bf16 %v1289, %v1289
        %1291 = vrot.lane.b32.xlu0 %v890, 40
        %v1292 = vpop.permute.xlu0 %1291
        %v1294 = vsel %vm894, %v1290, 0
        %v1297 = vsel %vm959, %v1292, 0
        %1299 = vmatprep.subr.bf16.mxu0 0
        %1300 = vmatpush1.bf16.msra.mxu0 %v1297
        %1301 = vmatprep.subr.bf16.mxu0 0
        %1302 = vmatpush1.bf16.msra.mxu0 0
        %1303 = vmatprep.subr.bf16.mxu0 0
        %1304 = vmatpush1.bf16.msra.mxu0 0
        %1305 = vmatprep.subr.bf16.mxu0 0
        %1306 = vmatpush1.bf16.msra.mxu0 0
        %1307 = vmatprep.subr.bf16.mxu0 0
        %1308 = vmatpush1.bf16.msra.mxu0 0
        %1309 = vmatprep.subr.bf16.mxu0 0
        %1310 = vmatpush1.bf16.msra.mxu0 0
        %1311 = vmatprep.subr.bf16.mxu0 0
        %1312 = vmatpush1.bf16.msra.mxu0 0
        %1313 = vmatprep.subr.bf16.mxu0 0
        %1314 = vmatpush1.bf16.msra.mxu0 0
        %1315 = vmatprep.subr.bf16.mxu0 0
        %1316 = vmatpush1.bf16.msra.mxu0 0
        %1317 = vmatprep.subr.bf16.mxu0 0
        %1318 = vmatpush1.bf16.msra.mxu0 0
        %1319 = vmatprep.subr.bf16.mxu0 0
        %1320 = vmatpush1.bf16.msra.mxu0 0
        %1321 = vmatprep.subr.bf16.mxu0 0
        %1322 = vmatpush1.bf16.msra.mxu0 0
        %1323 = vmatprep.subr.bf16.mxu0 0
        %1324 = vmatpush1.bf16.msra.mxu0 0
        %1325 = vmatprep.subr.bf16.mxu0 0
        %1326 = vmatpush1.bf16.msra.mxu0 0
        %1327 = vmatprep.subr.bf16.mxu0 0
        %1328 = vmatpush1.bf16.msra.mxu0 0
        %1329 = vmatprep.subr.bf16.mxu0 0
        %1330 = vmatpush1.bf16.msra.mxu0 0
        %1331 = vmatprep.mubr.bf16.mxu0 0
        %1332 = vmatmul.mubr.bf16.gmra.mrb[0].mxu0 %v1294
        %v1333 = vpop.f32.mrb[0].mxu0
        %v1334 = vadd.f32 0.0, %v1333
        %v1335 = vpop.f32.mrb[0].mxu0
        %v1336 = vpop.f32.mrb[0].mxu0
        %v1337 = vpop.f32.mrb[0].mxu0
        %1338 = vdwg.mxu0
        %v1339 = vpack.c.bf16 %v1334, %v1334
        %1341 = vrot.lane.b32.xlu0 %v1115, 8
        %v1342 = vpop.permute.xlu0 %1341
        %1344 = vrot.lane.b32.xlu0 %v1227, 16
        %v1345 = vpop.permute.xlu0 %1344
        %1347 = vrot.lane.b32.xlu0 %v1339, 24
        %v1348 = vpop.permute.xlu0 %1347
        %v1351 = vsel %vm894, %v1003, %v1342
        %vm1352 = vcmask 130048
        %v1354 = vsel %vm1352, %v1351, %v1345
        %vm1355 = vcmask 195584
        %v1357 = vsel %vm1355, %v1354, %v1348
        %v1358 = vld [vmem:[%s752] sm:$0xf]
        %v1359 = vld [vmem:[%s752 + $0x4] sm:$0xf]
        %v1360 = vld [vmem:[%s752 + $0x8] sm:$0xf]
        %v1361 = vld [vmem:[%s752 + $0xc] sm:$0xf]
        %v1366 = vunpack.c.l.b16 %v1358
        %v1367 = vunpack.c.l.b16 %v1359
        %v1368 = vunpack.c.l.b16 %v1360
        %v1369 = vunpack.c.l.b16 %v1361
        %v1370 = vpack.c.b16 %v1367, %v1366
        %v1371 = vpack.c.b16 %v1369, %v1368
        %v1374 = vsel %vm846, %v1357, 0
        %1376 = vmatprep.subr.bf16.mxu0 0
        %1377 = vmatpush1.bf16.msra.mxu0 %v1370
        %1378 = vmatprep.subr.bf16.mxu0 0
        %1379 = vmatpush1.bf16.msra.mxu0 %v1371
        %1380 = vmatprep.subr.bf16.mxu0 0
        %1381 = vmatpush1.bf16.msra.mxu0 0
        %1382 = vmatprep.subr.bf16.mxu0 0
        %1383 = vmatpush1.bf16.msra.mxu0 0
        %1384 = vmatprep.subr.bf16.mxu0 0
        %1385 = vmatpush1.bf16.msra.mxu0 0
        %1386 = vmatprep.subr.bf16.mxu0 0
        %1387 = vmatpush1.bf16.msra.mxu0 0
        %1388 = vmatprep.subr.bf16.mxu0 0
        %1389 = vmatpush1.bf16.msra.mxu0 0
        %1390 = vmatprep.subr.bf16.mxu0 0
        %1391 = vmatpush1.bf16.msra.mxu0 0
        %1392 = vmatprep.subr.bf16.mxu0 0
        %1393 = vmatpush1.bf16.msra.mxu0 0
        %1394 = vmatprep.subr.bf16.mxu0 0
        %1395 = vmatpush1.bf16.msra.mxu0 0
        %1396 = vmatprep.subr.bf16.mxu0 0
        %1397 = vmatpush1.bf16.msra.mxu0 0
        %1398 = vmatprep.subr.bf16.mxu0 0
        %1399 = vmatpush1.bf16.msra.mxu0 0
        %1400 = vmatprep.subr.bf16.mxu0 0
        %1401 = vmatpush1.bf16.msra.mxu0 0
        %1402 = vmatprep.subr.bf16.mxu0 0
        %1403 = vmatpush1.bf16.msra.mxu0 0
        %1404 = vmatprep.subr.bf16.mxu0 0
        %1405 = vmatpush1.bf16.msra.mxu0 0
        %1406 = vmatprep.subr.bf16.mxu0 0
        %1407 = vmatpush1.bf16.msra.mxu0 0
        %1408 = vmatprep.mubr.bf16.mxu0 0
        %1409 = vmatmul.mubr.bf16.gmra.mrb[0].mxu0 %v1374
        %v1410 = vpop.f32.mrb[0].mxu0
        %v1411 = vadd.f32 0.0, %v1410
        %v1412 = vpop.f32.mrb[0].mxu0
        %v1413 = vpop.f32.mrb[0].mxu0
        %v1414 = vpop.f32.mrb[0].mxu0
        %1415 = vdwg.mxu0
        %v1416 = vadd.f32 %v799, %v1411
        %v1417 = vlaneseq
        %v1418 = vshrl.u32 %v1417, 7
        %v1419 = vsub.s32 0, %v1418
        %v1420 = vrot.slane %v800, %v1419
        %v1421 = vadd.f32 %v1416, %v1420
        %v1422 = vsel %vm846, %v1421, 0.0
        %1423 = vadd.xlane.f32.xlu0 %v1422
        %v1424 = vpop.xlane.xlu0 %1423
        %v1425 = vrcp.pop 32.0
        %v1426 = vmul.f32 %v1424, %v1425
        %v1427 = vsub.f32 %v1421, %v1426
        %v1428 = vmul.f32 %v1427, %v1427
        %v1429 = vsel %vm846, %v1428, 0.0
        %1430 = vadd.xlane.f32.xlu0 %v1429
        %v1431 = vpop.xlane.xlu0 %1430
        %v1432 = vmul.f32 %v1431, %v1425
        %v1433 = vadd.f32 %v1432, 1e-05
        %v1434 = vrsqrt.pop %v1433
        %v1435 = vmul.f32 %v1427, %v1434
        %v1436 = vlaneseq
        %v1437 = vshrl.u32 %v1436, 7
        %v1438 = vsub.s32 1, %v1437
        %v1439 = vrot.slane %v800, %v1438
        %v1440 = vmul.f32 %v1435, %v1439
        %v1441 = vlaneseq
        %v1442 = vshrl.u32 %v1441, 7
        %v1443 = vsub.s32 2, %v1442
        %v1444 = vrot.slane %v800, %v1443
        %v1445 = vadd.f32 %v1440, %v1444
        %v1446 = vpack.c.bf16 %v1445, %v1445
        %v1447 = vld [vmem:[%s757] sm:$0xf]
        %v1448 = vld [vmem:[%s757 + $0x4] sm:$0xf]
        %v1449 = vld [vmem:[%s757 + $0x8] sm:$0xf]
        %v1450 = vld [vmem:[%s757 + $0xc] sm:$0xf]
        %v1451 = vlaneseq
        %v1452 = vshrl.u32 %v1451, 7
        %v1453 = vsub.s32 3, %v1452
        %v1454 = vrot.slane %v800, %v1453
        %v1459 = vunpack.c.l.b16 %v1447
        %v1460 = vunpack.c.l.b16 %v1448
        %v1461 = vunpack.c.l.b16 %v1449
        %v1462 = vunpack.c.l.b16 %v1450
        %v1463 = vpack.c.b16 %v1460, %v1459
        %v1464 = vpack.c.b16 %v1462, %v1461
        %v1468 = vsel %vm846, %v1446, 0
        %1470 = vmatprep.subr.bf16.mxu0 0
        %1471 = vmatpush1.bf16.msra.mxu0 %v1463
        %1472 = vmatprep.subr.bf16.mxu0 0
        %1473 = vmatpush1.bf16.msra.mxu0 %v1464
        %1474 = vmatprep.subr.bf16.mxu0 0
        %1475 = vmatpush1.bf16.msra.mxu0 0
        %1476 = vmatprep.subr.bf16.mxu0 0
        %1477 = vmatpush1.bf16.msra.mxu0 0
        %1478 = vmatprep.subr.bf16.mxu0 0
        %1479 = vmatpush1.bf16.msra.mxu0 0
        %1480 = vmatprep.subr.bf16.mxu0 0
        %1481 = vmatpush1.bf16.msra.mxu0 0
        %1482 = vmatprep.subr.bf16.mxu0 0
        %1483 = vmatpush1.bf16.msra.mxu0 0
        %1484 = vmatprep.subr.bf16.mxu0 0
        %1485 = vmatpush1.bf16.msra.mxu0 0
        %1486 = vmatprep.subr.bf16.mxu0 0
        %1487 = vmatpush1.bf16.msra.mxu0 0
        %1488 = vmatprep.subr.bf16.mxu0 0
        %1489 = vmatpush1.bf16.msra.mxu0 0
        %1490 = vmatprep.subr.bf16.mxu0 0
        %1491 = vmatpush1.bf16.msra.mxu0 0
        %1492 = vmatprep.subr.bf16.mxu0 0
        %1493 = vmatpush1.bf16.msra.mxu0 0
        %1494 = vmatprep.subr.bf16.mxu0 0
        %1495 = vmatpush1.bf16.msra.mxu0 0
        %1496 = vmatprep.subr.bf16.mxu0 0
        %1497 = vmatpush1.bf16.msra.mxu0 0
        %1498 = vmatprep.subr.bf16.mxu0 0
        %1499 = vmatpush1.bf16.msra.mxu0 0
        %1500 = vmatprep.subr.bf16.mxu0 0
        %1501 = vmatpush1.bf16.msra.mxu0 0
        %1502 = vmatprep.mubr.bf16.mxu0 0
        %1503 = vmatmul.mubr.bf16.gmra.mrb[0].mxu0 %v1468
        %v1504 = vpop.f32.mrb[0].mxu0
        %v1505 = vadd.f32 %v1454, %v1504
        %v1506 = vpop.f32.mrb[0].mxu0
        %v1507 = vpop.f32.mrb[0].mxu0
        %v1508 = vpop.f32.mrb[0].mxu0
        %1509 = vdwg.mxu0
        %v1510 = vld [vmem:[%s762] sm:$0xf]
        %v1511 = vld [vmem:[%s762 + $0x4] sm:$0xf]
        %v1512 = vld [vmem:[%s762 + $0x8] sm:$0xf]
        %v1513 = vld [vmem:[%s762 + $0xc] sm:$0xf]
        %v1514 = vld [vmem:[%s765] sm:$0x1]
        %v1516 = vlaneseq
        %v1517 = vshrl.u32 %v1516, 7
        %v1518 = vsub.s32 0, %v1517
        %v1519 = vrot.slane %v1514, %v1518
        %v1525 = vunpack.c.l.b16 %v1510
        %v1526 = vunpack.c.l.b16 %v1511
        %v1527 = vunpack.c.l.b16 %v1512
        %v1528 = vunpack.c.l.b16 %v1513
        %v1529 = vpack.c.b16 %v1526, %v1525
        %v1530 = vpack.c.b16 %v1528, %v1527
        %v1534 = vsel %vm846, %v802, 0
        %1536 = vmatprep.subr.bf16.mxu0 0
        %1537 = vmatpush1.bf16.msra.mxu0 %v1529
        %1538 = vmatprep.subr.bf16.mxu0 0
        %1539 = vmatpush1.bf16.msra.mxu0 %v1530
        %1540 = vmatprep.subr.bf16.mxu0 0
        %1541 = vmatpush1.bf16.msra.mxu0 0
        %1542 = vmatprep.subr.bf16.mxu0 0
        %1543 = vmatpush1.bf16.msra.mxu0 0
        %1544 = vmatprep.subr.bf16.mxu0 0
        %1545 = vmatpush1.bf16.msra.mxu0 0
        %1546 = vmatprep.subr.bf16.mxu0 0
        %1547 = vmatpush1.bf16.msra.mxu0 0
        %1548 = vmatprep.subr.bf16.mxu0 0
        %1549 = vmatpush1.bf16.msra.mxu0 0
        %1550 = vmatprep.subr.bf16.mxu0 0
        %1551 = vmatpush1.bf16.msra.mxu0 0
        %1552 = vmatprep.subr.bf16.mxu0 0
        %1553 = vmatpush1.bf16.msra.mxu0 0
        %1554 = vmatprep.subr.bf16.mxu0 0
        %1555 = vmatpush1.bf16.msra.mxu0 0
        %1556 = vmatprep.subr.bf16.mxu0 0
        %1557 = vmatpush1.bf16.msra.mxu0 0
        %1558 = vmatprep.subr.bf16.mxu0 0
        %1559 = vmatpush1.bf16.msra.mxu0 0
        %1560 = vmatprep.subr.bf16.mxu0 0
        %1561 = vmatpush1.bf16.msra.mxu0 0
        %1562 = vmatprep.subr.bf16.mxu0 0
        %1563 = vmatpush1.bf16.msra.mxu0 0
        %1564 = vmatprep.subr.bf16.mxu0 0
        %1565 = vmatpush1.bf16.msra.mxu0 0
        %1566 = vmatprep.subr.bf16.mxu0 0
        %1567 = vmatpush1.bf16.msra.mxu0 0
        %1568 = vmatprep.mubr.bf16.mxu0 0
        %1569 = vmatmul.mubr.bf16.gmra.mrb[0].mxu0 %v1534
        %v1570 = vpop.f32.mrb[0].mxu0
        %v1571 = vadd.f32 %v1519, %v1570
        %v1572 = vpop.f32.mrb[0].mxu0
        %v1573 = vpop.f32.mrb[0].mxu0
        %v1574 = vpop.f32.mrb[0].mxu0
        %1575 = vdwg.mxu0
        %v1576 = vpack.c.bf16 %v1505, %v1505
        %v1577 = vpack.c.bf16 %v1571, %v1571
        %v1579 = vsel %vm894, %v1576, 0
        %v1582 = vsel %vm894, %v1577, 0
        %1584 = vmatprep.subr.bf16.mxu0 0
        %1585 = vmatpush1.bf16.xpose.msra.mxu0 %v1582
        %1586 = vmatprep.subr.bf16.mxu0 0
        %1587 = vmatpush1.bf16.xpose.msra.mxu0 0
        %1588 = vmatprep.subr.bf16.mxu0 0
        %1589 = vmatpush1.bf16.xpose.msra.mxu0 0
        %1590 = vmatprep.subr.bf16.mxu0 0
        %1591 = vmatpush1.bf16.xpose.msra.mxu0 0
        %1592 = vmatprep.subr.bf16.mxu0 0
        %1593 = vmatpush1.bf16.xpose.msra.mxu0 0
        %1594 = vmatprep.subr.bf16.mxu0 0
        %1595 = vmatpush1.bf16.xpose.msra.mxu0 0
        %1596 = vmatprep.subr.bf16.mxu0 0
        %1597 = vmatpush1.bf16.xpose.msra.mxu0 0
        %1598 = vmatprep.subr.bf16.mxu0 0
        %1599 = vmatpush1.bf16.xpose.msra.mxu0 0
        %1600 = vmatprep.subr.bf16.mxu0 0
        %1601 = vmatpush1.bf16.xpose.msra.mxu0 0
        %1602 = vmatprep.subr.bf16.mxu0 0
        %1603 = vmatpush1.bf16.xpose.msra.mxu0 0
        %1604 = vmatprep.subr.bf16.mxu0 0
        %1605 = vmatpush1.bf16.xpose.msra.mxu0 0
        %1606 = vmatprep.subr.bf16.mxu0 0
        %1607 = vmatpush1.bf16.xpose.msra.mxu0 0
        %1608 = vmatprep.subr.bf16.mxu0 0
        %1609 = vmatpush1.bf16.xpose.msra.mxu0 0
        %1610 = vmatprep.subr.bf16.mxu0 0
        %1611 = vmatpush1.bf16.xpose.msra.mxu0 0
        %1612 = vmatprep.subr.bf16.mxu0 0
        %1613 = vmatpush1.bf16.xpose.msra.mxu0 0
        %1614 = vmatprep.subr.bf16.mxu0 0
        %1615 = vmatpush1.bf16.xpose.msra.mxu0 0
        %1616 = vmatprep.mubr.bf16.mxu0 0
        %1617 = vmatmul.mubr.bf16.gmra.mrb[0].mxu0 %v1579
        %v1618 = vpop.f32.mrb[0].mxu0
        %v1619 = vadd.f32 0.0, %v1618
        %v1620 = vpop.f32.mrb[0].mxu0
        %v1621 = vpop.f32.mrb[0].mxu0
        %v1622 = vpop.f32.mrb[0].mxu0
        %1623 = vdwg.mxu0
        %v1624 = vsel %vm821, 65537, 0
        %v1625 = vunpack.c.l.b16 %v1624
        %vm1626 = vcmp.ne.s32.totalorder %v1625, 0
        %v1627 = vsel %vm1626, 1, 0
        %v1628 = vlaneseq
        %v1629 = vshrl.u32 %v1628, 7
        %v1630 = vsub.s32 0, %v1629
        %v1631 = vrot.slane %v1627, %v1630
        %vm1632 = vcmp.eq.s32.totalorder %v1631, 1
        %v1633 = vsel %vm1632, %v1619, -1e+09
        %v1634 = vsel %vm894, %v1633, -inf
        %1635 = vmax.xlane.f32.xlu0 %v1634
        %v1636 = vpop.xlane.xlu0 %1635
        %v1637 = vsub.f32 %v1633, %v1636
        %v1638 = vmul.f32 %v1637, 1.442695
        %v1639 = vpow.pop %v1638
        %v1640 = vsel %vm894, %v1639, 0.0
        %1641 = vadd.xlane.f32.xlu0 %v1640
        %v1642 = vpop.xlane.xlu0 %1641
        %v1643 = vrcp.pop %v1642
        %v1644 = vmul.f32 %v1639, %v1643
        %v1645 = vpack.c.bf16 %v1644, %v1644
        %1647 = vrot.lane.b32.xlu0 %v1577, 96
        %v1648 = vpop.permute.xlu0 %1647
        %v1650 = vsel %vm894, %v1645, 0
        %v1653 = vsel %vm959, %v1648, 0
        %1655 = vmatprep.subr.bf16.mxu0 0
        %1656 = vmatpush1.bf16.msra.mxu0 %v1653
        %1657 = vmatprep.subr.bf16.mxu0 0
        %1658 = vmatpush1.bf16.msra.mxu0 0
        %1659 = vmatprep.subr.bf16.mxu0 0
        %1660 = vmatpush1.bf16.msra.mxu0 0
        %1661 = vmatprep.subr.bf16.mxu0 0
        %1662 = vmatpush1.bf16.msra.mxu0 0
        %1663 = vmatprep.subr.bf16.mxu0 0
        %1664 = vmatpush1.bf16.msra.mxu0 0
        %1665 = vmatprep.subr.bf16.mxu0 0
        %1666 = vmatpush1.bf16.msra.mxu0 0
        %1667 = vmatprep.subr.bf16.mxu0 0
        %1668 = vmatpush1.bf16.msra.mxu0 0
        %1669 = vmatprep.subr.bf16.mxu0 0
        %1670 = vmatpush1.bf16.msra.mxu0 0
        %1671 = vmatprep.subr.bf16.mxu0 0
        %1672 = vmatpush1.bf16.msra.mxu0 0
        %1673 = vmatprep.subr.bf16.mxu0 0
        %1674 = vmatpush1.bf16.msra.mxu0 0
        %1675 = vmatprep.subr.bf16.mxu0 0
        %1676 = vmatpush1.bf16.msra.mxu0 0
        %1677 = vmatprep.subr.bf16.mxu0 0
        %1678 = vmatpush1.bf16.msra.mxu0 0
        %1679 = vmatprep.subr.bf16.mxu0 0
        %1680 = vmatpush1.bf16.msra.mxu0 0
        %1681 = vmatprep.subr.bf16.mxu0 0
        %1682 = vmatpush1.bf16.msra.mxu0 0
        %1683 = vmatprep.subr.bf16.mxu0 0
        %1684 = vmatpush1.bf16.msra.mxu0 0
        %1685 = vmatprep.subr.bf16.mxu0 0
        %1686 = vmatpush1.bf16.msra.mxu0 0
        %1687 = vmatprep.mubr.bf16.mxu0 0
        %1688 = vmatmul.mubr.bf16.gmra.mrb[0].mxu0 %v1650
        %v1689 = vpop.f32.mrb[0].mxu0
        %v1690 = vadd.f32 0.0, %v1689
        %v1691 = vpop.f32.mrb[0].mxu0
        %v1692 = vpop.f32.mrb[0].mxu0
        %v1693 = vpop.f32.mrb[0].mxu0
        %1694 = vdwg.mxu0
        %v1695 = vpack.c.bf16 %v1690, %v1690
        %1697 = vrot.lane.b32.xlu0 %v1576, 120
        %v1698 = vpop.permute.xlu0 %1697
        %1699 = vrot.lane.b32.xlu0 %v1577, 120
        %v1700 = vpop.permute.xlu0 %1699
        %v1702 = vsel %vm894, %v1698, 0
        %v1705 = vsel %vm894, %v1700, 0
        %1707 = vmatprep.subr.bf16.mxu0 0
        %1708 = vmatpush1.bf16.xpose.msra.mxu0 %v1705
        %1709 = vmatprep.subr.bf16.mxu0 0
        %1710 = vmatpush1.bf16.xpose.msra.mxu0 0
        %1711 = vmatprep.subr.bf16.mxu0 0
        %1712 = vmatpush1.bf16.xpose.msra.mxu0 0
        %1713 = vmatprep.subr.bf16.mxu0 0
        %1714 = vmatpush1.bf16.xpose.msra.mxu0 0
        %1715 = vmatprep.subr.bf16.mxu0 0
        %1716 = vmatpush1.bf16.xpose.msra.mxu0 0
        %1717 = vmatprep.subr.bf16.mxu0 0
        %1718 = vmatpush1.bf16.xpose.msra.mxu0 0
        %1719 = vmatprep.subr.bf16.mxu0 0
        %1720 = vmatpush1.bf16.xpose.msra.mxu0 0
        %1721 = vmatprep.subr.bf16.mxu0 0
        %1722 = vmatpush1.bf16.xpose.msra.mxu0 0
        %1723 = vmatprep.subr.bf16.mxu0 0
        %1724 = vmatpush1.bf16.xpose.msra.mxu0 0
        %1725 = vmatprep.subr.bf16.mxu0 0
        %1726 = vmatpush1.bf16.xpose.msra.mxu0 0
        %1727 = vmatprep.subr.bf16.mxu0 0
        %1728 = vmatpush1.bf16.xpose.msra.mxu0 0
        %1729 = vmatprep.subr.bf16.mxu0 0
        %1730 = vmatpush1.bf16.xpose.msra.mxu0 0
        %1731 = vmatprep.subr.bf16.mxu0 0
        %1732 = vmatpush1.bf16.xpose.msra.mxu0 0
        %1733 = vmatprep.subr.bf16.mxu0 0
        %1734 = vmatpush1.bf16.xpose.msra.mxu0 0
        %1735 = vmatprep.subr.bf16.mxu0 0
        %1736 = vmatpush1.bf16.xpose.msra.mxu0 0
        %1737 = vmatprep.subr.bf16.mxu0 0
        %1738 = vmatpush1.bf16.xpose.msra.mxu0 0
        %1739 = vmatprep.mubr.bf16.mxu0 0
        %1740 = vmatmul.mubr.bf16.gmra.mrb[0].mxu0 %v1702
        %v1741 = vpop.f32.mrb[0].mxu0
        %v1742 = vadd.f32 0.0, %v1741
        %v1743 = vpop.f32.mrb[0].mxu0
        %v1744 = vpop.f32.mrb[0].mxu0
        %v1745 = vpop.f32.mrb[0].mxu0
        %1746 = vdwg.mxu0
        %v1747 = vsel %vm1632, %v1742, -1e+09
        %v1748 = vsel %vm894, %v1747, -inf
        %1749 = vmax.xlane.f32.xlu0 %v1748
        %v1750 = vpop.xlane.xlu0 %1749
        %v1751 = vsub.f32 %v1747, %v1750
        %v1752 = vmul.f32 %v1751, 1.442695
        %v1753 = vpow.pop %v1752
        %v1754 = vsel %vm894, %v1753, 0.0
        %1755 = vadd.xlane.f32.xlu0 %v1754
        %v1756 = vpop.xlane.xlu0 %1755
        %v1757 = vrcp.pop %v1756
        %v1758 = vmul.f32 %v1753, %v1757
        %v1759 = vpack.c.bf16 %v1758, %v1758
        %1760 = vrot.lane.b32.xlu0 %v1577, 88
        %v1761 = vpop.permute.xlu0 %1760
        %v1763 = vsel %vm894, %v1759, 0
        %v1766 = vsel %vm959, %v1761, 0
        %1768 = vmatprep.subr.bf16.mxu0 0
        %1769 = vmatpush1.bf16.msra.mxu0 %v1766
        %1770 = vmatprep.subr.bf16.mxu0 0
        %1771 = vmatpush1.bf16.msra.mxu0 0
        %1772 = vmatprep.subr.bf16.mxu0 0
        %1773 = vmatpush1.bf16.msra.mxu0 0
        %1774 = vmatprep.subr.bf16.mxu0 0
        %1775 = vmatpush1.bf16.msra.mxu0 0
        %1776 = vmatprep.subr.bf16.mxu0 0
        %1777 = vmatpush1.bf16.msra.mxu0 0
        %1778 = vmatprep.subr.bf16.mxu0 0
        %1779 = vmatpush1.bf16.msra.mxu0 0
        %1780 = vmatprep.subr.bf16.mxu0 0
        %1781 = vmatpush1.bf16.msra.mxu0 0
        %1782 = vmatprep.subr.bf16.mxu0 0
        %1783 = vmatpush1.bf16.msra.mxu0 0
        %1784 = vmatprep.subr.bf16.mxu0 0
        %1785 = vmatpush1.bf16.msra.mxu0 0
        %1786 = vmatprep.subr.bf16.mxu0 0
        %1787 = vmatpush1.bf16.msra.mxu0 0
        %1788 = vmatprep.subr.bf16.mxu0 0
        %1789 = vmatpush1.bf16.msra.mxu0 0
        %1790 = vmatprep.subr.bf16.mxu0 0
        %1791 = vmatpush1.bf16.msra.mxu0 0
        %1792 = vmatprep.subr.bf16.mxu0 0
        %1793 = vmatpush1.bf16.msra.mxu0 0
        %1794 = vmatprep.subr.bf16.mxu0 0
        %1795 = vmatpush1.bf16.msra.mxu0 0
        %1796 = vmatprep.subr.bf16.mxu0 0
        %1797 = vmatpush1.bf16.msra.mxu0 0
        %1798 = vmatprep.subr.bf16.mxu0 0
        %1799 = vmatpush1.bf16.msra.mxu0 0
        %1800 = vmatprep.mubr.bf16.mxu0 0
        %1801 = vmatmul.mubr.bf16.gmra.mrb[0].mxu0 %v1763
        %v1802 = vpop.f32.mrb[0].mxu0
        %v1803 = vadd.f32 0.0, %v1802
        %v1804 = vpop.f32.mrb[0].mxu0
        %v1805 = vpop.f32.mrb[0].mxu0
        %v1806 = vpop.f32.mrb[0].mxu0
        %1807 = vdwg.mxu0
        %v1808 = vpack.c.bf16 %v1803, %v1803
        %1809 = vrot.lane.b32.xlu0 %v1576, 112
        %v1810 = vpop.permute.xlu0 %1809
        %1811 = vrot.lane.b32.xlu0 %v1577, 112
        %v1812 = vpop.permute.xlu0 %1811
        %v1814 = vsel %vm894, %v1810, 0
        %v1817 = vsel %vm894, %v1812, 0
        %1819 = vmatprep.subr.bf16.mxu0 0
        %1820 = vmatpush1.bf16.xpose.msra.mxu0 %v1817
        %1821 = vmatprep.subr.bf16.mxu0 0
        %1822 = vmatpush1.bf16.xpose.msra.mxu0 0
        %1823 = vmatprep.subr.bf16.mxu0 0
        %1824 = vmatpush1.bf16.xpose.msra.mxu0 0
        %1825 = vmatprep.subr.bf16.mxu0 0
        %1826 = vmatpush1.bf16.xpose.msra.mxu0 0
        %1827 = vmatprep.subr.bf16.mxu0 0
        %1828 = vmatpush1.bf16.xpose.msra.mxu0 0
        %1829 = vmatprep.subr.bf16.mxu0 0
        %1830 = vmatpush1.bf16.xpose.msra.mxu0 0
        %1831 = vmatprep.subr.bf16.mxu0 0
        %1832 = vmatpush1.bf16.xpose.msra.mxu0 0
        %1833 = vmatprep.subr.bf16.mxu0 0
        %1834 = vmatpush1.bf16.xpose.msra.mxu0 0
        %1835 = vmatprep.subr.bf16.mxu0 0
        %1836 = vmatpush1.bf16.xpose.msra.mxu0 0
        %1837 = vmatprep.subr.bf16.mxu0 0
        %1838 = vmatpush1.bf16.xpose.msra.mxu0 0
        %1839 = vmatprep.subr.bf16.mxu0 0
        %1840 = vmatpush1.bf16.xpose.msra.mxu0 0
        %1841 = vmatprep.subr.bf16.mxu0 0
        %1842 = vmatpush1.bf16.xpose.msra.mxu0 0
        %1843 = vmatprep.subr.bf16.mxu0 0
        %1844 = vmatpush1.bf16.xpose.msra.mxu0 0
        %1845 = vmatprep.subr.bf16.mxu0 0
        %1846 = vmatpush1.bf16.xpose.msra.mxu0 0
        %1847 = vmatprep.subr.bf16.mxu0 0
        %1848 = vmatpush1.bf16.xpose.msra.mxu0 0
        %1849 = vmatprep.subr.bf16.mxu0 0
        %1850 = vmatpush1.bf16.xpose.msra.mxu0 0
        %1851 = vmatprep.mubr.bf16.mxu0 0
        %1852 = vmatmul.mubr.bf16.gmra.mrb[0].mxu0 %v1814
        %v1853 = vpop.f32.mrb[0].mxu0
        %v1854 = vadd.f32 0.0, %v1853
        %v1855 = vpop.f32.mrb[0].mxu0
        %v1856 = vpop.f32.mrb[0].mxu0
        %v1857 = vpop.f32.mrb[0].mxu0
        %1858 = vdwg.mxu0
        %v1859 = vsel %vm1632, %v1854, -1e+09
        %v1860 = vsel %vm894, %v1859, -inf
        %1861 = vmax.xlane.f32.xlu0 %v1860
        %v1862 = vpop.xlane.xlu0 %1861
        %v1863 = vsub.f32 %v1859, %v1862
        %v1864 = vmul.f32 %v1863, 1.442695
        %v1865 = vpow.pop %v1864
        %v1866 = vsel %vm894, %v1865, 0.0
        %1867 = vadd.xlane.f32.xlu0 %v1866
        %v1868 = vpop.xlane.xlu0 %1867
        %v1869 = vrcp.pop %v1868
        %v1870 = vmul.f32 %v1865, %v1869
        %v1871 = vpack.c.bf16 %v1870, %v1870
        %1872 = vrot.lane.b32.xlu0 %v1577, 80
        %v1873 = vpop.permute.xlu0 %1872
        %v1875 = vsel %vm894, %v1871, 0
        %v1878 = vsel %vm959, %v1873, 0
        %1880 = vmatprep.subr.bf16.mxu0 0
        %1881 = vmatpush1.bf16.msra.mxu0 %v1878
        %1882 = vmatprep.subr.bf16.mxu0 0
        %1883 = vmatpush1.bf16.msra.mxu0 0
        %1884 = vmatprep.subr.bf16.mxu0 0
        %1885 = vmatpush1.bf16.msra.mxu0 0
        %1886 = vmatprep.subr.bf16.mxu0 0
        %1887 = vmatpush1.bf16.msra.mxu0 0
        %1888 = vmatprep.subr.bf16.mxu0 0
        %1889 = vmatpush1.bf16.msra.mxu0 0
        %1890 = vmatprep.subr.bf16.mxu0 0
        %1891 = vmatpush1.bf16.msra.mxu0 0
        %1892 = vmatprep.subr.bf16.mxu0 0
        %1893 = vmatpush1.bf16.msra.mxu0 0
        %1894 = vmatprep.subr.bf16.mxu0 0
        %1895 = vmatpush1.bf16.msra.mxu0 0
        %1896 = vmatprep.subr.bf16.mxu0 0
        %1897 = vmatpush1.bf16.msra.mxu0 0
        %1898 = vmatprep.subr.bf16.mxu0 0
        %1899 = vmatpush1.bf16.msra.mxu0 0
        %1900 = vmatprep.subr.bf16.mxu0 0
        %1901 = vmatpush1.bf16.msra.mxu0 0
        %1902 = vmatprep.subr.bf16.mxu0 0
        %1903 = vmatpush1.bf16.msra.mxu0 0
        %1904 = vmatprep.subr.bf16.mxu0 0
        %1905 = vmatpush1.bf16.msra.mxu0 0
        %1906 = vmatprep.subr.bf16.mxu0 0
        %1907 = vmatpush1.bf16.msra.mxu0 0
        %1908 = vmatprep.subr.bf16.mxu0 0
        %1909 = vmatpush1.bf16.msra.mxu0 0
        %1910 = vmatprep.subr.bf16.mxu0 0
        %1911 = vmatpush1.bf16.msra.mxu0 0
        %1912 = vmatprep.mubr.bf16.mxu0 0
        %1913 = vmatmul.mubr.bf16.gmra.mrb[0].mxu0 %v1875
        %v1914 = vpop.f32.mrb[0].mxu0
        %v1915 = vadd.f32 0.0, %v1914
        %v1916 = vpop.f32.mrb[0].mxu0
        %v1917 = vpop.f32.mrb[0].mxu0
        %v1918 = vpop.f32.mrb[0].mxu0
        %1919 = vdwg.mxu0
        %v1920 = vpack.c.bf16 %v1915, %v1915
        %1921 = vrot.lane.b32.xlu0 %v1576, 104
        %v1922 = vpop.permute.xlu0 %1921
        %1923 = vrot.lane.b32.xlu0 %v1577, 104
        %v1924 = vpop.permute.xlu0 %1923
        %v1926 = vsel %vm894, %v1922, 0
        %v1929 = vsel %vm894, %v1924, 0
        %1931 = vmatprep.subr.bf16.mxu0 0
        %1932 = vmatpush1.bf16.xpose.msra.mxu0 %v1929
        %1933 = vmatprep.subr.bf16.mxu0 0
        %1934 = vmatpush1.bf16.xpose.msra.mxu0 0
        %1935 = vmatprep.subr.bf16.mxu0 0
        %1936 = vmatpush1.bf16.xpose.msra.mxu0 0
        %1937 = vmatprep.subr.bf16.mxu0 0
        %1938 = vmatpush1.bf16.xpose.msra.mxu0 0
        %1939 = vmatprep.subr.bf16.mxu0 0
        %1940 = vmatpush1.bf16.xpose.msra.mxu0 0
        %1941 = vmatprep.subr.bf16.mxu0 0
        %1942 = vmatpush1.bf16.xpose.msra.mxu0 0
        %1943 = vmatprep.subr.bf16.mxu0 0
        %1944 = vmatpush1.bf16.xpose.msra.mxu0 0
        %1945 = vmatprep.subr.bf16.mxu0 0
        %1946 = vmatpush1.bf16.xpose.msra.mxu0 0
        %1947 = vmatprep.subr.bf16.mxu0 0
        %1948 = vmatpush1.bf16.xpose.msra.mxu0 0
        %1949 = vmatprep.subr.bf16.mxu0 0
        %1950 = vmatpush1.bf16.xpose.msra.mxu0 0
        %1951 = vmatprep.subr.bf16.mxu0 0
        %1952 = vmatpush1.bf16.xpose.msra.mxu0 0
        %1953 = vmatprep.subr.bf16.mxu0 0
        %1954 = vmatpush1.bf16.xpose.msra.mxu0 0
        %1955 = vmatprep.subr.bf16.mxu0 0
        %1956 = vmatpush1.bf16.xpose.msra.mxu0 0
        %1957 = vmatprep.subr.bf16.mxu0 0
        %1958 = vmatpush1.bf16.xpose.msra.mxu0 0
        %1959 = vmatprep.subr.bf16.mxu0 0
        %1960 = vmatpush1.bf16.xpose.msra.mxu0 0
        %1961 = vmatprep.subr.bf16.mxu0 0
        %1962 = vmatpush1.bf16.xpose.msra.mxu0 0
        %1963 = vmatprep.mubr.bf16.mxu0 0
        %1964 = vmatmul.mubr.bf16.gmra.mrb[0].mxu0 %v1926
        %v1965 = vpop.f32.mrb[0].mxu0
        %v1966 = vadd.f32 0.0, %v1965
        %v1967 = vpop.f32.mrb[0].mxu0
        %v1968 = vpop.f32.mrb[0].mxu0
        %v1969 = vpop.f32.mrb[0].mxu0
        %1970 = vdwg.mxu0
        %v1971 = vsel %vm1632, %v1966, -1e+09
        %v1972 = vsel %vm894, %v1971, -inf
        %1973 = vmax.xlane.f32.xlu0 %v1972
        %v1974 = vpop.xlane.xlu0 %1973
        %v1975 = vsub.f32 %v1971, %v1974
        %v1976 = vmul.f32 %v1975, 1.442695
        %v1977 = vpow.pop %v1976
        %v1978 = vsel %vm894, %v1977, 0.0
        %1979 = vadd.xlane.f32.xlu0 %v1978
        %v1980 = vpop.xlane.xlu0 %1979
        %v1981 = vrcp.pop %v1980
        %v1982 = vmul.f32 %v1977, %v1981
        %v1983 = vpack.c.bf16 %v1982, %v1982
        %1984 = vrot.lane.b32.xlu0 %v1577, 72
        %v1985 = vpop.permute.xlu0 %1984
        %v1987 = vsel %vm894, %v1983, 0
        %v1990 = vsel %vm959, %v1985, 0
        %1992 = vmatprep.subr.bf16.mxu0 0
        %1993 = vmatpush1.bf16.msra.mxu0 %v1990
        %1994 = vmatprep.subr.bf16.mxu0 0
        %1995 = vmatpush1.bf16.msra.mxu0 0
        %1996 = vmatprep.subr.bf16.mxu0 0
        %1997 = vmatpush1.bf16.msra.mxu0 0
        %1998 = vmatprep.subr.bf16.mxu0 0
        %1999 = vmatpush1.bf16.msra.mxu0 0
        %2000 = vmatprep.subr.bf16.mxu0 0
        %2001 = vmatpush1.bf16.msra.mxu0 0
        %2002 = vmatprep.subr.bf16.mxu0 0
        %2003 = vmatpush1.bf16.msra.mxu0 0
        %2004 = vmatprep.subr.bf16.mxu0 0
        %2005 = vmatpush1.bf16.msra.mxu0 0
        %2006 = vmatprep.subr.bf16.mxu0 0
        %2007 = vmatpush1.bf16.msra.mxu0 0
        %2008 = vmatprep.subr.bf16.mxu0 0
        %2009 = vmatpush1.bf16.msra.mxu0 0
        %2010 = vmatprep.subr.bf16.mxu0 0
        %2011 = vmatpush1.bf16.msra.mxu0 0
        %2012 = vmatprep.subr.bf16.mxu0 0
        %2013 = vmatpush1.bf16.msra.mxu0 0
        %2014 = vmatprep.subr.bf16.mxu0 0
        %2015 = vmatpush1.bf16.msra.mxu0 0
        %2016 = vmatprep.subr.bf16.mxu0 0
        %2017 = vmatpush1.bf16.msra.mxu0 0
        %2018 = vmatprep.subr.bf16.mxu0 0
        %2019 = vmatpush1.bf16.msra.mxu0 0
        %2020 = vmatprep.subr.bf16.mxu0 0
        %2021 = vmatpush1.bf16.msra.mxu0 0
        %2022 = vmatprep.subr.bf16.mxu0 0
        %2023 = vmatpush1.bf16.msra.mxu0 0
        %2024 = vmatprep.mubr.bf16.mxu0 0
        %2025 = vmatmul.mubr.bf16.gmra.mrb[0].mxu0 %v1987
        %v2026 = vpop.f32.mrb[0].mxu0
        %v2027 = vadd.f32 0.0, %v2026
        %v2028 = vpop.f32.mrb[0].mxu0
        %v2029 = vpop.f32.mrb[0].mxu0
        %v2030 = vpop.f32.mrb[0].mxu0
        %2031 = vdwg.mxu0
        %v2032 = vpack.c.bf16 %v2027, %v2027
        %2034 = vrot.lane.b32.xlu0 %v1808, 8
        %v2035 = vpop.permute.xlu0 %2034
        %2037 = vrot.lane.b32.xlu0 %v1920, 16
        %v2038 = vpop.permute.xlu0 %2037
        %2040 = vrot.lane.b32.xlu0 %v2032, 24
        %v2041 = vpop.permute.xlu0 %2040
        %v2044 = vsel %vm894, %v1695, %v2035
        %v2046 = vsel %vm1352, %v2044, %v2038
        %v2048 = vsel %vm1355, %v2046, %v2041
        %v2049 = vld [vmem:[%s770] sm:$0xf]
        %v2050 = vld [vmem:[%s770 + $0x4] sm:$0xf]
        %v2051 = vld [vmem:[%s770 + $0x8] sm:$0xf]
        %v2052 = vld [vmem:[%s770 + $0xc] sm:$0xf]
        %v2057 = vunpack.c.l.b16 %v2049
        %v2058 = vunpack.c.l.b16 %v2050
        %v2059 = vunpack.c.l.b16 %v2051
        %v2060 = vunpack.c.l.b16 %v2052
        %v2061 = vpack.c.b16 %v2058, %v2057
        %v2062 = vpack.c.b16 %v2060, %v2059
        %v2065 = vsel %vm846, %v2048, 0
        %2067 = vmatprep.subr.bf16.mxu0 0
        %2068 = vmatpush1.bf16.msra.mxu0 %v2061
        %2069 = vmatprep.subr.bf16.mxu0 0
        %2070 = vmatpush1.bf16.msra.mxu0 %v2062
        %2071 = vmatprep.subr.bf16.mxu0 0
        %2072 = vmatpush1.bf16.msra.mxu0 0
        %2073 = vmatprep.subr.bf16.mxu0 0
        %2074 = vmatpush1.bf16.msra.mxu0 0
        %2075 = vmatprep.subr.bf16.mxu0 0
        %2076 = vmatpush1.bf16.msra.mxu0 0
        %2077 = vmatprep.subr.bf16.mxu0 0
        %2078 = vmatpush1.bf16.msra.mxu0 0
        %2079 = vmatprep.subr.bf16.mxu0 0
        %2080 = vmatpush1.bf16.msra.mxu0 0
        %2081 = vmatprep.subr.bf16.mxu0 0
        %2082 = vmatpush1.bf16.msra.mxu0 0
        %2083 = vmatprep.subr.bf16.mxu0 0
        %2084 = vmatpush1.bf16.msra.mxu0 0
        %2085 = vmatprep.subr.bf16.mxu0 0
        %2086 = vmatpush1.bf16.msra.mxu0 0
        %2087 = vmatprep.subr.bf16.mxu0 0
        %2088 = vmatpush1.bf16.msra.mxu0 0
        %2089 = vmatprep.subr.bf16.mxu0 0
        %2090 = vmatpush1.bf16.msra.mxu0 0
        %2091 = vmatprep.subr.bf16.mxu0 0
        %2092 = vmatpush1.bf16.msra.mxu0 0
        %2093 = vmatprep.subr.bf16.mxu0 0
        %2094 = vmatpush1.bf16.msra.mxu0 0
        %2095 = vmatprep.subr.bf16.mxu0 0
        %2096 = vmatpush1.bf16.msra.mxu0 0
        %2097 = vmatprep.subr.bf16.mxu0 0
        %2098 = vmatpush1.bf16.msra.mxu0 0
        %2099 = vmatprep.mubr.bf16.mxu0 0
        %2100 = vmatmul.mubr.bf16.gmra.mrb[0].mxu0 %v2065
        %v2101 = vpop.f32.mrb[0].mxu0
        %v2102 = vadd.f32 0.0, %v2101
        %v2103 = vpop.f32.mrb[0].mxu0
        %v2104 = vpop.f32.mrb[0].mxu0
        %v2105 = vpop.f32.mrb[0].mxu0
        %2106 = vdwg.mxu0
        %v2107 = vadd.f32 %v1445, %v2102
        %v2108 = vlaneseq
        %v2109 = vshrl.u32 %v2108, 7
        %v2110 = vsub.s32 4, %v2109
        %v2111 = vrot.slane %v800, %v2110
        %v2112 = vadd.f32 %v2107, %v2111
        %v2113 = vsel %vm846, %v2112, 0.0
        %2114 = vadd.xlane.f32.xlu0 %v2113
        %v2115 = vpop.xlane.xlu0 %2114
        %v2116 = vmul.f32 %v2115, %v1425
        %v2117 = vsub.f32 %v2112, %v2116
        %v2118 = vmul.f32 %v2117, %v2117
        %v2119 = vsel %vm846, %v2118, 0.0
        %2120 = vadd.xlane.f32.xlu0 %v2119
        %v2121 = vpop.xlane.xlu0 %2120
        %v2122 = vmul.f32 %v2121, %v1425
        %v2123 = vadd.f32 %v2122, 1e-05
        %v2124 = vrsqrt.pop %v2123
        %v2125 = vmul.f32 %v2117, %v2124
        %v2126 = vlaneseq
        %v2127 = vshrl.u32 %v2126, 7
        %v2128 = vsub.s32 5, %v2127
        %v2129 = vrot.slane %v800, %v2128
        %v2130 = vmul.f32 %v2125, %v2129
        %v2131 = vlaneseq
        %v2132 = vshrl.u32 %v2131, 7
        %v2133 = vsub.s32 6, %v2132
        %v2134 = vrot.slane %v800, %v2133
        %v2135 = vadd.f32 %v2130, %v2134
        %v2136 = vpack.c.bf16 %v2135, %v2135
        %v2137 = vld [vmem:[%s775] sm:$0xf]
        %v2138 = vld [vmem:[%s775 + $0x4] sm:$0xf]
        %v2139 = vld [vmem:[%s775 + $0x8] sm:$0xf]
        %v2140 = vld [vmem:[%s775 + $0xc] sm:$0xf]
        %v2141 = vld [vmem:[%s778] sm:$0x1]
        %v2143 = vlaneseq
        %v2144 = vshrl.u32 %v2143, 7
        %v2145 = vsub.s32 0, %v2144
        %v2146 = vrot.slane %v2141, %v2145
        %v2152 = vunpack.c.l.b16 %v2137
        %v2153 = vunpack.c.l.b16 %v2138
        %v2154 = vunpack.c.l.b16 %v2139
        %v2155 = vunpack.c.l.b16 %v2140
        %v2156 = vpack.c.b16 %v2153, %v2152
        %v2157 = vpack.c.b16 %v2155, %v2154
        %v2161 = vsel %vm846, %v2136, 0
        %2163 = vmatprep.subr.bf16.mxu0 0
        %2164 = vmatpush1.bf16.msra.mxu0 %v2156
        %2165 = vmatprep.subr.bf16.mxu0 0
        %2166 = vmatpush1.bf16.msra.mxu0 %v2157
        %2167 = vmatprep.subr.bf16.mxu0 0
        %2168 = vmatpush1.bf16.msra.mxu0 0
        %2169 = vmatprep.subr.bf16.mxu0 0
        %2170 = vmatpush1.bf16.msra.mxu0 0
        %2171 = vmatprep.subr.bf16.mxu0 0
        %2172 = vmatpush1.bf16.msra.mxu0 0
        %2173 = vmatprep.subr.bf16.mxu0 0
        %2174 = vmatpush1.bf16.msra.mxu0 0
        %2175 = vmatprep.subr.bf16.mxu0 0
        %2176 = vmatpush1.bf16.msra.mxu0 0
        %2177 = vmatprep.subr.bf16.mxu0 0
        %2178 = vmatpush1.bf16.msra.mxu0 0
        %2179 = vmatprep.subr.bf16.mxu0 0
        %2180 = vmatpush1.bf16.msra.mxu0 0
        %2181 = vmatprep.subr.bf16.mxu0 0
        %2182 = vmatpush1.bf16.msra.mxu0 0
        %2183 = vmatprep.subr.bf16.mxu0 0
        %2184 = vmatpush1.bf16.msra.mxu0 0
        %2185 = vmatprep.subr.bf16.mxu0 0
        %2186 = vmatpush1.bf16.msra.mxu0 0
        %2187 = vmatprep.subr.bf16.mxu0 0
        %2188 = vmatpush1.bf16.msra.mxu0 0
        %2189 = vmatprep.subr.bf16.mxu0 0
        %2190 = vmatpush1.bf16.msra.mxu0 0
        %2191 = vmatprep.subr.bf16.mxu0 0
        %2192 = vmatpush1.bf16.msra.mxu0 0
        %2193 = vmatprep.subr.bf16.mxu0 0
        %2194 = vmatpush1.bf16.msra.mxu0 0
        %2195 = vmatprep.mubr.bf16.mxu0 0
        %2196 = vmatmul.mubr.bf16.gmra.mrb[0].mxu0 %v2161
        %v2197 = vpop.f32.mrb[0].mxu0
        %v2198 = vadd.f32 %v2146, %v2197
        %v2199 = vpop.f32.mrb[0].mxu0
        %v2200 = vpop.f32.mrb[0].mxu0
        %v2201 = vpop.f32.mrb[0].mxu0
        %2202 = vdwg.mxu0
        %v2203 = vmax.f32 %v2198, 0.0
        %v2204 = vpack.c.bf16 %v2203, %v2203
        %v2205 = vld [vmem:[%s783] sm:$0xf]
        %v2206 = vld [vmem:[%s783 + $0x4] sm:$0xf]
        %v2207 = vld [vmem:[%s783 + $0x8] sm:$0xf]
        %v2208 = vld [vmem:[%s783 + $0xc] sm:$0xf]
        %v2209 = vld [vmem:[%s783 + $0x10] sm:$0xf]
        %v2210 = vld [vmem:[%s783 + $0x14] sm:$0xf]
        %v2211 = vld [vmem:[%s783 + $0x18] sm:$0xf]
        %v2212 = vld [vmem:[%s783 + $0x1c] sm:$0xf]
        %v2213 = vld [vmem:[%s783 + $0x20] sm:$0xf]
        %v2214 = vld [vmem:[%s783 + $0x24] sm:$0xf]
        %v2215 = vld [vmem:[%s783 + $0x28] sm:$0xf]
        %v2216 = vld [vmem:[%s783 + $0x2c] sm:$0xf]
        %v2217 = vld [vmem:[%s783 + $0x30] sm:$0xf]
        %v2218 = vld [vmem:[%s783 + $0x34] sm:$0xf]
        %v2219 = vld [vmem:[%s783 + $0x38] sm:$0xf]
        %v2220 = vld [vmem:[%s783 + $0x3c] sm:$0xf]
        %v2237 = vunpack.c.l.b16 %v2205
        %v2238 = vunpack.c.l.b16 %v2206
        %v2239 = vunpack.c.l.b16 %v2207
        %v2240 = vunpack.c.l.b16 %v2208
        %v2241 = vunpack.c.l.b16 %v2209
        %v2242 = vunpack.c.l.b16 %v2210
        %v2243 = vunpack.c.l.b16 %v2211
        %v2244 = vunpack.c.l.b16 %v2212
        %v2245 = vunpack.c.l.b16 %v2213
        %v2246 = vunpack.c.l.b16 %v2214
        %v2247 = vunpack.c.l.b16 %v2215
        %v2248 = vunpack.c.l.b16 %v2216
        %v2249 = vunpack.c.l.b16 %v2217
        %v2250 = vunpack.c.l.b16 %v2218
        %v2251 = vunpack.c.l.b16 %v2219
        %v2252 = vunpack.c.l.b16 %v2220
        %v2253 = vpack.c.b16 %v2238, %v2237
        %v2254 = vpack.c.b16 %v2240, %v2239
        %v2255 = vpack.c.b16 %v2242, %v2241
        %v2256 = vpack.c.b16 %v2244, %v2243
        %v2257 = vpack.c.b16 %v2246, %v2245
        %v2258 = vpack.c.b16 %v2248, %v2247
        %v2259 = vpack.c.b16 %v2250, %v2249
        %v2260 = vpack.c.b16 %v2252, %v2251
        %2269 = vmatprep.subr.bf16.mxu0 0
        %2270 = vmatpush1.bf16.msra.mxu0 %v2253
        %2271 = vmatprep.subr.bf16.mxu0 0
        %2272 = vmatpush1.bf16.msra.mxu0 %v2254
        %2273 = vmatprep.subr.bf16.mxu0 0
        %2274 = vmatpush1.bf16.msra.mxu0 %v2255
        %2275 = vmatprep.subr.bf16.mxu0 0
        %2276 = vmatpush1.bf16.msra.mxu0 %v2256
        %2277 = vmatprep.subr.bf16.mxu0 0
        %2278 = vmatpush1.bf16.msra.mxu0 %v2257
        %2279 = vmatprep.subr.bf16.mxu0 0
        %2280 = vmatpush1.bf16.msra.mxu0 %v2258
        %2281 = vmatprep.subr.bf16.mxu0 0
        %2282 = vmatpush1.bf16.msra.mxu0 %v2259
        %2283 = vmatprep.subr.bf16.mxu0 0
        %2284 = vmatpush1.bf16.msra.mxu0 %v2260
        %2285 = vmatprep.subr.bf16.mxu0 0
        %2286 = vmatpush1.bf16.msra.mxu0 0
        %2287 = vmatprep.subr.bf16.mxu0 0
        %2288 = vmatpush1.bf16.msra.mxu0 0
        %2289 = vmatprep.subr.bf16.mxu0 0
        %2290 = vmatpush1.bf16.msra.mxu0 0
        %2291 = vmatprep.subr.bf16.mxu0 0
        %2292 = vmatpush1.bf16.msra.mxu0 0
        %2293 = vmatprep.subr.bf16.mxu0 0
        %2294 = vmatpush1.bf16.msra.mxu0 0
        %2295 = vmatprep.subr.bf16.mxu0 0
        %2296 = vmatpush1.bf16.msra.mxu0 0
        %2297 = vmatprep.subr.bf16.mxu0 0
        %2298 = vmatpush1.bf16.msra.mxu0 0
        %2299 = vmatprep.subr.bf16.mxu0 0
        %2300 = vmatpush1.bf16.msra.mxu0 0
        %2301 = vmatprep.mubr.bf16.mxu0 0
        %2302 = vmatmul.mubr.bf16.gmra.mrb[0].mxu0 %v2204
        %v2303 = vpop.f32.mrb[0].mxu0
        %v2304 = vadd.f32 0.0, %v2303
        %v2305 = vpop.f32.mrb[0].mxu0
        %v2306 = vpop.f32.mrb[0].mxu0
        %v2307 = vpop.f32.mrb[0].mxu0
        %2308 = vdwg.mxu0
        %v2309 = vadd.f32 %v2135, %v2304
        %v2310 = vlaneseq
        %v2311 = vshrl.u32 %v2310, 7
        %v2312 = vsub.s32 7, %v2311
        %v2313 = vrot.slane %v800, %v2312
        %v2314 = vadd.f32 %v2309, %v2313
        %v2315 = vsel %vm846, %v2314, 0.0
        %2316 = vadd.xlane.f32.xlu0 %v2315
        %v2317 = vpop.xlane.xlu0 %2316
        %v2318 = vmul.f32 %v2317, %v1425
        %v2319 = vsub.f32 %v2314, %v2318
        %v2320 = vmul.f32 %v2319, %v2319
        %v2321 = vsel %vm846, %v2320, 0.0
        %2322 = vadd.xlane.f32.xlu0 %v2321
        %v2323 = vpop.xlane.xlu0 %2322
        %v2324 = vmul.f32 %v2323, %v1425
        %v2325 = vadd.f32 %v2324, 1e-05
        %v2326 = vrsqrt.pop %v2325
        %v2327 = vmul.f32 %v2319, %v2326
        %v2328 = vlaneseq
        %v2329 = vshrl.u32 %v2328, 7
        %v2330 = vsub.s32 0, %v2329
        %v2331 = vrot.slane %v801, %v2330
        %v2332 = vmul.f32 %v2327, %v2331
        %v2333 = vlaneseq
        %v2334 = vshrl.u32 %v2333, 7
        %v2335 = vsub.s32 1, %v2334
        %v2336 = vrot.slane %v801, %v2335
        %v2337 = vadd.f32 %v2332, %v2336
        %2338 = vst.msk [vmem:[%s733] sm:$0xff] %vm846, %v2337
        %s2339 = sand.u32 %s445, 1
        %s2340 = scalar_lea.sflag [#allocation4], %s2339
        %s2341 = sand.u32 %s445, 1
        %s2342 = smul.addr %s2341, 8
        %s2343 = scalar_lea.vmem [#allocation7], %s2342
        // Predicated region
        $region93: #{tpu_custom_call.1} parent=79 // pred_check
          %p2344 = pneg %p455
        $region94: #{tpu_custom_call.1} parent=79 // pred_check_branch
          %2346 = sbr.rel (%p2344) target = $region96
        $region95: #{tpu_custom_call.1} parent=79 // pred_region
          %s2348 = ssub.s32 128, 128
          %2349 = vsyncadd %s2340, %s2348
          %s2350 = smul.addr %s39, 128
          %s2351 = scalar_lea.hbm %s15, %s2350
          %s2353 = sshll.u32 %s2343, 4
          %s2354 = int_to_ptr.vmem [resolvable:$true] %s2353
          %2356 = dma.vmem_to_hbm [thread:$0]  %s2354, 128, %s2351, %s2340
        $region96: #{tpu_custom_call.1} parent=79 // pred_fallthru
          _
      $region80: #{tpu_custom_call.1} parent=5 // pred_fallthru
        _
      %p2357 = scmp.le.s32.totalorder 2, %s30
      // Predicated region
      $region97: #{tpu_custom_call.1} parent=5 // pred_check
        %p2358 = pneg %p2357
      $region98: #{tpu_custom_call.1} parent=5 // pred_check_branch
        %2360 = sbr.rel (%p2358) target = $region100
      $region99: #{tpu_custom_call.1} parent=5 // pred_region
        %s2361 = ssub.s32 %s30, 2
        // Predicated region
        $region101: #{tpu_custom_call.1} parent=99 // pred_check
          %p2362 = pneg %p461
        $region102: #{tpu_custom_call.1} parent=99 // pred_check_branch
          %2364 = sbr.rel (%p2362) target = $region104
        $region103: #{tpu_custom_call.1} parent=99 // pred_region
          %s2365 = sand.u32 %s446, 1
          %s2366 = scalar_lea.sflag [#allocation4], %s2365
          %s2367 = sand.u32 %s446, 1
          %s2368 = smul.addr %s2367, 8
          %s2369 = scalar_lea.vmem [#allocation7], %s2368
          %2370 = dma.done %s2366, 128
        $region104: #{tpu_custom_call.1} parent=99 // pred_fallthru
          _
      $region100: #{tpu_custom_call.1} parent=5 // pred_fallthru
        _
    $region6: #{tpu_custom_call.1} parent=1 // loop_footer
      %s34 = sadd.s32 1, %s30
    $region7: #{tpu_custom_call.1} parent=1 // loop_footer_branch
      %29 = sbr.rel target = $region3
    $region8: #{tpu_custom_call.1} parent=1 // loop_exit
      _
    %2371 = vsyncpa [#allocation3], 1
    %s2372 = scalar_lea.sflag [#allocation3], 1
    %2373 = vsyncpa %s2372, 1
    %2374 = vsyncpa [#allocation6], 1
    %s2375 = scalar_lea.sflag [#allocation6], 1
    %2376 = vsyncpa %s2375, 1
    %2377 = vsyncpa [#allocation4], 1
    %s2378 = scalar_lea.sflag [#allocation4], 1
    %2379 = vsyncpa %s2378, 1

</llo_original>
